<compile_context>
chip_gen: v7x
topology: tpu7x:2x2x1
jax: 0.10.0
libtpu: 0.0.40
codegen_flags: <defaults>
</compile_context>

<pallas_src>
import jax
import jax.numpy as jnp
from jax.experimental import pallas as pl
from jax.experimental.pallas import tpu as pltpu

LANES = 128
_POOL_OFFSETS = ((0, 0), (0, 1), (1, 0), (1, 1))


# ----------------------------- Pallas kernels ------------------------------

def _conv_relu_pool_kernel(p_ref, w_ref, b_ref, o_ref):
    # p_ref: (1, 4, P, K) bf16 patches (4 = pooling-window corners)
    # w_ref: (K, 128) bf16, b_ref: (1, 128) f32, o_ref: (1, P, 128) f32
    w = w_ref[...]
    m = jnp.dot(p_ref[0, 0], w, preferred_element_type=jnp.float32)
    for j in range(1, 4):
        m = jnp.maximum(m, jnp.dot(p_ref[0, j], w,
                                   preferred_element_type=jnp.float32))
    # pool(relu(conv + b)) == relu(max_j(conv_j) + b)  (monotone ops)
    o_ref[0] = jnp.maximum(m + b_ref[...], 0.0)


def conv_relu_pool(p4, w_mat, b_pad):
    """Fused conv (im2col matmul) + bias + ReLU + 2x2 maxpool, grid over batch."""
    n, _, P, K = p4.shape
    C = w_mat.shape[1]
    flops = 2 * n * 4 * P * K * C
    bytes_accessed = p4.size * 2 + w_mat.size * 2 + b_pad.size * 4 + n * P * C * 4
    return pl.pallas_call(
        _conv_relu_pool_kernel,
        out_shape=jax.ShapeDtypeStruct((n, P, C), jnp.float32),
        grid=(n,),
        in_specs=[
            pl.BlockSpec((1, 4, P, K), lambda i: (i, 0, 0, 0)),
            pl.BlockSpec((K, C), lambda i: (0, 0)),
            pl.BlockSpec((1, C), lambda i: (0, 0)),
        ],
        out_specs=pl.BlockSpec((1, P, C), lambda i: (i, 0, 0)),
        compiler_params=pltpu.CompilerParams(
            dimension_semantics=("parallel",)),
        cost_estimate=pl.CostEstimate(flops=flops, transcendentals=0,
                                      bytes_accessed=bytes_accessed),
    )(p4, w_mat, b_pad)


def _fc_stack_kernel(x_ref, w1_ref, b1_ref, w2_ref, b2_ref, w3_ref, b3_ref,
                     o_ref):
    # Fused fc1+ReLU -> fc2+ReLU -> fc3. Intermediates stay in registers/VMEM.
    h = jnp.dot(x_ref[...], w1_ref[...], preferred_element_type=jnp.float32)
    h = jnp.maximum(h + b1_ref[...], 0.0)
    h = jnp.dot(h.astype(jnp.bfloat16), w2_ref[...],
                preferred_element_type=jnp.float32)
    h = jnp.maximum(h + b2_ref[...], 0.0)
    h = jnp.dot(h.astype(jnp.bfloat16), w3_ref[...],
                preferred_element_type=jnp.float32)
    o_ref[...] = h + b3_ref[...]


def fc_stack(x, w1, b1, w2, b2, w3, b3):
    n = x.shape[0]
    vmem = pl.BlockSpec(memory_space=pltpu.MemorySpace.VMEM)
    return pl.pallas_call(
        _fc_stack_kernel,
        out_shape=jax.ShapeDtypeStruct((n, LANES), jnp.float32),
        in_specs=[vmem] * 7,
        out_specs=vmem,
    )(x, w1, b1, w2, b2, w3, b3)


# ------------------------------- Glue (JAX) --------------------------------

def _build_pool_patches(x, kh, kw, pad, k_pad):
    """im2col in bf16, rows grouped by 2x2-pool corner: (N, 4, P, k_pad)."""
    x = x.astype(jnp.bfloat16)
    if pad:
        x = jnp.pad(x, ((0, 0), (pad, pad), (pad, pad), (0, 0)))
    n, h, w, c = x.shape
    oh, ow = h - kh + 1, w - kw + 1
    cols = [x[:, i:i + oh, j:j + ow, :] for i in range(kh) for j in range(kw)]
    patches = jnp.concatenate(cols, axis=-1)          # (N, OH, OW, kh*kw*C)
    k = kh * kw * c
    if k_pad > k:
        patches = jnp.pad(patches, ((0, 0), (0, 0), (0, 0), (0, k_pad - k)))
    ph, pw = oh // 2, ow // 2
    groups = [patches[:, dy::2, dx::2, :] for dy, dx in _POOL_OFFSETS]
    p4 = jnp.stack(groups, axis=1)                    # (N, 4, PH, PW, k_pad)
    return p4.reshape(n, 4, ph * pw, k_pad), ph, pw


# ------------------------------ Parameters ---------------------------------

def init_params(key):
    """Deterministic PyTorch-default-style init (uniform +/- 1/sqrt(fan_in))."""
    def uni(k, shape, fan_in):
        bound = 1.0 / (fan_in ** 0.5)
        return jax.random.uniform(k, shape, jnp.float32, -bound, bound)

    ks = jax.random.split(key, 12)
    p = {}
    p["conv1_w"] = uni(ks[0], (10, 3, 5, 5), 3 * 5 * 5)
    p["conv1_b"] = uni(ks[1], (10,), 3 * 5 * 5)
    p["conv2_w"] = uni(ks[2], (16, 10, 3, 3), 10 * 3 * 3)
    p["conv2_b"] = uni(ks[3], (16,), 10 * 3 * 3)
    p["conv3_w"] = uni(ks[4], (32, 16, 3, 3), 16 * 3 * 3)
    p["conv3_b"] = uni(ks[5], (32,), 16 * 3 * 3)
    p["fc1_w"] = uni(ks[6], (120, 32 * 3 * 3), 32 * 3 * 3)  # torch Linear (out, in)
    p["fc1_b"] = uni(ks[7], (120,), 32 * 3 * 3)
    p["fc2_w"] = uni(ks[8], (84, 120), 120)
    p["fc2_b"] = uni(ks[9], (84,), 120)
    p["fc3_w"] = uni(ks[10], (10, 84), 84)
    p["fc3_b"] = uni(ks[11], (10,), 84)
    return p


def prepare_params(p):
    """One-time repack: transpose to (K, N), zero-pad to 128 lanes, bf16."""
    def conv_w(w_oihw, k_pad):
        cout, cin, kh, kw = w_oihw.shape
        w = jnp.transpose(w_oihw, (2, 3, 1, 0)).reshape(kh * kw * cin, cout)
        w = jnp.pad(w, ((0, k_pad - w.shape[0]), (0, LANES - cout)))
        return w.astype(jnp.bfloat16)

    def bias(b):
        return jnp.pad(b, (0, LANES - b.shape[0])).reshape(1, LANES).astype(jnp.float32)

    def fc_w(w_oi, in_pad):
        out_f, in_f = w_oi.shape
        w = jnp.pad(w_oi.T, ((0, in_pad - in_f), (0, LANES - out_f)))
        return w.astype(jnp.bfloat16)

    # fc1: torch (120, 288), input index = c*9 + h*3 + w (NCHW flatten).
    # Our flatten order is (h*3 + w)*128 + c with channels padded to 128, so
    # fold the permutation + channel padding into the weight once here.
    f1 = p["fc1_w"].reshape(120, 32, 3, 3)
    f1 = jnp.transpose(f1, (2, 3, 1, 0))                          # (3,3,32,120)
    f1 = jnp.pad(f1, ((0, 0), (0, 0), (0, LANES - 32), (0, 0)))   # (3,3,128,120)
    f1 = f1.reshape(3 * 3 * LANES, 120)
    f1 = jnp.pad(f1, ((0, 0), (0, LANES - 120))).astype(jnp.bfloat16)

    return {
        "c1w": conv_w(p["conv1_w"], 128), "c1b": bias(p["conv1_b"]),
        "c2w": conv_w(p["conv2_w"], 128), "c2b": bias(p["conv2_b"]),
        "c3w": conv_w(p["conv3_w"], 256), "c3b": bias(p["conv3_b"]),
        "f1w": f1,                        "f1b": bias(p["fc1_b"]),
        "f2w": fc_w(p["fc2_w"], LANES),   "f2b": bias(p["fc2_b"]),
        "f3w": fc_w(p["fc3_w"], LANES),   "f3b": bias(p["fc3_b"]),
    }


# ------------------------------- Forward -----------------------------------

@jax.jit
def net_forward(prep, x_nchw):
    # x_nchw: (N, 3, 32, 32) float32 (spatial size fixed by fc1 = 32*3*3).
    n = x_nchw.shape[0]
    x = jnp.transpose(x_nchw, (0, 2, 3, 1))                      # NHWC

    # conv1 (5x5, pad 2) + ReLU + pool -> 16x16, 10 real channels (of 128)
    p4, ph, pw = _build_pool_patches(x, 5, 5, 2, 128)
    y = conv_relu_pool(p4, prep["c1w"], prep["c1b"])             # (N, 256, 128)
    x = y.reshape(n, ph, pw, LANES)[..., :10]

    # conv2 (3x3, pad 1) + ReLU + pool -> 8x8, 16 real channels
    p4, ph, pw = _build_pool_patches(x, 3, 3, 1, 128)
    y = conv_relu_pool(p4, prep["c2w"], prep["c2b"])             # (N, 64, 128)
    x = y.reshape(n, ph, pw, LANES)[..., :16]

    # conv3 (3x3, no pad) + ReLU + pool -> 3x3, 32 real channels
    p4, ph, pw = _build_pool_patches(x, 3, 3, 0, 256)
    y = conv_relu_pool(p4, prep["c3w"], prep["c3b"])             # (N, 9, 128)

    # Flatten (padded channels are exactly zero; permutation folded into f1w).
    xf = y.reshape(n, 3 * 3 * LANES).astype(jnp.bfloat16)
    out = fc_stack(xf, prep["f1w"], prep["f1b"], prep["f2w"], prep["f2b"],
                   prep["f3w"], prep["f3b"])                     # (N, 128)
    return out[:, :10]


if __name__ == "__main__":
    key = jax.random.PRNGKey(0)
    pkey, xkey = jax.random.split(key)
    params = init_params(pkey)
    prep = prepare_params(params)       # one-time weight repack (hoisted)
    x = jax.random.normal(xkey, (2, 3, 32, 32), dtype=jnp.float32)
    out = jax.block_until_ready(net_forward(prep, x))
    assert out.shape == (2, 10) and out.dtype == jnp.float32
    print("KERNEL_OK")
</pallas_src>

<mosaic_0001>
module attributes {stable_mosaic.version = 11 : i64} {
  func.func @_conv_relu_pool_kernel(%arg0: i32, %arg1: memref<1x4x256x128xbf16, #tpu.memory_space<vmem>>, %arg2: memref<128x128xbf16, #tpu.memory_space<vmem>>, %arg3: memref<1x128xf32, #tpu.memory_space<vmem>>, %arg4: memref<1x256x128xf32, #tpu.memory_space<vmem>>) attributes {dimension_semantics = [#tpu.dimension_semantics<parallel>], iteration_bounds = array<i64: 2>, scalar_prefetch = 0 : i64, scratch_operands = 0 : i64, tpu.core_type = #tpu.core_type<tc>, window_params = [{transform_indices = @transform_0, window_bounds = array<i64: 1, 4, 256, 128>}, {pipeline_mode = #tpu.pipeline_mode<synchronous>, transform_indices = @transform_1, window_bounds = array<i64: 128, 128>}, {pipeline_mode = #tpu.pipeline_mode<synchronous>, transform_indices = @transform_2, window_bounds = array<i64: 1, 128>}, {transform_indices = @transform_3, window_bounds = array<i64: 1, 256, 128>}]} {
    %c0 = arith.constant 0 : index
    %c0_0 = arith.constant 0 : index
    %0 = vector.load %arg2[%c0, %c0_0] : memref<128x128xbf16, #tpu.memory_space<vmem>>, vector<128x128xbf16>
    %c0_1 = arith.constant 0 : index
    %c0_2 = arith.constant 0 : index
    %c0_3 = arith.constant 0 : index
    %c0_4 = arith.constant 0 : index
    %1 = vector.load %arg1[%c0_1, %c0_2, %c0_3, %c0_4] : memref<1x4x256x128xbf16, #tpu.memory_space<vmem>>, vector<1x1x256x128xbf16>
    %2 = vector.shape_cast %1 : vector<1x1x256x128xbf16> to vector<256x128xbf16>
    %cst = arith.constant dense<0.000000e+00> : vector<256x128xf32>
    %3 = tpu.matmul %2, %0, %cst {dimension_numbers = #tpu.dot_dimension_numbers<[1], [0], [0], [1], [0, 0, 1, 1], [], []>} : vector<256x128xbf16>, vector<128x128xbf16>, vector<256x128xf32> -> vector<256x128xf32>
    %c0_5 = arith.constant 0 : index
    %c1 = arith.constant 1 : index
    %c0_6 = arith.constant 0 : index
    %c0_7 = arith.constant 0 : index
    %4 = vector.load %arg1[%c0_5, %c1, %c0_6, %c0_7] : memref<1x4x256x128xbf16, #tpu.memory_space<vmem>>, vector<1x1x256x128xbf16>
    %5 = vector.shape_cast %4 : vector<1x1x256x128xbf16> to vector<256x128xbf16>
    %cst_8 = arith.constant dense<0.000000e+00> : vector<256x128xf32>
    %6 = tpu.matmul %5, %0, %cst_8 {dimension_numbers = #tpu.dot_dimension_numbers<[1], [0], [0], [1], [0, 0, 1, 1], [], []>} : vector<256x128xbf16>, vector<128x128xbf16>, vector<256x128xf32> -> vector<256x128xf32>
    %7 = arith.maximumf %3, %6 : vector<256x128xf32>
    %c0_9 = arith.constant 0 : index
    %c2 = arith.constant 2 : index
    %c0_10 = arith.constant 0 : index
    %c0_11 = arith.constant 0 : index
    %8 = vector.load %arg1[%c0_9, %c2, %c0_10, %c0_11] : memref<1x4x256x128xbf16, #tpu.memory_space<vmem>>, vector<1x1x256x128xbf16>
    %9 = vector.shape_cast %8 : vector<1x1x256x128xbf16> to vector<256x128xbf16>
    %cst_12 = arith.constant dense<0.000000e+00> : vector<256x128xf32>
    %10 = tpu.matmul %9, %0, %cst_12 {dimension_numbers = #tpu.dot_dimension_numbers<[1], [0], [0], [1], [0, 0, 1, 1], [], []>} : vector<256x128xbf16>, vector<128x128xbf16>, vector<256x128xf32> -> vector<256x128xf32>
    %11 = arith.maximumf %7, %10 : vector<256x128xf32>
    %c0_13 = arith.constant 0 : index
    %c3 = arith.constant 3 : index
    %c0_14 = arith.constant 0 : index
    %c0_15 = arith.constant 0 : index
    %12 = vector.load %arg1[%c0_13, %c3, %c0_14, %c0_15] : memref<1x4x256x128xbf16, #tpu.memory_space<vmem>>, vector<1x1x256x128xbf16>
    %13 = vector.shape_cast %12 : vector<1x1x256x128xbf16> to vector<256x128xbf16>
    %cst_16 = arith.constant dense<0.000000e+00> : vector<256x128xf32>
    %14 = tpu.matmul %13, %0, %cst_16 {dimension_numbers = #tpu.dot_dimension_numbers<[1], [0], [0], [1], [0, 0, 1, 1], [], []>} : vector<256x128xbf16>, vector<128x128xbf16>, vector<256x128xf32> -> vector<256x128xf32>
    %15 = arith.maximumf %11, %14 : vector<256x128xf32>
    %c0_17 = arith.constant 0 : index
    %c0_18 = arith.constant 0 : index
    %16 = vector.load %arg3[%c0_17, %c0_18] : memref<1x128xf32, #tpu.memory_space<vmem>>, vector<1x128xf32>
    %17 = vector.broadcast %16 : vector<1x128xf32> to vector<256x128xf32>
    %18 = arith.addf %15, %17 : vector<256x128xf32>
    %cst_19 = arith.constant 0.000000e+00 : f32
    %19 = vector.broadcast %cst_19 : f32 to vector<256x128xf32>
    %20 = arith.maximumf %18, %19 : vector<256x128xf32>
    %c0_20 = arith.constant 0 : index
    %c0_21 = arith.constant 0 : index
    %c0_22 = arith.constant 0 : index
    %21 = vector.load %arg4[%c0_20, %c0_21, %c0_22] : memref<1x256x128xf32, #tpu.memory_space<vmem>>, vector<1x256x128xf32>
    %22 = vector.shape_cast %21 : vector<1x256x128xf32> to vector<256x128xf32>
    %23 = vector.shape_cast %20 : vector<256x128xf32> to vector<1x256x128xf32>
    tpu.vector_store %arg4[%c0_20, %c0_21, %c0_22], %23 {strides = array<i32>} : memref<1x256x128xf32, #tpu.memory_space<vmem>>, vector<1x256x128xf32>,
    return
  }
  func.func @transform_0(%arg0: i32) -> (i32, i32, i32, i32) {
    %c0_i32 = arith.constant 0 : i32
    %c0_i32_0 = arith.constant 0 : i32
    %c0_i32_1 = arith.constant 0 : i32
    %c0_i32_2 = arith.constant 0 : i32
    return %arg0, %c0_i32, %c0_i32_0, %c0_i32_1 : i32, i32, i32, i32
  }
  func.func @transform_1(%arg0: i32) -> (i32, i32) {
    %c0_i32 = arith.constant 0 : i32
    %c0_i32_0 = arith.constant 0 : i32
    %c0_i32_1 = arith.constant 0 : i32
    return %c0_i32, %c0_i32_0 : i32, i32
  }
  func.func @transform_2(%arg0: i32) -> (i32, i32) {
    %c0_i32 = arith.constant 0 : i32
    %c0_i32_0 = arith.constant 0 : i32
    %c0_i32_1 = arith.constant 0 : i32
    return %c0_i32, %c0_i32_0 : i32, i32
  }
  func.func @transform_3(%arg0: i32) -> (i32, i32, i32) {
    %c0_i32 = arith.constant 0 : i32
    %c0_i32_0 = arith.constant 0 : i32
    %c0_i32_1 = arith.constant 0 : i32
    return %arg0, %c0_i32, %c0_i32_0 : i32, i32, i32
  }
}

module attributes {stable_mosaic.version = 11 : i64} {
  func.func @_conv_relu_pool_kernel(%arg0: i32, %arg1: memref<1x4x64x128xbf16, #tpu.memory_space<vmem>>, %arg2: memref<128x128xbf16, #tpu.memory_space<vmem>>, %arg3: memref<1x128xf32, #tpu.memory_space<vmem>>, %arg4: memref<1x64x128xf32, #tpu.memory_space<vmem>>) attributes {dimension_semantics = [#tpu.dimension_semantics<parallel>], iteration_bounds = array<i64: 2>, scalar_prefetch = 0 : i64, scratch_operands = 0 : i64, tpu.core_type = #tpu.core_type<tc>, window_params = [{transform_indices = @transform_0, window_bounds = array<i64: 1, 4, 64, 128>}, {pipeline_mode = #tpu.pipeline_mode<synchronous>, transform_indices = @transform_1, window_bounds = array<i64: 128, 128>}, {pipeline_mode = #tpu.pipeline_mode<synchronous>, transform_indices = @transform_2, window_bounds = array<i64: 1, 128>}, {transform_indices = @transform_3, window_bounds = array<i64: 1, 64, 128>}]} {
    %c0 = arith.constant 0 : index
    %c0_0 = arith.constant 0 : index
    %0 = vector.load %arg2[%c0, %c0_0] : memref<128x128xbf16, #tpu.memory_space<vmem>>, vector<128x128xbf16>
    %c0_1 = arith.constant 0 : index
    %c0_2 = arith.constant 0 : index
    %c0_3 = arith.constant 0 : index
    %c0_4 = arith.constant 0 : index
    %1 = vector.load %arg1[%c0_1, %c0_2, %c0_3, %c0_4] : memref<1x4x64x128xbf16, #tpu.memory_space<vmem>>, vector<1x1x64x128xbf16>
    %2 = vector.shape_cast %1 : vector<1x1x64x128xbf16> to vector<64x128xbf16>
    %cst = arith.constant dense<0.000000e+00> : vector<64x128xf32>
    %3 = tpu.matmul %2, %0, %cst {dimension_numbers = #tpu.dot_dimension_numbers<[1], [0], [0], [1], [0, 0, 1, 1], [], []>} : vector<64x128xbf16>, vector<128x128xbf16>, vector<64x128xf32> -> vector<64x128xf32>
    %c0_5 = arith.constant 0 : index
    %c1 = arith.constant 1 : index
    %c0_6 = arith.constant 0 : index
    %c0_7 = arith.constant 0 : index
    %4 = vector.load %arg1[%c0_5, %c1, %c0_6, %c0_7] : memref<1x4x64x128xbf16, #tpu.memory_space<vmem>>, vector<1x1x64x128xbf16>
    %5 = vector.shape_cast %4 : vector<1x1x64x128xbf16> to vector<64x128xbf16>
    %cst_8 = arith.constant dense<0.000000e+00> : vector<64x128xf32>
    %6 = tpu.matmul %5, %0, %cst_8 {dimension_numbers = #tpu.dot_dimension_numbers<[1], [0], [0], [1], [0, 0, 1, 1], [], []>} : vector<64x128xbf16>, vector<128x128xbf16>, vector<64x128xf32> -> vector<64x128xf32>
    %7 = arith.maximumf %3, %6 : vector<64x128xf32>
    %c0_9 = arith.constant 0 : index
    %c2 = arith.constant 2 : index
    %c0_10 = arith.constant 0 : index
    %c0_11 = arith.constant 0 : index
    %8 = vector.load %arg1[%c0_9, %c2, %c0_10, %c0_11] : memref<1x4x64x128xbf16, #tpu.memory_space<vmem>>, vector<1x1x64x128xbf16>
    %9 = vector.shape_cast %8 : vector<1x1x64x128xbf16> to vector<64x128xbf16>
    %cst_12 = arith.constant dense<0.000000e+00> : vector<64x128xf32>
    %10 = tpu.matmul %9, %0, %cst_12 {dimension_numbers = #tpu.dot_dimension_numbers<[1], [0], [0], [1], [0, 0, 1, 1], [], []>} : vector<64x128xbf16>, vector<128x128xbf16>, vector<64x128xf32> -> vector<64x128xf32>
    %11 = arith.maximumf %7, %10 : vector<64x128xf32>
    %c0_13 = arith.constant 0 : index
    %c3 = arith.constant 3 : index
    %c0_14 = arith.constant 0 : index
    %c0_15 = arith.constant 0 : index
    %12 = vector.load %arg1[%c0_13, %c3, %c0_14, %c0_15] : memref<1x4x64x128xbf16, #tpu.memory_space<vmem>>, vector<1x1x64x128xbf16>
    %13 = vector.shape_cast %12 : vector<1x1x64x128xbf16> to vector<64x128xbf16>
    %cst_16 = arith.constant dense<0.000000e+00> : vector<64x128xf32>
    %14 = tpu.matmul %13, %0, %cst_16 {dimension_numbers = #tpu.dot_dimension_numbers<[1], [0], [0], [1], [0, 0, 1, 1], [], []>} : vector<64x128xbf16>, vector<128x128xbf16>, vector<64x128xf32> -> vector<64x128xf32>
    %15 = arith.maximumf %11, %14 : vector<64x128xf32>
    %c0_17 = arith.constant 0 : index
    %c0_18 = arith.constant 0 : index
    %16 = vector.load %arg3[%c0_17, %c0_18] : memref<1x128xf32, #tpu.memory_space<vmem>>, vector<1x128xf32>
    %17 = vector.broadcast %16 : vector<1x128xf32> to vector<64x128xf32>
    %18 = arith.addf %15, %17 : vector<64x128xf32>
    %cst_19 = arith.constant 0.000000e+00 : f32
    %19 = vector.broadcast %cst_19 : f32 to vector<64x128xf32>
    %20 = arith.maximumf %18, %19 : vector<64x128xf32>
    %c0_20 = arith.constant 0 : index
    %c0_21 = arith.constant 0 : index
    %c0_22 = arith.constant 0 : index
    %21 = vector.load %arg4[%c0_20, %c0_21, %c0_22] : memref<1x64x128xf32, #tpu.memory_space<vmem>>, vector<1x64x128xf32>
    %22 = vector.shape_cast %21 : vector<1x64x128xf32> to vector<64x128xf32>
    %23 = vector.shape_cast %20 : vector<64x128xf32> to vector<1x64x128xf32>
    tpu.vector_store %arg4[%c0_20, %c0_21, %c0_22], %23 {strides = array<i32>} : memref<1x64x128xf32, #tpu.memory_space<vmem>>, vector<1x64x128xf32>,
    return
  }
  func.func @transform_0(%arg0: i32) -> (i32, i32, i32, i32) {
    %c0_i32 = arith.constant 0 : i32
    %c0_i32_0 = arith.constant 0 : i32
    %c0_i32_1 = arith.constant 0 : i32
    %c0_i32_2 = arith.constant 0 : i32
    return %arg0, %c0_i32, %c0_i32_0, %c0_i32_1 : i32, i32, i32, i32
  }
  func.func @transform_1(%arg0: i32) -> (i32, i32) {
    %c0_i32 = arith.constant 0 : i32
    %c0_i32_0 = arith.constant 0 : i32
    %c0_i32_1 = arith.constant 0 : i32
    return %c0_i32, %c0_i32_0 : i32, i32
  }
  func.func @transform_2(%arg0: i32) -> (i32, i32) {
    %c0_i32 = arith.constant 0 : i32
    %c0_i32_0 = arith.constant 0 : i32
    %c0_i32_1 = arith.constant 0 : i32
    return %c0_i32, %c0_i32_0 : i32, i32
  }
  func.func @transform_3(%arg0: i32) -> (i32, i32, i32) {
    %c0_i32 = arith.constant 0 : i32
    %c0_i32_0 = arith.constant 0 : i32
    %c0_i32_1 = arith.constant 0 : i32
    return %arg0, %c0_i32, %c0_i32_0 : i32, i32, i32
  }
}

module attributes {stable_mosaic.version = 11 : i64} {
  func.func @_conv_relu_pool_kernel(%arg0: i32, %arg1: memref<1x4x9x256xbf16, #tpu.memory_space<vmem>>, %arg2: memref<256x128xbf16, #tpu.memory_space<vmem>>, %arg3: memref<1x128xf32, #tpu.memory_space<vmem>>, %arg4: memref<1x9x128xf32, #tpu.memory_space<vmem>>) attributes {dimension_semantics = [#tpu.dimension_semantics<parallel>], iteration_bounds = array<i64: 2>, scalar_prefetch = 0 : i64, scratch_operands = 0 : i64, tpu.core_type = #tpu.core_type<tc>, window_params = [{transform_indices = @transform_0, window_bounds = array<i64: 1, 4, 9, 256>}, {pipeline_mode = #tpu.pipeline_mode<synchronous>, transform_indices = @transform_1, window_bounds = array<i64: 256, 128>}, {pipeline_mode = #tpu.pipeline_mode<synchronous>, transform_indices = @transform_2, window_bounds = array<i64: 1, 128>}, {transform_indices = @transform_3, window_bounds = array<i64: 1, 9, 128>}]} {
    %c0 = arith.constant 0 : index
    %c0_0 = arith.constant 0 : index
    %0 = vector.load %arg2[%c0, %c0_0] : memref<256x128xbf16, #tpu.memory_space<vmem>>, vector<256x128xbf16>
    %c0_1 = arith.constant 0 : index
    %c0_2 = arith.constant 0 : index
    %c0_3 = arith.constant 0 : index
    %c0_4 = arith.constant 0 : index
    %1 = vector.load %arg1[%c0_1, %c0_2, %c0_3, %c0_4] : memref<1x4x9x256xbf16, #tpu.memory_space<vmem>>, vector<1x1x9x256xbf16>
    %2 = vector.shape_cast %1 : vector<1x1x9x256xbf16> to vector<9x256xbf16>
    %cst = arith.constant dense<0.000000e+00> : vector<9x128xf32>
    %3 = tpu.matmul %2, %0, %cst {dimension_numbers = #tpu.dot_dimension_numbers<[1], [0], [0], [1], [0, 0, 1, 1], [], []>} : vector<9x256xbf16>, vector<256x128xbf16>, vector<9x128xf32> -> vector<9x128xf32>
    %c0_5 = arith.constant 0 : index
    %c1 = arith.constant 1 : index
    %c0_6 = arith.constant 0 : index
    %c0_7 = arith.constant 0 : index
    %4 = vector.load %arg1[%c0_5, %c1, %c0_6, %c0_7] : memref<1x4x9x256xbf16, #tpu.memory_space<vmem>>, vector<1x1x9x256xbf16>
    %5 = vector.shape_cast %4 : vector<1x1x9x256xbf16> to vector<9x256xbf16>
    %cst_8 = arith.constant dense<0.000000e+00> : vector<9x128xf32>
    %6 = tpu.matmul %5, %0, %cst_8 {dimension_numbers = #tpu.dot_dimension_numbers<[1], [0], [0], [1], [0, 0, 1, 1], [], []>} : vector<9x256xbf16>, vector<256x128xbf16>, vector<9x128xf32> -> vector<9x128xf32>
    %7 = arith.maximumf %3, %6 : vector<9x128xf32>
    %c0_9 = arith.constant 0 : index
    %c2 = arith.constant 2 : index
    %c0_10 = arith.constant 0 : index
    %c0_11 = arith.constant 0 : index
    %8 = vector.load %arg1[%c0_9, %c2, %c0_10, %c0_11] : memref<1x4x9x256xbf16, #tpu.memory_space<vmem>>, vector<1x1x9x256xbf16>
    %9 = vector.shape_cast %8 : vector<1x1x9x256xbf16> to vector<9x256xbf16>
    %cst_12 = arith.constant dense<0.000000e+00> : vector<9x128xf32>
    %10 = tpu.matmul %9, %0, %cst_12 {dimension_numbers = #tpu.dot_dimension_numbers<[1], [0], [0], [1], [0, 0, 1, 1], [], []>} : vector<9x256xbf16>, vector<256x128xbf16>, vector<9x128xf32> -> vector<9x128xf32>
    %11 = arith.maximumf %7, %10 : vector<9x128xf32>
    %c0_13 = arith.constant 0 : index
    %c3 = arith.constant 3 : index
    %c0_14 = arith.constant 0 : index
    %c0_15 = arith.constant 0 : index
    %12 = vector.load %arg1[%c0_13, %c3, %c0_14, %c0_15] : memref<1x4x9x256xbf16, #tpu.memory_space<vmem>>, vector<1x1x9x256xbf16>
    %13 = vector.shape_cast %12 : vector<1x1x9x256xbf16> to vector<9x256xbf16>
    %cst_16 = arith.constant dense<0.000000e+00> : vector<9x128xf32>
    %14 = tpu.matmul %13, %0, %cst_16 {dimension_numbers = #tpu.dot_dimension_numbers<[1], [0], [0], [1], [0, 0, 1, 1], [], []>} : vector<9x256xbf16>, vector<256x128xbf16>, vector<9x128xf32> -> vector<9x128xf32>
    %15 = arith.maximumf %11, %14 : vector<9x128xf32>
    %c0_17 = arith.constant 0 : index
    %c0_18 = arith.constant 0 : index
    %16 = vector.load %arg3[%c0_17, %c0_18] : memref<1x128xf32, #tpu.memory_space<vmem>>, vector<1x128xf32>
    %17 = vector.broadcast %16 : vector<1x128xf32> to vector<9x128xf32>
    %18 = arith.addf %15, %17 : vector<9x128xf32>
    %cst_19 = arith.constant 0.000000e+00 : f32
    %19 = vector.broadcast %cst_19 : f32 to vector<9x128xf32>
    %20 = arith.maximumf %18, %19 : vector<9x128xf32>
    %c0_20 = arith.constant 0 : index
    %c0_21 = arith.constant 0 : index
    %c0_22 = arith.constant 0 : index
    %21 = vector.load %arg4[%c0_20, %c0_21, %c0_22] : memref<1x9x128xf32, #tpu.memory_space<vmem>>, vector<1x9x128xf32>
    %22 = vector.shape_cast %21 : vector<1x9x128xf32> to vector<9x128xf32>
    %23 = vector.shape_cast %20 : vector<9x128xf32> to vector<1x9x128xf32>
    tpu.vector_store %arg4[%c0_20, %c0_21, %c0_22], %23 {strides = array<i32>} : memref<1x9x128xf32, #tpu.memory_space<vmem>>, vector<1x9x128xf32>,
    return
  }
  func.func @transform_0(%arg0: i32) -> (i32, i32, i32, i32) {
    %c0_i32 = arith.constant 0 : i32
    %c0_i32_0 = arith.constant 0 : i32
    %c0_i32_1 = arith.constant 0 : i32
    %c0_i32_2 = arith.constant 0 : i32
    return %arg0, %c0_i32, %c0_i32_0, %c0_i32_1 : i32, i32, i32, i32
  }
  func.func @transform_1(%arg0: i32) -> (i32, i32) {
    %c0_i32 = arith.constant 0 : i32
    %c0_i32_0 = arith.constant 0 : i32
    %c0_i32_1 = arith.constant 0 : i32
    return %c0_i32, %c0_i32_0 : i32, i32
  }
  func.func @transform_2(%arg0: i32) -> (i32, i32) {
    %c0_i32 = arith.constant 0 : i32
    %c0_i32_0 = arith.constant 0 : i32
    %c0_i32_1 = arith.constant 0 : i32
    return %c0_i32, %c0_i32_0 : i32, i32
  }
  func.func @transform_3(%arg0: i32) -> (i32, i32, i32) {
    %c0_i32 = arith.constant 0 : i32
    %c0_i32_0 = arith.constant 0 : i32
    %c0_i32_1 = arith.constant 0 : i32
    return %arg0, %c0_i32, %c0_i32_0 : i32, i32, i32
  }
}

module attributes {stable_mosaic.version = 11 : i64} {
  func.func @_fc_stack_kernel(%arg0: memref<2x1152xbf16, #tpu.memory_space<vmem>>, %arg1: memref<1152x128xbf16, #tpu.memory_space<vmem>>, %arg2: memref<1x128xf32, #tpu.memory_space<vmem>>, %arg3: memref<128x128xbf16, #tpu.memory_space<vmem>>, %arg4: memref<1x128xf32, #tpu.memory_space<vmem>>, %arg5: memref<128x128xbf16, #tpu.memory_space<vmem>>, %arg6: memref<1x128xf32, #tpu.memory_space<vmem>>, %arg7: memref<2x128xf32, #tpu.memory_space<vmem>>) attributes {dimension_semantics = [], scalar_prefetch = 0 : i64, scratch_operands = 0 : i64, tpu.core_type = #tpu.core_type<tc>} {
    %c0 = arith.constant 0 : index
    %c0_0 = arith.constant 0 : index
    %0 = vector.load %arg0[%c0, %c0_0] : memref<2x1152xbf16, #tpu.memory_space<vmem>>, vector<2x1152xbf16>
    %c0_1 = arith.constant 0 : index
    %c0_2 = arith.constant 0 : index
    %1 = vector.load %arg1[%c0_1, %c0_2] : memref<1152x128xbf16, #tpu.memory_space<vmem>>, vector<1152x128xbf16>
    %cst = arith.constant dense<0.000000e+00> : vector<2x128xf32>
    %2 = tpu.matmul %0, %1, %cst {dimension_numbers = #tpu.dot_dimension_numbers<[1], [0], [0], [1], [0, 0, 1, 1], [], []>} : vector<2x1152xbf16>, vector<1152x128xbf16>, vector<2x128xf32> -> vector<2x128xf32>
    %c0_3 = arith.constant 0 : index
    %c0_4 = arith.constant 0 : index
    %3 = vector.load %arg2[%c0_3, %c0_4] : memref<1x128xf32, #tpu.memory_space<vmem>>, vector<1x128xf32>
    %4 = vector.broadcast %3 : vector<1x128xf32> to vector<2x128xf32>
    %5 = arith.addf %2, %4 : vector<2x128xf32>
    %cst_5 = arith.constant 0.000000e+00 : f32
    %6 = vector.broadcast %cst_5 : f32 to vector<2x128xf32>
    %7 = arith.maximumf %5, %6 : vector<2x128xf32>
    %8 = arith.truncf %7 : vector<2x128xf32> to vector<2x128xbf16>
    %c0_6 = arith.constant 0 : index
    %c0_7 = arith.constant 0 : index
    %9 = vector.load %arg3[%c0_6, %c0_7] : memref<128x128xbf16, #tpu.memory_space<vmem>>, vector<128x128xbf16>
    %cst_8 = arith.constant dense<0.000000e+00> : vector<2x128xf32>
    %10 = tpu.matmul %8, %9, %cst_8 {dimension_numbers = #tpu.dot_dimension_numbers<[1], [0], [0], [1], [0, 0, 1, 1], [], []>} : vector<2x128xbf16>, vector<128x128xbf16>, vector<2x128xf32> -> vector<2x128xf32>
    %c0_9 = arith.constant 0 : index
    %c0_10 = arith.constant 0 : index
    %11 = vector.load %arg4[%c0_9, %c0_10] : memref<1x128xf32, #tpu.memory_space<vmem>>, vector<1x128xf32>
    %12 = vector.broadcast %11 : vector<1x128xf32> to vector<2x128xf32>
    %13 = arith.addf %10, %12 : vector<2x128xf32>
    %cst_11 = arith.constant 0.000000e+00 : f32
    %14 = vector.broadcast %cst_11 : f32 to vector<2x128xf32>
    %15 = arith.maximumf %13, %14 : vector<2x128xf32>
    %16 = arith.truncf %15 : vector<2x128xf32> to vector<2x128xbf16>
    %c0_12 = arith.constant 0 : index
    %c0_13 = arith.constant 0 : index
    %17 = vector.load %arg5[%c0_12, %c0_13] : memref<128x128xbf16, #tpu.memory_space<vmem>>, vector<128x128xbf16>
    %cst_14 = arith.constant dense<0.000000e+00> : vector<2x128xf32>
    %18 = tpu.matmul %16, %17, %cst_14 {dimension_numbers = #tpu.dot_dimension_numbers<[1], [0], [0], [1], [0, 0, 1, 1], [], []>} : vector<2x128xbf16>, vector<128x128xbf16>, vector<2x128xf32> -> vector<2x128xf32>
    %c0_15 = arith.constant 0 : index
    %c0_16 = arith.constant 0 : index
    %19 = vector.load %arg6[%c0_15, %c0_16] : memref<1x128xf32, #tpu.memory_space<vmem>>, vector<1x128xf32>
    %20 = vector.broadcast %19 : vector<1x128xf32> to vector<2x128xf32>
    %21 = arith.addf %18, %20 : vector<2x128xf32>
    %c0_17 = arith.constant 0 : index
    %c0_18 = arith.constant 0 : index
    %22 = vector.load %arg7[%c0_17, %c0_18] : memref<2x128xf32, #tpu.memory_space<vmem>>, vector<2x128xf32>
    tpu.vector_store %arg7[%c0_17, %c0_18], %21 {strides = array<i32>} : memref<2x128xf32, #tpu.memory_space<vmem>>, vector<2x128xf32>,
    return
  }
}

</mosaic_0001>

<llo_original>
// kernel: net_forward.4
$region0: #{net_forward.4}
  #allocation0 [shape = 'u32[]', space=smem, size = 0x4, offset = 0x4, fixed_abs, tag = 'smem constant byte address 0x4 - core index']
  #allocation1 [shape = 'u32[144,128]{1,0:T(1,128)}', space=vmem, size = 0x12000, scoped, tag = 'internal scratch']
  %s0 = inlined_call_operand.vmem [shape: bf16[2,4,256,128], index: 0, kind: input, shape index: {}]
  %s1 = inlined_call_operand.vmem [shape: bf16[128,128], index: 1, kind: input, shape index: {}]
  %s2 = inlined_call_operand.vmem [shape: f32[1,128], index: 2, kind: input, shape index: {}]
  %s3 = inlined_call_operand.vmem [shape: f32[2,256,128], index: 3, kind: output, shape index: {}]
  %s4 = sld [smem:[#allocation0]]
  $region45: #{net_forward.4} parent=0
    _
  %s6 = ssub.s32 1, %s4
  %s7 = scalar_select 0, %s6, %s4
  loop: start=0, step=1, limit=4
  $region2: #{net_forward.4} parent=0 // loop_pre_header
    _
  $region3: #{net_forward.4} parent=0 // loop_header
    %s9 = sphi 0, %s13
    %p10 = scmp.ge.s32.totalorder %s9, 4
    %s19 = sphi 0, %s21
    %s22 = sphi 0, %s19
    %s23 = sphi 0, %s22
    %s39 = sphi 0, %s23
    %s43 = sphi 0, %s43
    %s45 = sphi 0, %s43
    %s46 = sphi 0, %s45
    %s60 = sphi 0, %s46
    %s64 = sphi 0, %s64
    %s66 = sphi 0, %s64
    %s67 = sphi 0, %s66
    %s81 = sphi 0, %s67
    %s87 = sphi 0, %s89
    %s90 = sphi 0, %s87
    %s91 = sphi 0, %s90
    %s107 = sphi 0, %s91
  $region4: #{net_forward.4} parent=0 // loop_header_branch
    %12 = sbr.rel (%p10) target = $region8
  $region5: #{net_forward.4} parent=0 // loop_body
    %s14 = ssub.s32 %s9, 1
    %s15 = ssub.s32 %s9, 2
    %s16 = sadd.s32 %s9, 1
    %s17 = ssub.s32 %s9, %s16
    %p18 = scmp.eq.s32.totalorder %s17, 0
    %s20 = sadd.s32 %s19, 1
    %s21 = scalar_select %p18, %s19, %s20
    %p24 = pneg %p18
    %p25 = scmp.eq.s32.totalorder %s9, 1
    %p26 = por %p24, %p25
    %p27 = scmp.ne.s32.totalorder %s19, %s22
    %p28 = scmp.eq.s32.totalorder %s9, 0
    %p29 = por %p27, %p28
    %p30 = scmp.ne.s32.totalorder %s19, %s22
    %p31 = scmp.eq.s32.totalorder %s14, 1
    %p32 = por %p30, %p31
    %p33 = scmp.ne.s32.totalorder %s22, %s23
    %p34 = scmp.eq.s32.totalorder %s14, 0
    %p35 = por %p33, %p34
    %p36 = scmp.ne.s32.totalorder %s22, %s23
    %p37 = scmp.eq.s32.totalorder %s15, 1
    %p38 = por %p36, %p37
    %p40 = scmp.ne.s32.totalorder %s23, %s39
    %p41 = scmp.eq.s32.totalorder %s15, 0
    %p42 = por %p40, %p41
    %s44 = sadd.s32 %s43, 1
    %p47 = scmp.eq.s32.totalorder %s9, 1
    %p48 = scmp.ne.s32.totalorder %s43, %s45
    %p49 = scmp.eq.s32.totalorder %s9, 0
    %p50 = por %p48, %p49
    %p51 = scmp.ne.s32.totalorder %s43, %s45
    %p52 = scmp.eq.s32.totalorder %s14, 1
    %p53 = por %p51, %p52
    %p54 = scmp.ne.s32.totalorder %s45, %s46
    %p55 = scmp.eq.s32.totalorder %s14, 0
    %p56 = por %p54, %p55
    %p57 = scmp.ne.s32.totalorder %s45, %s46
    %p58 = scmp.eq.s32.totalorder %s15, 1
    %p59 = por %p57, %p58
    %p61 = scmp.ne.s32.totalorder %s46, %s60
    %p62 = scmp.eq.s32.totalorder %s15, 0
    %p63 = por %p61, %p62
    %s65 = sadd.s32 %s64, 1
    %p68 = scmp.eq.s32.totalorder %s9, 1
    %p69 = scmp.ne.s32.totalorder %s64, %s66
    %p70 = scmp.eq.s32.totalorder %s9, 0
    %p71 = por %p69, %p70
    %p72 = scmp.ne.s32.totalorder %s64, %s66
    %p73 = scmp.eq.s32.totalorder %s14, 1
    %p74 = por %p72, %p73
    %p75 = scmp.ne.s32.totalorder %s66, %s67
    %p76 = scmp.eq.s32.totalorder %s14, 0
    %p77 = por %p75, %p76
    %p78 = scmp.ne.s32.totalorder %s66, %s67
    %p79 = scmp.eq.s32.totalorder %s15, 1
    %p80 = por %p78, %p79
    %p82 = scmp.ne.s32.totalorder %s67, %s81
    %p83 = scmp.eq.s32.totalorder %s15, 0
    %p84 = por %p82, %p83
    %s85 = ssub.s32 %s9, %s16
    %p86 = scmp.eq.s32.totalorder %s85, 0
    %s88 = sadd.s32 %s87, 1
    %s89 = scalar_select %p86, %s87, %s88
    %p92 = pneg %p86
    %p93 = scmp.eq.s32.totalorder %s9, 1
    %p94 = por %p92, %p93
    %p95 = scmp.ne.s32.totalorder %s87, %s90
    %p96 = scmp.eq.s32.totalorder %s9, 0
    %p97 = por %p95, %p96
    %p98 = scmp.ne.s32.totalorder %s87, %s90
    %p99 = scmp.eq.s32.totalorder %s14, 1
    %p100 = por %p98, %p99
    %p101 = scmp.ne.s32.totalorder %s90, %s91
    %p102 = scmp.eq.s32.totalorder %s14, 0
    %p103 = por %p101, %p102
    %p104 = scmp.ne.s32.totalorder %s90, %s91
    %p105 = scmp.eq.s32.totalorder %s15, 1
    %p106 = por %p104, %p105
    %p108 = scmp.ne.s32.totalorder %s91, %s107
    %p109 = scmp.eq.s32.totalorder %s15, 0
    %p110 = por %p108, %p109
    %p111 = scmp.le.s32.totalorder 1, %s9
    %p112 = scmp.lt.s32.totalorder %s9, 3
    %p113 = pnand %p111, %p112
    %p114 = pneg %p113
    // Predicated region
    $region9: #{net_forward.4} parent=5 // pred_check
      _
    $region10: #{net_forward.4} parent=5 // pred_check_branch
      %116 = sbr.rel (%p113) target = $region12
    $region11: #{net_forward.4} parent=5 // pred_region
      %s117 = ssub.s32 %s9, 1
      // Predicated region
      $region13: #{net_forward.4} parent=11 // pred_check
        %p118 = pneg %p56
      $region14: #{net_forward.4} parent=11 // pred_check_branch
        %120 = sbr.rel (%p118) target = $region16
      $region15: #{net_forward.4} parent=11 // pred_region
        _
      $region16: #{net_forward.4} parent=11 // pred_fallthru
        _
      // Predicated region
      $region17: #{net_forward.4} parent=11 // pred_check
        %p121 = pneg %p77
      $region18: #{net_forward.4} parent=11 // pred_check_branch
        %123 = sbr.rel (%p121) target = $region20
      $region19: #{net_forward.4} parent=11 // pred_region
        _
      $region20: #{net_forward.4} parent=11 // pred_fallthru
        _
    $region12: #{net_forward.4} parent=5 // pred_fallthru
      _
    %p124 = scmp.lt.s32.totalorder %s9, 2
    // Predicated region
    $region21: #{net_forward.4} parent=5 // pred_check
      %p125 = pneg %p124
    $region22: #{net_forward.4} parent=5 // pred_check_branch
      %127 = sbr.rel (%p125) target = $region24
    $region23: #{net_forward.4} parent=5 // pred_region
      // Predicated region
      $region25: #{net_forward.4} parent=23 // pred_check
        %p128 = pneg %p29
      $region26: #{net_forward.4} parent=23 // pred_check_branch
        %130 = sbr.rel (%p128) target = $region28
      $region27: #{net_forward.4} parent=23 // pred_region
        %p131 = scmp.lt.s32.totalorder %s9, 1
        %s132 = scalar_select %p131, %s9, 1
        %s133 = smul.addr %s132, 128
        %s134 = smul.addr %s133, 4
        %s135 = scalar_lea.vmem %s0, %s134
      $region28: #{net_forward.4} parent=23 // pred_fallthru
        _
    $region24: #{net_forward.4} parent=5 // pred_fallthru
      _
    %p136 = scmp.le.s32.totalorder 1, %s9
    %p137 = scmp.lt.s32.totalorder %s9, 3
    %p138 = pnand %p136, %p137
    %p139 = pneg %p138
    // Predicated region
    $region29: #{net_forward.4} parent=5 // pred_check
      _
    $region30: #{net_forward.4} parent=5 // pred_check_branch
      %141 = sbr.rel (%p138) target = $region32
    $region31: #{net_forward.4} parent=5 // pred_region
      %s142 = ssub.s32 %s9, 1
      %p143 = scmp.lt.s32.totalorder %s14, 1
      %s144 = scalar_select %p143, %s14, 1
      %s145 = smul.addr %s144, 128
      %s146 = smul.addr %s145, 4
      %s147 = scalar_lea.vmem %s0, %s146
      %p148 = pneg %p35
      %p149 = pneg %p32
      %p150 = pneg %p56
      %p151 = pneg %p53
      %p152 = pneg %p77
      %p153 = pneg %p74
      %p154 = pneg %p103
      %p155 = pneg %p100
      %p156 = scmp.lt.s32.totalorder %s14, 1
      %s157 = scalar_select %p156, %s14, 1
      %s158 = smul.addr %s157, 32
      %s159 = smul.addr %s158, 8
      %s160 = scalar_lea.vmem %s3, %s159
      %p161 = scmp.lt.s32.totalorder %s14, 1
      %s162 = scalar_select %p161, %s14, 1
      %s163 = smul.addr %s162, 128
      %s164 = smul.addr %s163, 4
      %s165 = scalar_lea.vmem %s0, %s164
      %p166 = scmp.lt.s32.totalorder %s14, 1
      %s167 = scalar_select %p166, %s14, 1
      %s168 = smul.addr %s167, 32
      %s169 = smul.addr %s168, 8
      %s170 = scalar_lea.vmem %s3, %s169
      %v172 = vld [vmem:[%s1] sm:$0xf]
      %v173 = vld [vmem:[%s1 + $0x4] sm:$0xf]
      %v174 = vld [vmem:[%s1 + $0x8] sm:$0xf]
      %v175 = vld [vmem:[%s1 + $0xc] sm:$0xf]
      %v176 = vld [vmem:[%s1 + $0x10] sm:$0xf]
      %v177 = vld [vmem:[%s1 + $0x14] sm:$0xf]
      %v178 = vld [vmem:[%s1 + $0x18] sm:$0xf]
      %v179 = vld [vmem:[%s1 + $0x1c] sm:$0xf]
      %v180 = vld [vmem:[%s1 + $0x20] sm:$0xf]
      %v181 = vld [vmem:[%s1 + $0x24] sm:$0xf]
      %v182 = vld [vmem:[%s1 + $0x28] sm:$0xf]
      %v183 = vld [vmem:[%s1 + $0x2c] sm:$0xf]
      %v184 = vld [vmem:[%s1 + $0x30] sm:$0xf]
      %v185 = vld [vmem:[%s1 + $0x34] sm:$0xf]
      %v186 = vld [vmem:[%s1 + $0x38] sm:$0xf]
      %v187 = vld [vmem:[%s1 + $0x3c] sm:$0xf]
      %v188 = vld [vmem:[%s165] sm:$0xf]
      %v189 = vld [vmem:[%s165 + $0x4] sm:$0xf]
      %v190 = vld [vmem:[%s165 + $0x8] sm:$0xf]
      %v191 = vld [vmem:[%s165 + $0xc] sm:$0xf]
      %v192 = vld [vmem:[%s165 + $0x10] sm:$0xf]
      %v193 = vld [vmem:[%s165 + $0x14] sm:$0xf]
      %v194 = vld [vmem:[%s165 + $0x18] sm:$0xf]
      %v195 = vld [vmem:[%s165 + $0x1c] sm:$0xf]
      %v196 = vld [vmem:[%s165 + $0x20] sm:$0xf]
      %v197 = vld [vmem:[%s165 + $0x24] sm:$0xf]
      %v198 = vld [vmem:[%s165 + $0x28] sm:$0xf]
      %v199 = vld [vmem:[%s165 + $0x2c] sm:$0xf]
      %v200 = vld [vmem:[%s165 + $0x30] sm:$0xf]
      %v201 = vld [vmem:[%s165 + $0x34] sm:$0xf]
      %v202 = vld [vmem:[%s165 + $0x38] sm:$0xf]
      %v203 = vld [vmem:[%s165 + $0x3c] sm:$0xf]
      %v204 = vld [vmem:[%s165 + $0x40] sm:$0xf]
      %v205 = vld [vmem:[%s165 + $0x44] sm:$0xf]
      %v206 = vld [vmem:[%s165 + $0x48] sm:$0xf]
      %v207 = vld [vmem:[%s165 + $0x4c] sm:$0xf]
      %v208 = vld [vmem:[%s165 + $0x50] sm:$0xf]
      %v209 = vld [vmem:[%s165 + $0x54] sm:$0xf]
      %v210 = vld [vmem:[%s165 + $0x58] sm:$0xf]
      %v211 = vld [vmem:[%s165 + $0x5c] sm:$0xf]
      %v212 = vld [vmem:[%s165 + $0x60] sm:$0xf]
      %v213 = vld [vmem:[%s165 + $0x64] sm:$0xf]
      %v214 = vld [vmem:[%s165 + $0x68] sm:$0xf]
      %v215 = vld [vmem:[%s165 + $0x6c] sm:$0xf]
      %v216 = vld [vmem:[%s165 + $0x70] sm:$0xf]
      %v217 = vld [vmem:[%s165 + $0x74] sm:$0xf]
      %v218 = vld [vmem:[%s165 + $0x78] sm:$0xf]
      %v219 = vld [vmem:[%s165 + $0x7c] sm:$0xf]
      %v252 = vunpack.c.l.b16 %v188
      %v253 = vunpack.c.l.b16 %v189
      %v254 = vunpack.c.l.b16 %v190
      %v255 = vunpack.c.l.b16 %v191
      %v256 = vunpack.c.l.b16 %v192
      %v257 = vunpack.c.l.b16 %v193
      %v258 = vunpack.c.l.b16 %v194
      %v259 = vunpack.c.l.b16 %v195
      %v260 = vunpack.c.l.b16 %v196
      %v261 = vunpack.c.l.b16 %v197
      %v262 = vunpack.c.l.b16 %v198
      %v263 = vunpack.c.l.b16 %v199
      %v264 = vunpack.c.l.b16 %v200
      %v265 = vunpack.c.l.b16 %v201
      %v266 = vunpack.c.l.b16 %v202
      %v267 = vunpack.c.l.b16 %v203
      %v268 = vunpack.c.l.b16 %v204
      %v269 = vunpack.c.l.b16 %v205
      %v270 = vunpack.c.l.b16 %v206
      %v271 = vunpack.c.l.b16 %v207
      %v272 = vunpack.c.l.b16 %v208
      %v273 = vunpack.c.l.b16 %v209
      %v274 = vunpack.c.l.b16 %v210
      %v275 = vunpack.c.l.b16 %v211
      %v276 = vunpack.c.l.b16 %v212
      %v277 = vunpack.c.l.b16 %v213
      %v278 = vunpack.c.l.b16 %v214
      %v279 = vunpack.c.l.b16 %v215
      %v280 = vunpack.c.l.b16 %v216
      %v281 = vunpack.c.l.b16 %v217
      %v282 = vunpack.c.l.b16 %v218
      %v283 = vunpack.c.l.b16 %v219
      %v284 = vpack.c.b16 %v253, %v252
      %v285 = vpack.c.b16 %v255, %v254
      %v286 = vpack.c.b16 %v257, %v256
      %v287 = vpack.c.b16 %v259, %v258
      %v288 = vpack.c.b16 %v261, %v260
      %v289 = vpack.c.b16 %v263, %v262
      %v290 = vpack.c.b16 %v265, %v264
      %v291 = vpack.c.b16 %v267, %v266
      %v292 = vpack.c.b16 %v269, %v268
      %v293 = vpack.c.b16 %v271, %v270
      %v294 = vpack.c.b16 %v273, %v272
      %v295 = vpack.c.b16 %v275, %v274
      %v296 = vpack.c.b16 %v277, %v276
      %v297 = vpack.c.b16 %v279, %v278
      %v298 = vpack.c.b16 %v281, %v280
      %v299 = vpack.c.b16 %v283, %v282
      %v332 = vunpack.c.l.b16 %v172
      %v333 = vunpack.c.l.b16 %v173
      %v334 = vunpack.c.l.b16 %v174
      %v335 = vunpack.c.l.b16 %v175
      %v336 = vunpack.c.l.b16 %v176
      %v337 = vunpack.c.l.b16 %v177
      %v338 = vunpack.c.l.b16 %v178
      %v339 = vunpack.c.l.b16 %v179
      %v340 = vunpack.c.l.b16 %v180
      %v341 = vunpack.c.l.b16 %v181
      %v342 = vunpack.c.l.b16 %v182
      %v343 = vunpack.c.l.b16 %v183
      %v344 = vunpack.c.l.b16 %v184
      %v345 = vunpack.c.l.b16 %v185
      %v346 = vunpack.c.l.b16 %v186
      %v347 = vunpack.c.l.b16 %v187
      %v348 = vpack.c.b16 %v333, %v332
      %v349 = vpack.c.b16 %v335, %v334
      %v350 = vpack.c.b16 %v337, %v336
      %v351 = vpack.c.b16 %v339, %v338
      %v352 = vpack.c.b16 %v341, %v340
      %v353 = vpack.c.b16 %v343, %v342
      %v354 = vpack.c.b16 %v345, %v344
      %v355 = vpack.c.b16 %v347, %v346
      %364 = vmatprep.subr.bf16.mxu0 0
      %365 = vmatpush1.bf16.msra.mxu0 %v348
      %366 = vmatprep.subr.bf16.mxu0 0
      %367 = vmatpush1.bf16.msra.mxu0 %v349
      %368 = vmatprep.subr.bf16.mxu0 0
      %369 = vmatpush1.bf16.msra.mxu0 %v350
      %370 = vmatprep.subr.bf16.mxu0 0
      %371 = vmatpush1.bf16.msra.mxu0 %v351
      %372 = vmatprep.subr.bf16.mxu0 0
      %373 = vmatpush1.bf16.msra.mxu0 %v352
      %374 = vmatprep.subr.bf16.mxu0 0
      %375 = vmatpush1.bf16.msra.mxu0 %v353
      %376 = vmatprep.subr.bf16.mxu0 0
      %377 = vmatpush1.bf16.msra.mxu0 %v354
      %378 = vmatprep.subr.bf16.mxu0 0
      %379 = vmatpush1.bf16.msra.mxu0 %v355
      %380 = vmatprep.subr.bf16.mxu0 0
      %381 = vmatpush1.bf16.msra.mxu0 0
      %382 = vmatprep.subr.bf16.mxu0 0
      %383 = vmatpush1.bf16.msra.mxu0 0
      %384 = vmatprep.subr.bf16.mxu0 0
      %385 = vmatpush1.bf16.msra.mxu0 0
      %386 = vmatprep.subr.bf16.mxu0 0
      %387 = vmatpush1.bf16.msra.mxu0 0
      %388 = vmatprep.subr.bf16.mxu0 0
      %389 = vmatpush1.bf16.msra.mxu0 0
      %390 = vmatprep.subr.bf16.mxu0 0
      %391 = vmatpush1.bf16.msra.mxu0 0
      %392 = vmatprep.subr.bf16.mxu0 0
      %393 = vmatpush1.bf16.msra.mxu0 0
      %394 = vmatprep.subr.bf16.mxu0 0
      %395 = vmatpush1.bf16.msra.mxu0 0
      %396 = vmatprep.mubr.bf16.mxu0 0
      %397 = vmatmul.mubr.bf16.gmra.mrb[0].mxu0 %v284
      %v398 = vpop.f32.mrb[0].mxu0
      %v399 = vadd.f32 0.0, %v398
      %v400 = vpop.f32.mrb[0].mxu0
      %v401 = vpop.f32.mrb[0].mxu0
      %v402 = vadd.f32 0.0, %v401
      %v403 = vpop.f32.mrb[0].mxu0
      %404 = vmatprep.mubr.bf16.mxu0 0
      %405 = vmatmul.mubr.bf16.gmra.mrb[0].mxu0 %v285
      %v406 = vpop.f32.mrb[0].mxu0
      %v407 = vadd.f32 0.0, %v406
      %v408 = vpop.f32.mrb[0].mxu0
      %v409 = vpop.f32.mrb[0].mxu0
      %v410 = vadd.f32 0.0, %v409
      %v411 = vpop.f32.mrb[0].mxu0
      %412 = vmatprep.mubr.bf16.mxu0 0
      %413 = vmatmul.mubr.bf16.gmra.mrb[0].mxu0 %v286
      %v414 = vpop.f32.mrb[0].mxu0
      %v415 = vadd.f32 0.0, %v414
      %v416 = vpop.f32.mrb[0].mxu0
      %v417 = vpop.f32.mrb[0].mxu0
      %v418 = vadd.f32 0.0, %v417
      %v419 = vpop.f32.mrb[0].mxu0
      %420 = vmatprep.mubr.bf16.mxu0 0
      %421 = vmatmul.mubr.bf16.gmra.mrb[0].mxu0 %v287
      %v422 = vpop.f32.mrb[0].mxu0
      %v423 = vadd.f32 0.0, %v422
      %v424 = vpop.f32.mrb[0].mxu0
      %v425 = vpop.f32.mrb[0].mxu0
      %v426 = vadd.f32 0.0, %v425
      %v427 = vpop.f32.mrb[0].mxu0
      %428 = vmatprep.mubr.bf16.mxu0 0
      %429 = vmatmul.mubr.bf16.gmra.mrb[0].mxu0 %v288
      %v430 = vpop.f32.mrb[0].mxu0
      %v431 = vadd.f32 0.0, %v430
      %v432 = vpop.f32.mrb[0].mxu0
      %v433 = vpop.f32.mrb[0].mxu0
      %v434 = vadd.f32 0.0, %v433
      %v435 = vpop.f32.mrb[0].mxu0
      %436 = vmatprep.mubr.bf16.mxu0 0
      %437 = vmatmul.mubr.bf16.gmra.mrb[0].mxu0 %v289
      %v438 = vpop.f32.mrb[0].mxu0
      %v439 = vadd.f32 0.0, %v438
      %v440 = vpop.f32.mrb[0].mxu0
      %v441 = vpop.f32.mrb[0].mxu0
      %v442 = vadd.f32 0.0, %v441
      %v443 = vpop.f32.mrb[0].mxu0
      %444 = vmatprep.mubr.bf16.mxu0 0
      %445 = vmatmul.mubr.bf16.gmra.mrb[0].mxu0 %v290
      %v446 = vpop.f32.mrb[0].mxu0
      %v447 = vadd.f32 0.0, %v446
      %v448 = vpop.f32.mrb[0].mxu0
      %v449 = vpop.f32.mrb[0].mxu0
      %v450 = vadd.f32 0.0, %v449
      %v451 = vpop.f32.mrb[0].mxu0
      %452 = vmatprep.mubr.bf16.mxu0 0
      %453 = vmatmul.mubr.bf16.gmra.mrb[0].mxu0 %v291
      %v454 = vpop.f32.mrb[0].mxu0
      %v455 = vadd.f32 0.0, %v454
      %v456 = vpop.f32.mrb[0].mxu0
      %v457 = vpop.f32.mrb[0].mxu0
      %v458 = vadd.f32 0.0, %v457
      %v459 = vpop.f32.mrb[0].mxu0
      %460 = vmatprep.mubr.bf16.mxu0 0
      %461 = vmatmul.mubr.bf16.gmra.mrb[0].mxu0 %v292
      %v462 = vpop.f32.mrb[0].mxu0
      %v463 = vadd.f32 0.0, %v462
      %v464 = vpop.f32.mrb[0].mxu0
      %v465 = vpop.f32.mrb[0].mxu0
      %v466 = vadd.f32 0.0, %v465
      %v467 = vpop.f32.mrb[0].mxu0
      %468 = vmatprep.mubr.bf16.mxu0 0
      %469 = vmatmul.mubr.bf16.gmra.mrb[0].mxu0 %v293
      %v470 = vpop.f32.mrb[0].mxu0
      %v471 = vadd.f32 0.0, %v470
      %v472 = vpop.f32.mrb[0].mxu0
      %v473 = vpop.f32.mrb[0].mxu0
      %v474 = vadd.f32 0.0, %v473
      %v475 = vpop.f32.mrb[0].mxu0
      %476 = vmatprep.mubr.bf16.mxu0 0
      %477 = vmatmul.mubr.bf16.gmra.mrb[0].mxu0 %v294
      %v478 = vpop.f32.mrb[0].mxu0
      %v479 = vadd.f32 0.0, %v478
      %v480 = vpop.f32.mrb[0].mxu0
      %v481 = vpop.f32.mrb[0].mxu0
      %v482 = vadd.f32 0.0, %v481
      %v483 = vpop.f32.mrb[0].mxu0
      %484 = vmatprep.mubr.bf16.mxu0 0
      %485 = vmatmul.mubr.bf16.gmra.mrb[0].mxu0 %v295
      %v486 = vpop.f32.mrb[0].mxu0
      %v487 = vadd.f32 0.0, %v486
      %v488 = vpop.f32.mrb[0].mxu0
      %v489 = vpop.f32.mrb[0].mxu0
      %v490 = vadd.f32 0.0, %v489
      %v491 = vpop.f32.mrb[0].mxu0
      %492 = vmatprep.mubr.bf16.mxu0 0
      %493 = vmatmul.mubr.bf16.gmra.mrb[0].mxu0 %v296
      %v494 = vpop.f32.mrb[0].mxu0
      %v495 = vadd.f32 0.0, %v494
      %v496 = vpop.f32.mrb[0].mxu0
      %v497 = vpop.f32.mrb[0].mxu0
      %v498 = vadd.f32 0.0, %v497
      %v499 = vpop.f32.mrb[0].mxu0
      %500 = vmatprep.mubr.bf16.mxu0 0
      %501 = vmatmul.mubr.bf16.gmra.mrb[0].mxu0 %v297
      %v502 = vpop.f32.mrb[0].mxu0
      %v503 = vadd.f32 0.0, %v502
      %v504 = vpop.f32.mrb[0].mxu0
      %v505 = vpop.f32.mrb[0].mxu0
      %v506 = vadd.f32 0.0, %v505
      %v507 = vpop.f32.mrb[0].mxu0
      %508 = vmatprep.mubr.bf16.mxu0 0
      %509 = vmatmul.mubr.bf16.gmra.mrb[0].mxu0 %v298
      %v510 = vpop.f32.mrb[0].mxu0
      %v511 = vadd.f32 0.0, %v510
      %v512 = vpop.f32.mrb[0].mxu0
      %v513 = vpop.f32.mrb[0].mxu0
      %v514 = vadd.f32 0.0, %v513
      %v515 = vpop.f32.mrb[0].mxu0
      %516 = vmatprep.mubr.bf16.mxu0 0
      %517 = vmatmul.mubr.bf16.gmra.mrb[0].mxu0 %v299
      %v518 = vpop.f32.mrb[0].mxu0
      %v519 = vadd.f32 0.0, %v518
      %v520 = vpop.f32.mrb[0].mxu0
      %v521 = vpop.f32.mrb[0].mxu0
      %v522 = vadd.f32 0.0, %v521
      %v523 = vpop.f32.mrb[0].mxu0
      %524 = vdwg.mxu0
      %s525 = scalar_lea.vmem %s165, 128
      %v526 = vld [vmem:[%s525] sm:$0xf]
      %v527 = vld [vmem:[%s525 + $0x4] sm:$0xf]
      %v528 = vld [vmem:[%s525 + $0x8] sm:$0xf]
      %v529 = vld [vmem:[%s525 + $0xc] sm:$0xf]
      %v530 = vld [vmem:[%s525 + $0x10] sm:$0xf]
      %v531 = vld [vmem:[%s525 + $0x14] sm:$0xf]
      %v532 = vld [vmem:[%s525 + $0x18] sm:$0xf]
      %v533 = vld [vmem:[%s525 + $0x1c] sm:$0xf]
      %v534 = vld [vmem:[%s525 + $0x20] sm:$0xf]
      %v535 = vld [vmem:[%s525 + $0x24] sm:$0xf]
      %v536 = vld [vmem:[%s525 + $0x28] sm:$0xf]
      %v537 = vld [vmem:[%s525 + $0x2c] sm:$0xf]
      %v538 = vld [vmem:[%s525 + $0x30] sm:$0xf]
      %v539 = vld [vmem:[%s525 + $0x34] sm:$0xf]
      %v540 = vld [vmem:[%s525 + $0x38] sm:$0xf]
      %v541 = vld [vmem:[%s525 + $0x3c] sm:$0xf]
      %v542 = vld [vmem:[%s525 + $0x40] sm:$0xf]
      %v543 = vld [vmem:[%s525 + $0x44] sm:$0xf]
      %v544 = vld [vmem:[%s525 + $0x48] sm:$0xf]
      %v545 = vld [vmem:[%s525 + $0x4c] sm:$0xf]
      %v546 = vld [vmem:[%s525 + $0x50] sm:$0xf]
      %v547 = vld [vmem:[%s525 + $0x54] sm:$0xf]
      %v548 = vld [vmem:[%s525 + $0x58] sm:$0xf]
      %v549 = vld [vmem:[%s525 + $0x5c] sm:$0xf]
      %v550 = vld [vmem:[%s525 + $0x60] sm:$0xf]
      %v551 = vld [vmem:[%s525 + $0x64] sm:$0xf]
      %v552 = vld [vmem:[%s525 + $0x68] sm:$0xf]
      %v553 = vld [vmem:[%s525 + $0x6c] sm:$0xf]
      %v554 = vld [vmem:[%s525 + $0x70] sm:$0xf]
      %v555 = vld [vmem:[%s525 + $0x74] sm:$0xf]
      %v556 = vld [vmem:[%s525 + $0x78] sm:$0xf]
      %v557 = vld [vmem:[%s525 + $0x7c] sm:$0xf]
      %v590 = vunpack.c.l.b16 %v526
      %v591 = vunpack.c.l.b16 %v527
      %v592 = vunpack.c.l.b16 %v528
      %v593 = vunpack.c.l.b16 %v529
      %v594 = vunpack.c.l.b16 %v530
      %v595 = vunpack.c.l.b16 %v531
      %v596 = vunpack.c.l.b16 %v532
      %v597 = vunpack.c.l.b16 %v533
      %v598 = vunpack.c.l.b16 %v534
      %v599 = vunpack.c.l.b16 %v535
      %v600 = vunpack.c.l.b16 %v536
      %v601 = vunpack.c.l.b16 %v537
      %v602 = vunpack.c.l.b16 %v538
      %v603 = vunpack.c.l.b16 %v539
      %v604 = vunpack.c.l.b16 %v540
      %v605 = vunpack.c.l.b16 %v541
      %v606 = vunpack.c.l.b16 %v542
      %v607 = vunpack.c.l.b16 %v543
      %v608 = vunpack.c.l.b16 %v544
      %v609 = vunpack.c.l.b16 %v545
      %v610 = vunpack.c.l.b16 %v546
      %v611 = vunpack.c.l.b16 %v547
      %v612 = vunpack.c.l.b16 %v548
      %v613 = vunpack.c.l.b16 %v549
      %v614 = vunpack.c.l.b16 %v550
      %v615 = vunpack.c.l.b16 %v551
      %v616 = vunpack.c.l.b16 %v552
      %v617 = vunpack.c.l.b16 %v553
      %v618 = vunpack.c.l.b16 %v554
      %v619 = vunpack.c.l.b16 %v555
      %v620 = vunpack.c.l.b16 %v556
      %v621 = vunpack.c.l.b16 %v557
      %v622 = vpack.c.b16 %v591, %v590
      %v623 = vpack.c.b16 %v593, %v592
      %v624 = vpack.c.b16 %v595, %v594
      %v625 = vpack.c.b16 %v597, %v596
      %v626 = vpack.c.b16 %v599, %v598
      %v627 = vpack.c.b16 %v601, %v600
      %v628 = vpack.c.b16 %v603, %v602
      %v629 = vpack.c.b16 %v605, %v604
      %v630 = vpack.c.b16 %v607, %v606
      %v631 = vpack.c.b16 %v609, %v608
      %v632 = vpack.c.b16 %v611, %v610
      %v633 = vpack.c.b16 %v613, %v612
      %v634 = vpack.c.b16 %v615, %v614
      %v635 = vpack.c.b16 %v617, %v616
      %v636 = vpack.c.b16 %v619, %v618
      %v637 = vpack.c.b16 %v621, %v620
      %654 = vmatprep.subr.bf16.mxu0 0
      %655 = vmatpush1.bf16.msra.mxu0 %v348
      %656 = vmatprep.subr.bf16.mxu0 0
      %657 = vmatpush1.bf16.msra.mxu0 %v349
      %658 = vmatprep.subr.bf16.mxu0 0
      %659 = vmatpush1.bf16.msra.mxu0 %v350
      %660 = vmatprep.subr.bf16.mxu0 0
      %661 = vmatpush1.bf16.msra.mxu0 %v351
      %662 = vmatprep.subr.bf16.mxu0 0
      %663 = vmatpush1.bf16.msra.mxu0 %v352
      %664 = vmatprep.subr.bf16.mxu0 0
      %665 = vmatpush1.bf16.msra.mxu0 %v353
      %666 = vmatprep.subr.bf16.mxu0 0
      %667 = vmatpush1.bf16.msra.mxu0 %v354
      %668 = vmatprep.subr.bf16.mxu0 0
      %669 = vmatpush1.bf16.msra.mxu0 %v355
      %670 = vmatprep.subr.bf16.mxu0 0
      %671 = vmatpush1.bf16.msra.mxu0 0
      %672 = vmatprep.subr.bf16.mxu0 0
      %673 = vmatpush1.bf16.msra.mxu0 0
      %674 = vmatprep.subr.bf16.mxu0 0
      %675 = vmatpush1.bf16.msra.mxu0 0
      %676 = vmatprep.subr.bf16.mxu0 0
      %677 = vmatpush1.bf16.msra.mxu0 0
      %678 = vmatprep.subr.bf16.mxu0 0
      %679 = vmatpush1.bf16.msra.mxu0 0
      %680 = vmatprep.subr.bf16.mxu0 0
      %681 = vmatpush1.bf16.msra.mxu0 0
      %682 = vmatprep.subr.bf16.mxu0 0
      %683 = vmatpush1.bf16.msra.mxu0 0
      %684 = vmatprep.subr.bf16.mxu0 0
      %685 = vmatpush1.bf16.msra.mxu0 0
      %686 = vmatprep.mubr.bf16.mxu0 0
      %687 = vmatmul.mubr.bf16.gmra.mrb[0].mxu0 %v622
      %v688 = vpop.f32.mrb[0].mxu0
      %v689 = vadd.f32 0.0, %v688
      %v690 = vpop.f32.mrb[0].mxu0
      %v691 = vpop.f32.mrb[0].mxu0
      %v692 = vadd.f32 0.0, %v691
      %v693 = vpop.f32.mrb[0].mxu0
      %694 = vmatprep.mubr.bf16.mxu0 0
      %695 = vmatmul.mubr.bf16.gmra.mrb[0].mxu0 %v623
      %v696 = vpop.f32.mrb[0].mxu0
      %v697 = vadd.f32 0.0, %v696
      %v698 = vpop.f32.mrb[0].mxu0
      %v699 = vpop.f32.mrb[0].mxu0
      %v700 = vadd.f32 0.0, %v699
      %v701 = vpop.f32.mrb[0].mxu0
      %702 = vmatprep.mubr.bf16.mxu0 0
      %703 = vmatmul.mubr.bf16.gmra.mrb[0].mxu0 %v624
      %v704 = vpop.f32.mrb[0].mxu0
      %v705 = vadd.f32 0.0, %v704
      %v706 = vpop.f32.mrb[0].mxu0
      %v707 = vpop.f32.mrb[0].mxu0
      %v708 = vadd.f32 0.0, %v707
      %v709 = vpop.f32.mrb[0].mxu0
      %710 = vmatprep.mubr.bf16.mxu0 0
      %711 = vmatmul.mubr.bf16.gmra.mrb[0].mxu0 %v625
      %v712 = vpop.f32.mrb[0].mxu0
      %v713 = vadd.f32 0.0, %v712
      %v714 = vpop.f32.mrb[0].mxu0
      %v715 = vpop.f32.mrb[0].mxu0
      %v716 = vadd.f32 0.0, %v715
      %v717 = vpop.f32.mrb[0].mxu0
      %718 = vmatprep.mubr.bf16.mxu0 0
      %719 = vmatmul.mubr.bf16.gmra.mrb[0].mxu0 %v626
      %v720 = vpop.f32.mrb[0].mxu0
      %v721 = vadd.f32 0.0, %v720
      %v722 = vpop.f32.mrb[0].mxu0
      %v723 = vpop.f32.mrb[0].mxu0
      %v724 = vadd.f32 0.0, %v723
      %v725 = vpop.f32.mrb[0].mxu0
      %726 = vmatprep.mubr.bf16.mxu0 0
      %727 = vmatmul.mubr.bf16.gmra.mrb[0].mxu0 %v627
      %v728 = vpop.f32.mrb[0].mxu0
      %v729 = vadd.f32 0.0, %v728
      %v730 = vpop.f32.mrb[0].mxu0
      %v731 = vpop.f32.mrb[0].mxu0
      %v732 = vadd.f32 0.0, %v731
      %v733 = vpop.f32.mrb[0].mxu0
      %734 = vmatprep.mubr.bf16.mxu0 0
      %735 = vmatmul.mubr.bf16.gmra.mrb[0].mxu0 %v628
      %v736 = vpop.f32.mrb[0].mxu0
      %v737 = vadd.f32 0.0, %v736
      %v738 = vpop.f32.mrb[0].mxu0
      %v739 = vpop.f32.mrb[0].mxu0
      %v740 = vadd.f32 0.0, %v739
      %v741 = vpop.f32.mrb[0].mxu0
      %742 = vmatprep.mubr.bf16.mxu0 0
      %743 = vmatmul.mubr.bf16.gmra.mrb[0].mxu0 %v629
      %v744 = vpop.f32.mrb[0].mxu0
      %v745 = vadd.f32 0.0, %v744
      %v746 = vpop.f32.mrb[0].mxu0
      %v747 = vpop.f32.mrb[0].mxu0
      %v748 = vadd.f32 0.0, %v747
      %v749 = vpop.f32.mrb[0].mxu0
      %750 = vmatprep.mubr.bf16.mxu0 0
      %751 = vmatmul.mubr.bf16.gmra.mrb[0].mxu0 %v630
      %v752 = vpop.f32.mrb[0].mxu0
      %v753 = vadd.f32 0.0, %v752
      %v754 = vpop.f32.mrb[0].mxu0
      %v755 = vpop.f32.mrb[0].mxu0
      %v756 = vadd.f32 0.0, %v755
      %v757 = vpop.f32.mrb[0].mxu0
      %758 = vmatprep.mubr.bf16.mxu0 0
      %759 = vmatmul.mubr.bf16.gmra.mrb[0].mxu0 %v631
      %v760 = vpop.f32.mrb[0].mxu0
      %v761 = vadd.f32 0.0, %v760
      %v762 = vpop.f32.mrb[0].mxu0
      %v763 = vpop.f32.mrb[0].mxu0
      %v764 = vadd.f32 0.0, %v763
      %v765 = vpop.f32.mrb[0].mxu0
      %766 = vmatprep.mubr.bf16.mxu0 0
      %767 = vmatmul.mubr.bf16.gmra.mrb[0].mxu0 %v632
      %v768 = vpop.f32.mrb[0].mxu0
      %v769 = vadd.f32 0.0, %v768
      %v770 = vpop.f32.mrb[0].mxu0
      %v771 = vpop.f32.mrb[0].mxu0
      %v772 = vadd.f32 0.0, %v771
      %v773 = vpop.f32.mrb[0].mxu0
      %774 = vmatprep.mubr.bf16.mxu0 0
      %775 = vmatmul.mubr.bf16.gmra.mrb[0].mxu0 %v633
      %v776 = vpop.f32.mrb[0].mxu0
      %v777 = vadd.f32 0.0, %v776
      %v778 = vpop.f32.mrb[0].mxu0
      %v779 = vpop.f32.mrb[0].mxu0
      %v780 = vadd.f32 0.0, %v779
      %v781 = vpop.f32.mrb[0].mxu0
      %782 = vmatprep.mubr.bf16.mxu0 0
      %783 = vmatmul.mubr.bf16.gmra.mrb[0].mxu0 %v634
      %v784 = vpop.f32.mrb[0].mxu0
      %v785 = vadd.f32 0.0, %v784
      %v786 = vpop.f32.mrb[0].mxu0
      %v787 = vpop.f32.mrb[0].mxu0
      %v788 = vadd.f32 0.0, %v787
      %v789 = vpop.f32.mrb[0].mxu0
      %790 = vmatprep.mubr.bf16.mxu0 0
      %791 = vmatmul.mubr.bf16.gmra.mrb[0].mxu0 %v635
      %v792 = vpop.f32.mrb[0].mxu0
      %v793 = vadd.f32 0.0, %v792
      %v794 = vpop.f32.mrb[0].mxu0
      %v795 = vpop.f32.mrb[0].mxu0
      %v796 = vadd.f32 0.0, %v795
      %v797 = vpop.f32.mrb[0].mxu0
      %798 = vmatprep.mubr.bf16.mxu0 0
      %799 = vmatmul.mubr.bf16.gmra.mrb[0].mxu0 %v636
      %v800 = vpop.f32.mrb[0].mxu0
      %v801 = vadd.f32 0.0, %v800
      %v802 = vpop.f32.mrb[0].mxu0
      %v803 = vpop.f32.mrb[0].mxu0
      %v804 = vadd.f32 0.0, %v803
      %v805 = vpop.f32.mrb[0].mxu0
      %806 = vmatprep.mubr.bf16.mxu0 0
      %807 = vmatmul.mubr.bf16.gmra.mrb[0].mxu0 %v637
      %v808 = vpop.f32.mrb[0].mxu0
      %v809 = vadd.f32 0.0, %v808
      %v810 = vpop.f32.mrb[0].mxu0
      %v811 = vpop.f32.mrb[0].mxu0
      %v812 = vadd.f32 0.0, %v811
      %v813 = vpop.f32.mrb[0].mxu0
      %814 = vdwg.mxu0
      %v815 = vmax.f32 %v399, %v689
      %v816 = vmax.f32 %v402, %v692
      %v817 = vmax.f32 %v407, %v697
      %v818 = vmax.f32 %v410, %v700
      %v819 = vmax.f32 %v415, %v705
      %v820 = vmax.f32 %v418, %v708
      %v821 = vmax.f32 %v423, %v713
      %v822 = vmax.f32 %v426, %v716
      %v823 = vmax.f32 %v431, %v721
      %v824 = vmax.f32 %v434, %v724
      %v825 = vmax.f32 %v439, %v729
      %v826 = vmax.f32 %v442, %v732
      %v827 = vmax.f32 %v447, %v737
      %v828 = vmax.f32 %v450, %v740
      %v829 = vmax.f32 %v455, %v745
      %v830 = vmax.f32 %v458, %v748
      %v831 = vmax.f32 %v463, %v753
      %v832 = vmax.f32 %v466, %v756
      %v833 = vmax.f32 %v471, %v761
      %v834 = vmax.f32 %v474, %v764
      %v835 = vmax.f32 %v479, %v769
      %v836 = vmax.f32 %v482, %v772
      %v837 = vmax.f32 %v487, %v777
      %v838 = vmax.f32 %v490, %v780
      %v839 = vmax.f32 %v495, %v785
      %v840 = vmax.f32 %v498, %v788
      %v841 = vmax.f32 %v503, %v793
      %v842 = vmax.f32 %v506, %v796
      %v843 = vmax.f32 %v511, %v801
      %v844 = vmax.f32 %v514, %v804
      %v845 = vmax.f32 %v519, %v809
      %v846 = vmax.f32 %v522, %v812
      %s847 = scalar_lea.vmem %s165, 256
      %v848 = vld [vmem:[%s847] sm:$0xf]
      %v849 = vld [vmem:[%s847 + $0x4] sm:$0xf]
      %v850 = vld [vmem:[%s847 + $0x8] sm:$0xf]
      %v851 = vld [vmem:[%s847 + $0xc] sm:$0xf]
      %v852 = vld [vmem:[%s847 + $0x10] sm:$0xf]
      %v853 = vld [vmem:[%s847 + $0x14] sm:$0xf]
      %v854 = vld [vmem:[%s847 + $0x18] sm:$0xf]
      %v855 = vld [vmem:[%s847 + $0x1c] sm:$0xf]
      %v856 = vld [vmem:[%s847 + $0x20] sm:$0xf]
      %v857 = vld [vmem:[%s847 + $0x24] sm:$0xf]
      %v858 = vld [vmem:[%s847 + $0x28] sm:$0xf]
      %v859 = vld [vmem:[%s847 + $0x2c] sm:$0xf]
      %v860 = vld [vmem:[%s847 + $0x30] sm:$0xf]
      %v861 = vld [vmem:[%s847 + $0x34] sm:$0xf]
      %v862 = vld [vmem:[%s847 + $0x38] sm:$0xf]
      %v863 = vld [vmem:[%s847 + $0x3c] sm:$0xf]
      %v864 = vld [vmem:[%s847 + $0x40] sm:$0xf]
      %v865 = vld [vmem:[%s847 + $0x44] sm:$0xf]
      %v866 = vld [vmem:[%s847 + $0x48] sm:$0xf]
      %v867 = vld [vmem:[%s847 + $0x4c] sm:$0xf]
      %v868 = vld [vmem:[%s847 + $0x50] sm:$0xf]
      %v869 = vld [vmem:[%s847 + $0x54] sm:$0xf]
      %v870 = vld [vmem:[%s847 + $0x58] sm:$0xf]
      %v871 = vld [vmem:[%s847 + $0x5c] sm:$0xf]
      %v872 = vld [vmem:[%s847 + $0x60] sm:$0xf]
      %v873 = vld [vmem:[%s847 + $0x64] sm:$0xf]
      %v874 = vld [vmem:[%s847 + $0x68] sm:$0xf]
      %v875 = vld [vmem:[%s847 + $0x6c] sm:$0xf]
      %v876 = vld [vmem:[%s847 + $0x70] sm:$0xf]
      %v877 = vld [vmem:[%s847 + $0x74] sm:$0xf]
      %v878 = vld [vmem:[%s847 + $0x78] sm:$0xf]
      %v879 = vld [vmem:[%s847 + $0x7c] sm:$0xf]
      %v912 = vunpack.c.l.b16 %v848
      %v913 = vunpack.c.l.b16 %v849
      %v914 = vunpack.c.l.b16 %v850
      %v915 = vunpack.c.l.b16 %v851
      %v916 = vunpack.c.l.b16 %v852
      %v917 = vunpack.c.l.b16 %v853
      %v918 = vunpack.c.l.b16 %v854
      %v919 = vunpack.c.l.b16 %v855
      %v920 = vunpack.c.l.b16 %v856
      %v921 = vunpack.c.l.b16 %v857
      %v922 = vunpack.c.l.b16 %v858
      %v923 = vunpack.c.l.b16 %v859
      %v924 = vunpack.c.l.b16 %v860
      %v925 = vunpack.c.l.b16 %v861
      %v926 = vunpack.c.l.b16 %v862
      %v927 = vunpack.c.l.b16 %v863
      %v928 = vunpack.c.l.b16 %v864
      %v929 = vunpack.c.l.b16 %v865
      %v930 = vunpack.c.l.b16 %v866
      %v931 = vunpack.c.l.b16 %v867
      %v932 = vunpack.c.l.b16 %v868
      %v933 = vunpack.c.l.b16 %v869
      %v934 = vunpack.c.l.b16 %v870
      %v935 = vunpack.c.l.b16 %v871
      %v936 = vunpack.c.l.b16 %v872
      %v937 = vunpack.c.l.b16 %v873
      %v938 = vunpack.c.l.b16 %v874
      %v939 = vunpack.c.l.b16 %v875
      %v940 = vunpack.c.l.b16 %v876
      %v941 = vunpack.c.l.b16 %v877
      %v942 = vunpack.c.l.b16 %v878
      %v943 = vunpack.c.l.b16 %v879
      %v944 = vpack.c.b16 %v913, %v912
      %v945 = vpack.c.b16 %v915, %v914
      %v946 = vpack.c.b16 %v917, %v916
      %v947 = vpack.c.b16 %v919, %v918
      %v948 = vpack.c.b16 %v921, %v920
      %v949 = vpack.c.b16 %v923, %v922
      %v950 = vpack.c.b16 %v925, %v924
      %v951 = vpack.c.b16 %v927, %v926
      %v952 = vpack.c.b16 %v929, %v928
      %v953 = vpack.c.b16 %v931, %v930
      %v954 = vpack.c.b16 %v933, %v932
      %v955 = vpack.c.b16 %v935, %v934
      %v956 = vpack.c.b16 %v937, %v936
      %v957 = vpack.c.b16 %v939, %v938
      %v958 = vpack.c.b16 %v941, %v940
      %v959 = vpack.c.b16 %v943, %v942
      %976 = vmatprep.subr.bf16.mxu0 0
      %977 = vmatpush1.bf16.msra.mxu0 %v348
      %978 = vmatprep.subr.bf16.mxu0 0
      %979 = vmatpush1.bf16.msra.mxu0 %v349
      %980 = vmatprep.subr.bf16.mxu0 0
      %981 = vmatpush1.bf16.msra.mxu0 %v350
      %982 = vmatprep.subr.bf16.mxu0 0
      %983 = vmatpush1.bf16.msra.mxu0 %v351
      %984 = vmatprep.subr.bf16.mxu0 0
      %985 = vmatpush1.bf16.msra.mxu0 %v352
      %986 = vmatprep.subr.bf16.mxu0 0
      %987 = vmatpush1.bf16.msra.mxu0 %v353
      %988 = vmatprep.subr.bf16.mxu0 0
      %989 = vmatpush1.bf16.msra.mxu0 %v354
      %990 = vmatprep.subr.bf16.mxu0 0
      %991 = vmatpush1.bf16.msra.mxu0 %v355
      %992 = vmatprep.subr.bf16.mxu0 0
      %993 = vmatpush1.bf16.msra.mxu0 0
      %994 = vmatprep.subr.bf16.mxu0 0
      %995 = vmatpush1.bf16.msra.mxu0 0
      %996 = vmatprep.subr.bf16.mxu0 0
      %997 = vmatpush1.bf16.msra.mxu0 0
      %998 = vmatprep.subr.bf16.mxu0 0
      %999 = vmatpush1.bf16.msra.mxu0 0
      %1000 = vmatprep.subr.bf16.mxu0 0
      %1001 = vmatpush1.bf16.msra.mxu0 0
      %1002 = vmatprep.subr.bf16.mxu0 0
      %1003 = vmatpush1.bf16.msra.mxu0 0
      %1004 = vmatprep.subr.bf16.mxu0 0
      %1005 = vmatpush1.bf16.msra.mxu0 0
      %1006 = vmatprep.subr.bf16.mxu0 0
      %1007 = vmatpush1.bf16.msra.mxu0 0
      %1008 = vmatprep.mubr.bf16.mxu0 0
      %1009 = vmatmul.mubr.bf16.gmra.mrb[0].mxu0 %v944
      %v1010 = vpop.f32.mrb[0].mxu0
      %v1011 = vadd.f32 0.0, %v1010
      %v1012 = vpop.f32.mrb[0].mxu0
      %v1013 = vpop.f32.mrb[0].mxu0
      %v1014 = vadd.f32 0.0, %v1013
      %v1015 = vpop.f32.mrb[0].mxu0
      %1016 = vmatprep.mubr.bf16.mxu0 0
      %1017 = vmatmul.mubr.bf16.gmra.mrb[0].mxu0 %v945
      %v1018 = vpop.f32.mrb[0].mxu0
      %v1019 = vadd.f32 0.0, %v1018
      %v1020 = vpop.f32.mrb[0].mxu0
      %v1021 = vpop.f32.mrb[0].mxu0
      %v1022 = vadd.f32 0.0, %v1021
      %v1023 = vpop.f32.mrb[0].mxu0
      %1024 = vmatprep.mubr.bf16.mxu0 0
      %1025 = vmatmul.mubr.bf16.gmra.mrb[0].mxu0 %v946
      %v1026 = vpop.f32.mrb[0].mxu0
      %v1027 = vadd.f32 0.0, %v1026
      %v1028 = vpop.f32.mrb[0].mxu0
      %v1029 = vpop.f32.mrb[0].mxu0
      %v1030 = vadd.f32 0.0, %v1029
      %v1031 = vpop.f32.mrb[0].mxu0
      %1032 = vmatprep.mubr.bf16.mxu0 0
      %1033 = vmatmul.mubr.bf16.gmra.mrb[0].mxu0 %v947
      %v1034 = vpop.f32.mrb[0].mxu0
      %v1035 = vadd.f32 0.0, %v1034
      %v1036 = vpop.f32.mrb[0].mxu0
      %v1037 = vpop.f32.mrb[0].mxu0
      %v1038 = vadd.f32 0.0, %v1037
      %v1039 = vpop.f32.mrb[0].mxu0
      %1040 = vmatprep.mubr.bf16.mxu0 0
      %1041 = vmatmul.mubr.bf16.gmra.mrb[0].mxu0 %v948
      %v1042 = vpop.f32.mrb[0].mxu0
      %v1043 = vadd.f32 0.0, %v1042
      %v1044 = vpop.f32.mrb[0].mxu0
      %v1045 = vpop.f32.mrb[0].mxu0
      %v1046 = vadd.f32 0.0, %v1045
      %v1047 = vpop.f32.mrb[0].mxu0
      %1048 = vmatprep.mubr.bf16.mxu0 0
      %1049 = vmatmul.mubr.bf16.gmra.mrb[0].mxu0 %v949
      %v1050 = vpop.f32.mrb[0].mxu0
      %v1051 = vadd.f32 0.0, %v1050
      %v1052 = vpop.f32.mrb[0].mxu0
      %v1053 = vpop.f32.mrb[0].mxu0
      %v1054 = vadd.f32 0.0, %v1053
      %v1055 = vpop.f32.mrb[0].mxu0
      %1056 = vmatprep.mubr.bf16.mxu0 0
      %1057 = vmatmul.mubr.bf16.gmra.mrb[0].mxu0 %v950
      %v1058 = vpop.f32.mrb[0].mxu0
      %v1059 = vadd.f32 0.0, %v1058
      %v1060 = vpop.f32.mrb[0].mxu0
      %v1061 = vpop.f32.mrb[0].mxu0
      %v1062 = vadd.f32 0.0, %v1061
      %v1063 = vpop.f32.mrb[0].mxu0
      %1064 = vmatprep.mubr.bf16.mxu0 0
      %1065 = vmatmul.mubr.bf16.gmra.mrb[0].mxu0 %v951
      %v1066 = vpop.f32.mrb[0].mxu0
      %v1067 = vadd.f32 0.0, %v1066
      %v1068 = vpop.f32.mrb[0].mxu0
      %v1069 = vpop.f32.mrb[0].mxu0
      %v1070 = vadd.f32 0.0, %v1069
      %v1071 = vpop.f32.mrb[0].mxu0
      %1072 = vmatprep.mubr.bf16.mxu0 0
      %1073 = vmatmul.mubr.bf16.gmra.mrb[0].mxu0 %v952
      %v1074 = vpop.f32.mrb[0].mxu0
      %v1075 = vadd.f32 0.0, %v1074
      %v1076 = vpop.f32.mrb[0].mxu0
      %v1077 = vpop.f32.mrb[0].mxu0
      %v1078 = vadd.f32 0.0, %v1077
      %v1079 = vpop.f32.mrb[0].mxu0
      %1080 = vmatprep.mubr.bf16.mxu0 0
      %1081 = vmatmul.mubr.bf16.gmra.mrb[0].mxu0 %v953
      %v1082 = vpop.f32.mrb[0].mxu0
      %v1083 = vadd.f32 0.0, %v1082
      %v1084 = vpop.f32.mrb[0].mxu0
      %v1085 = vpop.f32.mrb[0].mxu0
      %v1086 = vadd.f32 0.0, %v1085
      %v1087 = vpop.f32.mrb[0].mxu0
      %1088 = vmatprep.mubr.bf16.mxu0 0
      %1089 = vmatmul.mubr.bf16.gmra.mrb[0].mxu0 %v954
      %v1090 = vpop.f32.mrb[0].mxu0
      %v1091 = vadd.f32 0.0, %v1090
      %v1092 = vpop.f32.mrb[0].mxu0
      %v1093 = vpop.f32.mrb[0].mxu0
      %v1094 = vadd.f32 0.0, %v1093
      %v1095 = vpop.f32.mrb[0].mxu0
      %1096 = vmatprep.mubr.bf16.mxu0 0
      %1097 = vmatmul.mubr.bf16.gmra.mrb[0].mxu0 %v955
      %v1098 = vpop.f32.mrb[0].mxu0
      %v1099 = vadd.f32 0.0, %v1098
      %v1100 = vpop.f32.mrb[0].mxu0
      %v1101 = vpop.f32.mrb[0].mxu0
      %v1102 = vadd.f32 0.0, %v1101
      %v1103 = vpop.f32.mrb[0].mxu0
      %1104 = vmatprep.mubr.bf16.mxu0 0
      %1105 = vmatmul.mubr.bf16.gmra.mrb[0].mxu0 %v956
      %v1106 = vpop.f32.mrb[0].mxu0
      %v1107 = vadd.f32 0.0, %v1106
      %v1108 = vpop.f32.mrb[0].mxu0
      %v1109 = vpop.f32.mrb[0].mxu0
      %v1110 = vadd.f32 0.0, %v1109
      %v1111 = vpop.f32.mrb[0].mxu0
      %1112 = vmatprep.mubr.bf16.mxu0 0
      %1113 = vmatmul.mubr.bf16.gmra.mrb[0].mxu0 %v957
      %v1114 = vpop.f32.mrb[0].mxu0
      %v1115 = vadd.f32 0.0, %v1114
      %v1116 = vpop.f32.mrb[0].mxu0
      %v1117 = vpop.f32.mrb[0].mxu0
      %v1118 = vadd.f32 0.0, %v1117
      %v1119 = vpop.f32.mrb[0].mxu0
      %1120 = vmatprep.mubr.bf16.mxu0 0
      %1121 = vmatmul.mubr.bf16.gmra.mrb[0].mxu0 %v958
      %v1122 = vpop.f32.mrb[0].mxu0
      %v1123 = vadd.f32 0.0, %v1122
      %v1124 = vpop.f32.mrb[0].mxu0
      %v1125 = vpop.f32.mrb[0].mxu0
      %v1126 = vadd.f32 0.0, %v1125
      %v1127 = vpop.f32.mrb[0].mxu0
      %1128 = vmatprep.mubr.bf16.mxu0 0
      %1129 = vmatmul.mubr.bf16.gmra.mrb[0].mxu0 %v959
      %v1130 = vpop.f32.mrb[0].mxu0
      %v1131 = vadd.f32 0.0, %v1130
      %v1132 = vpop.f32.mrb[0].mxu0
      %v1133 = vpop.f32.mrb[0].mxu0
      %v1134 = vadd.f32 0.0, %v1133
      %v1135 = vpop.f32.mrb[0].mxu0
      %1136 = vdwg.mxu0
      %v1137 = vmax.f32 %v815, %v1011
      %v1138 = vmax.f32 %v816, %v1014
      %v1139 = vmax.f32 %v817, %v1019
      %v1140 = vmax.f32 %v818, %v1022
      %v1141 = vmax.f32 %v819, %v1027
      %v1142 = vmax.f32 %v820, %v1030
      %v1143 = vmax.f32 %v821, %v1035
      %v1144 = vmax.f32 %v822, %v1038
      %v1145 = vmax.f32 %v823, %v1043
      %v1146 = vmax.f32 %v824, %v1046
      %v1147 = vmax.f32 %v825, %v1051
      %v1148 = vmax.f32 %v826, %v1054
      %v1149 = vmax.f32 %v827, %v1059
      %v1150 = vmax.f32 %v828, %v1062
      %v1151 = vmax.f32 %v829, %v1067
      %v1152 = vmax.f32 %v830, %v1070
      %v1153 = vmax.f32 %v831, %v1075
      %v1154 = vmax.f32 %v832, %v1078
      %v1155 = vmax.f32 %v833, %v1083
      %v1156 = vmax.f32 %v834, %v1086
      %v1157 = vmax.f32 %v835, %v1091
      %v1158 = vmax.f32 %v836, %v1094
      %v1159 = vmax.f32 %v837, %v1099
      %v1160 = vmax.f32 %v838, %v1102
      %v1161 = vmax.f32 %v839, %v1107
      %v1162 = vmax.f32 %v840, %v1110
      %v1163 = vmax.f32 %v841, %v1115
      %v1164 = vmax.f32 %v842, %v1118
      %v1165 = vmax.f32 %v843, %v1123
      %v1166 = vmax.f32 %v844, %v1126
      %v1167 = vmax.f32 %v845, %v1131
      %v1168 = vmax.f32 %v846, %v1134
      %s1169 = scalar_lea.vmem %s165, 384
      %v1170 = vld [vmem:[%s1169] sm:$0xf]
      %v1171 = vld [vmem:[%s1169 + $0x4] sm:$0xf]
      %v1172 = vld [vmem:[%s1169 + $0x8] sm:$0xf]
      %v1173 = vld [vmem:[%s1169 + $0xc] sm:$0xf]
      %v1174 = vld [vmem:[%s1169 + $0x10] sm:$0xf]
      %v1175 = vld [vmem:[%s1169 + $0x14] sm:$0xf]
      %v1176 = vld [vmem:[%s1169 + $0x18] sm:$0xf]
      %v1177 = vld [vmem:[%s1169 + $0x1c] sm:$0xf]
      %v1178 = vld [vmem:[%s1169 + $0x20] sm:$0xf]
      %v1179 = vld [vmem:[%s1169 + $0x24] sm:$0xf]
      %v1180 = vld [vmem:[%s1169 + $0x28] sm:$0xf]
      %v1181 = vld [vmem:[%s1169 + $0x2c] sm:$0xf]
      %v1182 = vld [vmem:[%s1169 + $0x30] sm:$0xf]
      %v1183 = vld [vmem:[%s1169 + $0x34] sm:$0xf]
      %v1184 = vld [vmem:[%s1169 + $0x38] sm:$0xf]
      %v1185 = vld [vmem:[%s1169 + $0x3c] sm:$0xf]
      %v1186 = vld [vmem:[%s1169 + $0x40] sm:$0xf]
      %v1187 = vld [vmem:[%s1169 + $0x44] sm:$0xf]
      %v1188 = vld [vmem:[%s1169 + $0x48] sm:$0xf]
      %v1189 = vld [vmem:[%s1169 + $0x4c] sm:$0xf]
      %v1190 = vld [vmem:[%s1169 + $0x50] sm:$0xf]
      %v1191 = vld [vmem:[%s1169 + $0x54] sm:$0xf]
      %v1192 = vld [vmem:[%s1169 + $0x58] sm:$0xf]
      %v1193 = vld [vmem:[%s1169 + $0x5c] sm:$0xf]
      %v1194 = vld [vmem:[%s1169 + $0x60] sm:$0xf]
      %v1195 = vld [vmem:[%s1169 + $0x64] sm:$0xf]
      %v1196 = vld [vmem:[%s1169 + $0x68] sm:$0xf]
      %v1197 = vld [vmem:[%s1169 + $0x6c] sm:$0xf]
      %v1198 = vld [vmem:[%s1169 + $0x70] sm:$0xf]
      %v1199 = vld [vmem:[%s1169 + $0x74] sm:$0xf]
      %v1200 = vld [vmem:[%s1169 + $0x78] sm:$0xf]
      %v1201 = vld [vmem:[%s1169 + $0x7c] sm:$0xf]
      %v1234 = vunpack.c.l.b16 %v1170
      %v1235 = vunpack.c.l.b16 %v1171
      %v1236 = vunpack.c.l.b16 %v1172
      %v1237 = vunpack.c.l.b16 %v1173
      %v1238 = vunpack.c.l.b16 %v1174
      %v1239 = vunpack.c.l.b16 %v1175
      %v1240 = vunpack.c.l.b16 %v1176
      %v1241 = vunpack.c.l.b16 %v1177
      %v1242 = vunpack.c.l.b16 %v1178
      %v1243 = vunpack.c.l.b16 %v1179
      %v1244 = vunpack.c.l.b16 %v1180
      %v1245 = vunpack.c.l.b16 %v1181
      %v1246 = vunpack.c.l.b16 %v1182
      %v1247 = vunpack.c.l.b16 %v1183
      %v1248 = vunpack.c.l.b16 %v1184
      %v1249 = vunpack.c.l.b16 %v1185
      %v1250 = vunpack.c.l.b16 %v1186
      %v1251 = vunpack.c.l.b16 %v1187
      %v1252 = vunpack.c.l.b16 %v1188
      %v1253 = vunpack.c.l.b16 %v1189
      %v1254 = vunpack.c.l.b16 %v1190
      %v1255 = vunpack.c.l.b16 %v1191
      %v1256 = vunpack.c.l.b16 %v1192
      %v1257 = vunpack.c.l.b16 %v1193
      %v1258 = vunpack.c.l.b16 %v1194
      %v1259 = vunpack.c.l.b16 %v1195
      %v1260 = vunpack.c.l.b16 %v1196
      %v1261 = vunpack.c.l.b16 %v1197
      %v1262 = vunpack.c.l.b16 %v1198
      %v1263 = vunpack.c.l.b16 %v1199
      %v1264 = vunpack.c.l.b16 %v1200
      %v1265 = vunpack.c.l.b16 %v1201
      %v1266 = vpack.c.b16 %v1235, %v1234
      %v1267 = vpack.c.b16 %v1237, %v1236
      %v1268 = vpack.c.b16 %v1239, %v1238
      %v1269 = vpack.c.b16 %v1241, %v1240
      %v1270 = vpack.c.b16 %v1243, %v1242
      %v1271 = vpack.c.b16 %v1245, %v1244
      %v1272 = vpack.c.b16 %v1247, %v1246
      %v1273 = vpack.c.b16 %v1249, %v1248
      %v1274 = vpack.c.b16 %v1251, %v1250
      %v1275 = vpack.c.b16 %v1253, %v1252
      %v1276 = vpack.c.b16 %v1255, %v1254
      %v1277 = vpack.c.b16 %v1257, %v1256
      %v1278 = vpack.c.b16 %v1259, %v1258
      %v1279 = vpack.c.b16 %v1261, %v1260
      %v1280 = vpack.c.b16 %v1263, %v1262
      %v1281 = vpack.c.b16 %v1265, %v1264
      %1298 = vmatprep.subr.bf16.mxu0 0
      %1299 = vmatpush1.bf16.msra.mxu0 %v348
      %1300 = vmatprep.subr.bf16.mxu0 0
      %1301 = vmatpush1.bf16.msra.mxu0 %v349
      %1302 = vmatprep.subr.bf16.mxu0 0
      %1303 = vmatpush1.bf16.msra.mxu0 %v350
      %1304 = vmatprep.subr.bf16.mxu0 0
      %1305 = vmatpush1.bf16.msra.mxu0 %v351
      %1306 = vmatprep.subr.bf16.mxu0 0
      %1307 = vmatpush1.bf16.msra.mxu0 %v352
      %1308 = vmatprep.subr.bf16.mxu0 0
      %1309 = vmatpush1.bf16.msra.mxu0 %v353
      %1310 = vmatprep.subr.bf16.mxu0 0
      %1311 = vmatpush1.bf16.msra.mxu0 %v354
      %1312 = vmatprep.subr.bf16.mxu0 0
      %1313 = vmatpush1.bf16.msra.mxu0 %v355
      %1314 = vmatprep.subr.bf16.mxu0 0
      %1315 = vmatpush1.bf16.msra.mxu0 0
      %1316 = vmatprep.subr.bf16.mxu0 0
      %1317 = vmatpush1.bf16.msra.mxu0 0
      %1318 = vmatprep.subr.bf16.mxu0 0
      %1319 = vmatpush1.bf16.msra.mxu0 0
      %1320 = vmatprep.subr.bf16.mxu0 0
      %1321 = vmatpush1.bf16.msra.mxu0 0
      %1322 = vmatprep.subr.bf16.mxu0 0
      %1323 = vmatpush1.bf16.msra.mxu0 0
      %1324 = vmatprep.subr.bf16.mxu0 0
      %1325 = vmatpush1.bf16.msra.mxu0 0
      %1326 = vmatprep.subr.bf16.mxu0 0
      %1327 = vmatpush1.bf16.msra.mxu0 0
      %1328 = vmatprep.subr.bf16.mxu0 0
      %1329 = vmatpush1.bf16.msra.mxu0 0
      %1330 = vmatprep.mubr.bf16.mxu0 0
      %1331 = vmatmul.mubr.bf16.gmra.mrb[0].mxu0 %v1266
      %v1332 = vpop.f32.mrb[0].mxu0
      %v1333 = vadd.f32 0.0, %v1332
      %v1334 = vpop.f32.mrb[0].mxu0
      %v1335 = vpop.f32.mrb[0].mxu0
      %v1336 = vadd.f32 0.0, %v1335
      %v1337 = vpop.f32.mrb[0].mxu0
      %1338 = vmatprep.mubr.bf16.mxu0 0
      %1339 = vmatmul.mubr.bf16.gmra.mrb[0].mxu0 %v1267
      %v1340 = vpop.f32.mrb[0].mxu0
      %v1341 = vadd.f32 0.0, %v1340
      %v1342 = vpop.f32.mrb[0].mxu0
      %v1343 = vpop.f32.mrb[0].mxu0
      %v1344 = vadd.f32 0.0, %v1343
      %v1345 = vpop.f32.mrb[0].mxu0
      %1346 = vmatprep.mubr.bf16.mxu0 0
      %1347 = vmatmul.mubr.bf16.gmra.mrb[0].mxu0 %v1268
      %v1348 = vpop.f32.mrb[0].mxu0
      %v1349 = vadd.f32 0.0, %v1348
      %v1350 = vpop.f32.mrb[0].mxu0
      %v1351 = vpop.f32.mrb[0].mxu0
      %v1352 = vadd.f32 0.0, %v1351
      %v1353 = vpop.f32.mrb[0].mxu0
      %1354 = vmatprep.mubr.bf16.mxu0 0
      %1355 = vmatmul.mubr.bf16.gmra.mrb[0].mxu0 %v1269
      %v1356 = vpop.f32.mrb[0].mxu0
      %v1357 = vadd.f32 0.0, %v1356
      %v1358 = vpop.f32.mrb[0].mxu0
      %v1359 = vpop.f32.mrb[0].mxu0
      %v1360 = vadd.f32 0.0, %v1359
      %v1361 = vpop.f32.mrb[0].mxu0
      %1362 = vmatprep.mubr.bf16.mxu0 0
      %1363 = vmatmul.mubr.bf16.gmra.mrb[0].mxu0 %v1270
      %v1364 = vpop.f32.mrb[0].mxu0
      %v1365 = vadd.f32 0.0, %v1364
      %v1366 = vpop.f32.mrb[0].mxu0
      %v1367 = vpop.f32.mrb[0].mxu0
      %v1368 = vadd.f32 0.0, %v1367
      %v1369 = vpop.f32.mrb[0].mxu0
      %1370 = vmatprep.mubr.bf16.mxu0 0
      %1371 = vmatmul.mubr.bf16.gmra.mrb[0].mxu0 %v1271
      %v1372 = vpop.f32.mrb[0].mxu0
      %v1373 = vadd.f32 0.0, %v1372
      %v1374 = vpop.f32.mrb[0].mxu0
      %v1375 = vpop.f32.mrb[0].mxu0
      %v1376 = vadd.f32 0.0, %v1375
      %v1377 = vpop.f32.mrb[0].mxu0
      %1378 = vmatprep.mubr.bf16.mxu0 0
      %1379 = vmatmul.mubr.bf16.gmra.mrb[0].mxu0 %v1272
      %v1380 = vpop.f32.mrb[0].mxu0
      %v1381 = vadd.f32 0.0, %v1380
      %v1382 = vpop.f32.mrb[0].mxu0
      %v1383 = vpop.f32.mrb[0].mxu0
      %v1384 = vadd.f32 0.0, %v1383
      %v1385 = vpop.f32.mrb[0].mxu0
      %1386 = vmatprep.mubr.bf16.mxu0 0
      %1387 = vmatmul.mubr.bf16.gmra.mrb[0].mxu0 %v1273
      %v1388 = vpop.f32.mrb[0].mxu0
      %v1389 = vadd.f32 0.0, %v1388
      %v1390 = vpop.f32.mrb[0].mxu0
      %v1391 = vpop.f32.mrb[0].mxu0
      %v1392 = vadd.f32 0.0, %v1391
      %v1393 = vpop.f32.mrb[0].mxu0
      %1394 = vmatprep.mubr.bf16.mxu0 0
      %1395 = vmatmul.mubr.bf16.gmra.mrb[0].mxu0 %v1274
      %v1396 = vpop.f32.mrb[0].mxu0
      %v1397 = vadd.f32 0.0, %v1396
      %v1398 = vpop.f32.mrb[0].mxu0
      %v1399 = vpop.f32.mrb[0].mxu0
      %v1400 = vadd.f32 0.0, %v1399
      %v1401 = vpop.f32.mrb[0].mxu0
      %1402 = vmatprep.mubr.bf16.mxu0 0
      %1403 = vmatmul.mubr.bf16.gmra.mrb[0].mxu0 %v1275
      %v1404 = vpop.f32.mrb[0].mxu0
      %v1405 = vadd.f32 0.0, %v1404
      %v1406 = vpop.f32.mrb[0].mxu0
      %v1407 = vpop.f32.mrb[0].mxu0
      %v1408 = vadd.f32 0.0, %v1407
      %v1409 = vpop.f32.mrb[0].mxu0
      %1410 = vmatprep.mubr.bf16.mxu0 0
      %1411 = vmatmul.mubr.bf16.gmra.mrb[0].mxu0 %v1276
      %v1412 = vpop.f32.mrb[0].mxu0
      %v1413 = vadd.f32 0.0, %v1412
      %v1414 = vpop.f32.mrb[0].mxu0
      %v1415 = vpop.f32.mrb[0].mxu0
      %v1416 = vadd.f32 0.0, %v1415
      %v1417 = vpop.f32.mrb[0].mxu0
      %1418 = vmatprep.mubr.bf16.mxu0 0
      %1419 = vmatmul.mubr.bf16.gmra.mrb[0].mxu0 %v1277
      %v1420 = vpop.f32.mrb[0].mxu0
      %v1421 = vadd.f32 0.0, %v1420
      %v1422 = vpop.f32.mrb[0].mxu0
      %v1423 = vpop.f32.mrb[0].mxu0
      %v1424 = vadd.f32 0.0, %v1423
      %v1425 = vpop.f32.mrb[0].mxu0
      %1426 = vmatprep.mubr.bf16.mxu0 0
      %1427 = vmatmul.mubr.bf16.gmra.mrb[0].mxu0 %v1278
      %v1428 = vpop.f32.mrb[0].mxu0
      %v1429 = vadd.f32 0.0, %v1428
      %v1430 = vpop.f32.mrb[0].mxu0
      %v1431 = vpop.f32.mrb[0].mxu0
      %v1432 = vadd.f32 0.0, %v1431
      %v1433 = vpop.f32.mrb[0].mxu0
      %1434 = vmatprep.mubr.bf16.mxu0 0
      %1435 = vmatmul.mubr.bf16.gmra.mrb[0].mxu0 %v1279
      %v1436 = vpop.f32.mrb[0].mxu0
      %v1437 = vadd.f32 0.0, %v1436
      %v1438 = vpop.f32.mrb[0].mxu0
      %v1439 = vpop.f32.mrb[0].mxu0
      %v1440 = vadd.f32 0.0, %v1439
      %v1441 = vpop.f32.mrb[0].mxu0
      %1442 = vmatprep.mubr.bf16.mxu0 0
      %1443 = vmatmul.mubr.bf16.gmra.mrb[0].mxu0 %v1280
      %v1444 = vpop.f32.mrb[0].mxu0
      %v1445 = vadd.f32 0.0, %v1444
      %v1446 = vpop.f32.mrb[0].mxu0
      %v1447 = vpop.f32.mrb[0].mxu0
      %v1448 = vadd.f32 0.0, %v1447
      %v1449 = vpop.f32.mrb[0].mxu0
      %1450 = vmatprep.mubr.bf16.mxu0 0
      %1451 = vmatmul.mubr.bf16.gmra.mrb[0].mxu0 %v1281
      %v1452 = vpop.f32.mrb[0].mxu0
      %v1453 = vadd.f32 0.0, %v1452
      %v1454 = vpop.f32.mrb[0].mxu0
      %v1455 = vpop.f32.mrb[0].mxu0
      %v1456 = vadd.f32 0.0, %v1455
      %v1457 = vpop.f32.mrb[0].mxu0
      %1458 = vdwg.mxu0
      %v1459 = vmax.f32 %v1137, %v1333
      %v1460 = vmax.f32 %v1138, %v1336
      %v1461 = vmax.f32 %v1139, %v1341
      %v1462 = vmax.f32 %v1140, %v1344
      %v1463 = vmax.f32 %v1141, %v1349
      %v1464 = vmax.f32 %v1142, %v1352
      %v1465 = vmax.f32 %v1143, %v1357
      %v1466 = vmax.f32 %v1144, %v1360
      %v1467 = vmax.f32 %v1145, %v1365
      %v1468 = vmax.f32 %v1146, %v1368
      %v1469 = vmax.f32 %v1147, %v1373
      %v1470 = vmax.f32 %v1148, %v1376
      %v1471 = vmax.f32 %v1149, %v1381
      %v1472 = vmax.f32 %v1150, %v1384
      %v1473 = vmax.f32 %v1151, %v1389
      %v1474 = vmax.f32 %v1152, %v1392
      %v1475 = vmax.f32 %v1153, %v1397
      %v1476 = vmax.f32 %v1154, %v1400
      %v1477 = vmax.f32 %v1155, %v1405
      %v1478 = vmax.f32 %v1156, %v1408
      %v1479 = vmax.f32 %v1157, %v1413
      %v1480 = vmax.f32 %v1158, %v1416
      %v1481 = vmax.f32 %v1159, %v1421
      %v1482 = vmax.f32 %v1160, %v1424
      %v1483 = vmax.f32 %v1161, %v1429
      %v1484 = vmax.f32 %v1162, %v1432
      %v1485 = vmax.f32 %v1163, %v1437
      %v1486 = vmax.f32 %v1164, %v1440
      %v1487 = vmax.f32 %v1165, %v1445
      %v1488 = vmax.f32 %v1166, %v1448
      %v1489 = vmax.f32 %v1167, %v1453
      %v1490 = vmax.f32 %v1168, %v1456
      %v1491 = vld [vmem:[%s2] sm:$0x1]
      %v1493 = vlaneseq
      %v1494 = vshrl.u32 %v1493, 7
      %v1495 = vsub.s32 0, %v1494
      %v1496 = vrot.slane %v1491, %v1495
      %v1498 = vadd.f32 %v1459, %v1496
      %v1499 = vadd.f32 %v1460, %v1496
      %v1500 = vadd.f32 %v1461, %v1496
      %v1501 = vadd.f32 %v1462, %v1496
      %v1502 = vadd.f32 %v1463, %v1496
      %v1503 = vadd.f32 %v1464, %v1496
      %v1504 = vadd.f32 %v1465, %v1496
      %v1505 = vadd.f32 %v1466, %v1496
      %v1506 = vadd.f32 %v1467, %v1496
      %v1507 = vadd.f32 %v1468, %v1496
      %v1508 = vadd.f32 %v1469, %v1496
      %v1509 = vadd.f32 %v1470, %v1496
      %v1510 = vadd.f32 %v1471, %v1496
      %v1511 = vadd.f32 %v1472, %v1496
      %v1512 = vadd.f32 %v1473, %v1496
      %v1513 = vadd.f32 %v1474, %v1496
      %v1514 = vadd.f32 %v1475, %v1496
      %v1515 = vadd.f32 %v1476, %v1496
      %v1516 = vadd.f32 %v1477, %v1496
      %v1517 = vadd.f32 %v1478, %v1496
      %v1518 = vadd.f32 %v1479, %v1496
      %v1519 = vadd.f32 %v1480, %v1496
      %v1520 = vadd.f32 %v1481, %v1496
      %v1521 = vadd.f32 %v1482, %v1496
      %v1522 = vadd.f32 %v1483, %v1496
      %v1523 = vadd.f32 %v1484, %v1496
      %v1524 = vadd.f32 %v1485, %v1496
      %v1525 = vadd.f32 %v1486, %v1496
      %v1526 = vadd.f32 %v1487, %v1496
      %v1527 = vadd.f32 %v1488, %v1496
      %v1528 = vadd.f32 %v1489, %v1496
      %v1529 = vadd.f32 %v1490, %v1496
      %v1530 = vmax.f32 %v1498, 0.0
      %v1531 = vmax.f32 %v1499, 0.0
      %v1532 = vmax.f32 %v1500, 0.0
      %v1533 = vmax.f32 %v1501, 0.0
      %v1534 = vmax.f32 %v1502, 0.0
      %v1535 = vmax.f32 %v1503, 0.0
      %v1536 = vmax.f32 %v1504, 0.0
      %v1537 = vmax.f32 %v1505, 0.0
      %v1538 = vmax.f32 %v1506, 0.0
      %v1539 = vmax.f32 %v1507, 0.0
      %v1540 = vmax.f32 %v1508, 0.0
      %v1541 = vmax.f32 %v1509, 0.0
      %v1542 = vmax.f32 %v1510, 0.0
      %v1543 = vmax.f32 %v1511, 0.0
      %v1544 = vmax.f32 %v1512, 0.0
      %v1545 = vmax.f32 %v1513, 0.0
      %v1546 = vmax.f32 %v1514, 0.0
      %v1547 = vmax.f32 %v1515, 0.0
      %v1548 = vmax.f32 %v1516, 0.0
      %v1549 = vmax.f32 %v1517, 0.0
      %v1550 = vmax.f32 %v1518, 0.0
      %v1551 = vmax.f32 %v1519, 0.0
      %v1552 = vmax.f32 %v1520, 0.0
      %v1553 = vmax.f32 %v1521, 0.0
      %v1554 = vmax.f32 %v1522, 0.0
      %v1555 = vmax.f32 %v1523, 0.0
      %v1556 = vmax.f32 %v1524, 0.0
      %v1557 = vmax.f32 %v1525, 0.0
      %v1558 = vmax.f32 %v1526, 0.0
      %v1559 = vmax.f32 %v1527, 0.0
      %v1560 = vmax.f32 %v1528, 0.0
      %v1561 = vmax.f32 %v1529, 0.0
      %1562 = vst [vmem:[%s170] sm:$0xff] %v1530
      %1563 = vst [vmem:[%s170 + $0x8] sm:$0xff] %v1531
      %1564 = vst [vmem:[%s170 + $0x10] sm:$0xff] %v1532
      %1565 = vst [vmem:[%s170 + $0x18] sm:$0xff] %v1533
      %1566 = vst [vmem:[%s170 + $0x20] sm:$0xff] %v1534
      %1567 = vst [vmem:[%s170 + $0x28] sm:$0xff] %v1535
      %1568 = vst [vmem:[%s170 + $0x30] sm:$0xff] %v1536
      %1569 = vst [vmem:[%s170 + $0x38] sm:$0xff] %v1537
      %1570 = vst [vmem:[%s170 + $0x40] sm:$0xff] %v1538
      %1571 = vst [vmem:[%s170 + $0x48] sm:$0xff] %v1539
      %1572 = vst [vmem:[%s170 + $0x50] sm:$0xff] %v1540
      %1573 = vst [vmem:[%s170 + $0x58] sm:$0xff] %v1541
      %1574 = vst [vmem:[%s170 + $0x60] sm:$0xff] %v1542
      %1575 = vst [vmem:[%s170 + $0x68] sm:$0xff] %v1543
      %1576 = vst [vmem:[%s170 + $0x70] sm:$0xff] %v1544
      %1577 = vst [vmem:[%s170 + $0x78] sm:$0xff] %v1545
      %1578 = vst [vmem:[%s170 + $0x80] sm:$0xff] %v1546
      %1579 = vst [vmem:[%s170 + $0x88] sm:$0xff] %v1547
      %1580 = vst [vmem:[%s170 + $0x90] sm:$0xff] %v1548
      %1581 = vst [vmem:[%s170 + $0x98] sm:$0xff] %v1549
      %1582 = vst [vmem:[%s170 + $0xa0] sm:$0xff] %v1550
      %1583 = vst [vmem:[%s170 + $0xa8] sm:$0xff] %v1551
      %1584 = vst [vmem:[%s170 + $0xb0] sm:$0xff] %v1552
      %1585 = vst [vmem:[%s170 + $0xb8] sm:$0xff] %v1553
      %1586 = vst [vmem:[%s170 + $0xc0] sm:$0xff] %v1554
      %1587 = vst [vmem:[%s170 + $0xc8] sm:$0xff] %v1555
      %1588 = vst [vmem:[%s170 + $0xd0] sm:$0xff] %v1556
      %1589 = vst [vmem:[%s170 + $0xd8] sm:$0xff] %v1557
      %1590 = vst [vmem:[%s170 + $0xe0] sm:$0xff] %v1558
      %1591 = vst [vmem:[%s170 + $0xe8] sm:$0xff] %v1559
      %1592 = vst [vmem:[%s170 + $0xf0] sm:$0xff] %v1560
      %1593 = vst [vmem:[%s170 + $0xf8] sm:$0xff] %v1561
      %p1594 = scmp.lt.s32.totalorder %s14, 1
      %s1595 = scalar_select %p1594, %s14, 1
      %s1596 = smul.addr %s1595, 32
      %s1597 = smul.addr %s1596, 8
      %s1598 = scalar_lea.vmem %s3, %s1597
      // Predicated region
      $region33: #{net_forward.4} parent=31 // pred_check
        %p1599 = pneg %p100
      $region34: #{net_forward.4} parent=31 // pred_check_branch
        %1601 = sbr.rel (%p1599) target = $region36
      $region35: #{net_forward.4} parent=31 // pred_region
        _
      $region36: #{net_forward.4} parent=31 // pred_fallthru
        _
    $region32: #{net_forward.4} parent=5 // pred_fallthru
      _
    %p1602 = scmp.le.s32.totalorder 2, %s9
    // Predicated region
    $region37: #{net_forward.4} parent=5 // pred_check
      %p1603 = pneg %p1602
    $region38: #{net_forward.4} parent=5 // pred_check_branch
      %1605 = sbr.rel (%p1603) target = $region40
    $region39: #{net_forward.4} parent=5 // pred_region
      %s1606 = ssub.s32 %s9, 2
      // Predicated region
      $region41: #{net_forward.4} parent=39 // pred_check
        %p1607 = pneg %p106
      $region42: #{net_forward.4} parent=39 // pred_check_branch
        %1609 = sbr.rel (%p1607) target = $region44
      $region43: #{net_forward.4} parent=39 // pred_region
        %p1610 = scmp.lt.s32.totalorder %s15, 1
        %s1611 = scalar_select %p1610, %s15, 1
        %s1612 = smul.addr %s1611, 32
        %s1613 = smul.addr %s1612, 8
        %s1614 = scalar_lea.vmem %s3, %s1613
      $region44: #{net_forward.4} parent=39 // pred_fallthru
        _
    $region40: #{net_forward.4} parent=5 // pred_fallthru
      _
  $region6: #{net_forward.4} parent=0 // loop_footer
    %s13 = sadd.s32 1, %s9
  $region7: #{net_forward.4} parent=0 // loop_footer_branch
    %8 = sbr.rel target = $region3
  $region8: #{net_forward.4} parent=0 // loop_exit
    _

// kernel: net_forward.5
$region0: #{net_forward.5}
  #allocation0 [shape = 'u32[]', space=smem, size = 0x4, offset = 0x4, fixed_abs, tag = 'smem constant byte address 0x4 - core index']
  #allocation1 [shape = 'u32[144,128]{1,0:T(1,128)}', space=vmem, size = 0x12000, scoped, tag = 'internal scratch']
  %s0 = inlined_call_operand.vmem [shape: bf16[2,4,64,128], index: 0, kind: input, shape index: {}]
  %s1 = inlined_call_operand.vmem [shape: bf16[128,128], index: 1, kind: input, shape index: {}]
  %s2 = inlined_call_operand.vmem [shape: f32[1,128], index: 2, kind: input, shape index: {}]
  %s3 = inlined_call_operand.vmem [shape: f32[2,64,128], index: 3, kind: output, shape index: {}]
  %s4 = sld [smem:[#allocation0]]
  $region45: #{net_forward.5} parent=0
    _
  %s6 = ssub.s32 1, %s4
  %s7 = scalar_select 0, %s6, %s4
  loop: start=0, step=1, limit=4
  $region2: #{net_forward.5} parent=0 // loop_pre_header
    _
  $region3: #{net_forward.5} parent=0 // loop_header
    %s9 = sphi 0, %s13
    %p10 = scmp.ge.s32.totalorder %s9, 4
    %s19 = sphi 0, %s21
    %s22 = sphi 0, %s19
    %s23 = sphi 0, %s22
    %s39 = sphi 0, %s23
    %s43 = sphi 0, %s43
    %s45 = sphi 0, %s43
    %s46 = sphi 0, %s45
    %s60 = sphi 0, %s46
    %s64 = sphi 0, %s64
    %s66 = sphi 0, %s64
    %s67 = sphi 0, %s66
    %s81 = sphi 0, %s67
    %s87 = sphi 0, %s89
    %s90 = sphi 0, %s87
    %s91 = sphi 0, %s90
    %s107 = sphi 0, %s91
  $region4: #{net_forward.5} parent=0 // loop_header_branch
    %12 = sbr.rel (%p10) target = $region8
  $region5: #{net_forward.5} parent=0 // loop_body
    %s14 = ssub.s32 %s9, 1
    %s15 = ssub.s32 %s9, 2
    %s16 = sadd.s32 %s9, 1
    %s17 = ssub.s32 %s9, %s16
    %p18 = scmp.eq.s32.totalorder %s17, 0
    %s20 = sadd.s32 %s19, 1
    %s21 = scalar_select %p18, %s19, %s20
    %p24 = pneg %p18
    %p25 = scmp.eq.s32.totalorder %s9, 1
    %p26 = por %p24, %p25
    %p27 = scmp.ne.s32.totalorder %s19, %s22
    %p28 = scmp.eq.s32.totalorder %s9, 0
    %p29 = por %p27, %p28
    %p30 = scmp.ne.s32.totalorder %s19, %s22
    %p31 = scmp.eq.s32.totalorder %s14, 1
    %p32 = por %p30, %p31
    %p33 = scmp.ne.s32.totalorder %s22, %s23
    %p34 = scmp.eq.s32.totalorder %s14, 0
    %p35 = por %p33, %p34
    %p36 = scmp.ne.s32.totalorder %s22, %s23
    %p37 = scmp.eq.s32.totalorder %s15, 1
    %p38 = por %p36, %p37
    %p40 = scmp.ne.s32.totalorder %s23, %s39
    %p41 = scmp.eq.s32.totalorder %s15, 0
    %p42 = por %p40, %p41
    %s44 = sadd.s32 %s43, 1
    %p47 = scmp.eq.s32.totalorder %s9, 1
    %p48 = scmp.ne.s32.totalorder %s43, %s45
    %p49 = scmp.eq.s32.totalorder %s9, 0
    %p50 = por %p48, %p49
    %p51 = scmp.ne.s32.totalorder %s43, %s45
    %p52 = scmp.eq.s32.totalorder %s14, 1
    %p53 = por %p51, %p52
    %p54 = scmp.ne.s32.totalorder %s45, %s46
    %p55 = scmp.eq.s32.totalorder %s14, 0
    %p56 = por %p54, %p55
    %p57 = scmp.ne.s32.totalorder %s45, %s46
    %p58 = scmp.eq.s32.totalorder %s15, 1
    %p59 = por %p57, %p58
    %p61 = scmp.ne.s32.totalorder %s46, %s60
    %p62 = scmp.eq.s32.totalorder %s15, 0
    %p63 = por %p61, %p62
    %s65 = sadd.s32 %s64, 1
    %p68 = scmp.eq.s32.totalorder %s9, 1
    %p69 = scmp.ne.s32.totalorder %s64, %s66
    %p70 = scmp.eq.s32.totalorder %s9, 0
    %p71 = por %p69, %p70
    %p72 = scmp.ne.s32.totalorder %s64, %s66
    %p73 = scmp.eq.s32.totalorder %s14, 1
    %p74 = por %p72, %p73
    %p75 = scmp.ne.s32.totalorder %s66, %s67
    %p76 = scmp.eq.s32.totalorder %s14, 0
    %p77 = por %p75, %p76
    %p78 = scmp.ne.s32.totalorder %s66, %s67
    %p79 = scmp.eq.s32.totalorder %s15, 1
    %p80 = por %p78, %p79
    %p82 = scmp.ne.s32.totalorder %s67, %s81
    %p83 = scmp.eq.s32.totalorder %s15, 0
    %p84 = por %p82, %p83
    %s85 = ssub.s32 %s9, %s16
    %p86 = scmp.eq.s32.totalorder %s85, 0
    %s88 = sadd.s32 %s87, 1
    %s89 = scalar_select %p86, %s87, %s88
    %p92 = pneg %p86
    %p93 = scmp.eq.s32.totalorder %s9, 1
    %p94 = por %p92, %p93
    %p95 = scmp.ne.s32.totalorder %s87, %s90
    %p96 = scmp.eq.s32.totalorder %s9, 0
    %p97 = por %p95, %p96
    %p98 = scmp.ne.s32.totalorder %s87, %s90
    %p99 = scmp.eq.s32.totalorder %s14, 1
    %p100 = por %p98, %p99
    %p101 = scmp.ne.s32.totalorder %s90, %s91
    %p102 = scmp.eq.s32.totalorder %s14, 0
    %p103 = por %p101, %p102
    %p104 = scmp.ne.s32.totalorder %s90, %s91
    %p105 = scmp.eq.s32.totalorder %s15, 1
    %p106 = por %p104, %p105
    %p108 = scmp.ne.s32.totalorder %s91, %s107
    %p109 = scmp.eq.s32.totalorder %s15, 0
    %p110 = por %p108, %p109
    %p111 = scmp.le.s32.totalorder 1, %s9
    %p112 = scmp.lt.s32.totalorder %s9, 3
    %p113 = pnand %p111, %p112
    %p114 = pneg %p113
    // Predicated region
    $region9: #{net_forward.5} parent=5 // pred_check
      _
    $region10: #{net_forward.5} parent=5 // pred_check_branch
      %116 = sbr.rel (%p113) target = $region12
    $region11: #{net_forward.5} parent=5 // pred_region
      %s117 = ssub.s32 %s9, 1
      // Predicated region
      $region13: #{net_forward.5} parent=11 // pred_check
        %p118 = pneg %p56
      $region14: #{net_forward.5} parent=11 // pred_check_branch
        %120 = sbr.rel (%p118) target = $region16
      $region15: #{net_forward.5} parent=11 // pred_region
        _
      $region16: #{net_forward.5} parent=11 // pred_fallthru
        _
      // Predicated region
      $region17: #{net_forward.5} parent=11 // pred_check
        %p121 = pneg %p77
      $region18: #{net_forward.5} parent=11 // pred_check_branch
        %123 = sbr.rel (%p121) target = $region20
      $region19: #{net_forward.5} parent=11 // pred_region
        _
      $region20: #{net_forward.5} parent=11 // pred_fallthru
        _
    $region12: #{net_forward.5} parent=5 // pred_fallthru
      _
    %p124 = scmp.lt.s32.totalorder %s9, 2
    // Predicated region
    $region21: #{net_forward.5} parent=5 // pred_check
      %p125 = pneg %p124
    $region22: #{net_forward.5} parent=5 // pred_check_branch
      %127 = sbr.rel (%p125) target = $region24
    $region23: #{net_forward.5} parent=5 // pred_region
      // Predicated region
      $region25: #{net_forward.5} parent=23 // pred_check
        %p128 = pneg %p29
      $region26: #{net_forward.5} parent=23 // pred_check_branch
        %130 = sbr.rel (%p128) target = $region28
      $region27: #{net_forward.5} parent=23 // pred_region
        %p131 = scmp.lt.s32.totalorder %s9, 1
        %s132 = scalar_select %p131, %s9, 1
        %s133 = smul.addr %s132, 32
        %s134 = smul.addr %s133, 4
        %s135 = scalar_lea.vmem %s0, %s134
      $region28: #{net_forward.5} parent=23 // pred_fallthru
        _
    $region24: #{net_forward.5} parent=5 // pred_fallthru
      _
    %p136 = scmp.le.s32.totalorder 1, %s9
    %p137 = scmp.lt.s32.totalorder %s9, 3
    %p138 = pnand %p136, %p137
    %p139 = pneg %p138
    // Predicated region
    $region29: #{net_forward.5} parent=5 // pred_check
      _
    $region30: #{net_forward.5} parent=5 // pred_check_branch
      %141 = sbr.rel (%p138) target = $region32
    $region31: #{net_forward.5} parent=5 // pred_region
      %s142 = ssub.s32 %s9, 1
      %p143 = scmp.lt.s32.totalorder %s14, 1
      %s144 = scalar_select %p143, %s14, 1
      %s145 = smul.addr %s144, 32
      %s146 = smul.addr %s145, 4
      %s147 = scalar_lea.vmem %s0, %s146
      %p148 = pneg %p35
      %p149 = pneg %p32
      %p150 = pneg %p56
      %p151 = pneg %p53
      %p152 = pneg %p77
      %p153 = pneg %p74
      %p154 = pneg %p103
      %p155 = pneg %p100
      %p156 = scmp.lt.s32.totalorder %s14, 1
      %s157 = scalar_select %p156, %s14, 1
      %s158 = smul.addr %s157, 8
      %s159 = smul.addr %s158, 8
      %s160 = scalar_lea.vmem %s3, %s159
      %p161 = scmp.lt.s32.totalorder %s14, 1
      %s162 = scalar_select %p161, %s14, 1
      %s163 = smul.addr %s162, 32
      %s164 = smul.addr %s163, 4
      %s165 = scalar_lea.vmem %s0, %s164
      %p166 = scmp.lt.s32.totalorder %s14, 1
      %s167 = scalar_select %p166, %s14, 1
      %s168 = smul.addr %s167, 8
      %s169 = smul.addr %s168, 8
      %s170 = scalar_lea.vmem %s3, %s169
      %v172 = vld [vmem:[%s1] sm:$0xf]
      %v173 = vld [vmem:[%s1 + $0x4] sm:$0xf]
      %v174 = vld [vmem:[%s1 + $0x8] sm:$0xf]
      %v175 = vld [vmem:[%s1 + $0xc] sm:$0xf]
      %v176 = vld [vmem:[%s1 + $0x10] sm:$0xf]
      %v177 = vld [vmem:[%s1 + $0x14] sm:$0xf]
      %v178 = vld [vmem:[%s1 + $0x18] sm:$0xf]
      %v179 = vld [vmem:[%s1 + $0x1c] sm:$0xf]
      %v180 = vld [vmem:[%s1 + $0x20] sm:$0xf]
      %v181 = vld [vmem:[%s1 + $0x24] sm:$0xf]
      %v182 = vld [vmem:[%s1 + $0x28] sm:$0xf]
      %v183 = vld [vmem:[%s1 + $0x2c] sm:$0xf]
      %v184 = vld [vmem:[%s1 + $0x30] sm:$0xf]
      %v185 = vld [vmem:[%s1 + $0x34] sm:$0xf]
      %v186 = vld [vmem:[%s1 + $0x38] sm:$0xf]
      %v187 = vld [vmem:[%s1 + $0x3c] sm:$0xf]
      %v188 = vld [vmem:[%s165] sm:$0xf]
      %v189 = vld [vmem:[%s165 + $0x4] sm:$0xf]
      %v190 = vld [vmem:[%s165 + $0x8] sm:$0xf]
      %v191 = vld [vmem:[%s165 + $0xc] sm:$0xf]
      %v192 = vld [vmem:[%s165 + $0x10] sm:$0xf]
      %v193 = vld [vmem:[%s165 + $0x14] sm:$0xf]
      %v194 = vld [vmem:[%s165 + $0x18] sm:$0xf]
      %v195 = vld [vmem:[%s165 + $0x1c] sm:$0xf]
      %v204 = vunpack.c.l.b16 %v188
      %v205 = vunpack.c.l.b16 %v189
      %v206 = vunpack.c.l.b16 %v190
      %v207 = vunpack.c.l.b16 %v191
      %v208 = vunpack.c.l.b16 %v192
      %v209 = vunpack.c.l.b16 %v193
      %v210 = vunpack.c.l.b16 %v194
      %v211 = vunpack.c.l.b16 %v195
      %v212 = vpack.c.b16 %v205, %v204
      %v213 = vpack.c.b16 %v207, %v206
      %v214 = vpack.c.b16 %v209, %v208
      %v215 = vpack.c.b16 %v211, %v210
      %v236 = vunpack.c.l.b16 %v172
      %v237 = vunpack.c.l.b16 %v173
      %v238 = vunpack.c.l.b16 %v174
      %v239 = vunpack.c.l.b16 %v175
      %v240 = vunpack.c.l.b16 %v176
      %v241 = vunpack.c.l.b16 %v177
      %v242 = vunpack.c.l.b16 %v178
      %v243 = vunpack.c.l.b16 %v179
      %v244 = vunpack.c.l.b16 %v180
      %v245 = vunpack.c.l.b16 %v181
      %v246 = vunpack.c.l.b16 %v182
      %v247 = vunpack.c.l.b16 %v183
      %v248 = vunpack.c.l.b16 %v184
      %v249 = vunpack.c.l.b16 %v185
      %v250 = vunpack.c.l.b16 %v186
      %v251 = vunpack.c.l.b16 %v187
      %v252 = vpack.c.b16 %v237, %v236
      %v253 = vpack.c.b16 %v239, %v238
      %v254 = vpack.c.b16 %v241, %v240
      %v255 = vpack.c.b16 %v243, %v242
      %v256 = vpack.c.b16 %v245, %v244
      %v257 = vpack.c.b16 %v247, %v246
      %v258 = vpack.c.b16 %v249, %v248
      %v259 = vpack.c.b16 %v251, %v250
      %268 = vmatprep.subr.bf16.mxu0 0
      %269 = vmatpush1.bf16.msra.mxu0 %v252
      %270 = vmatprep.subr.bf16.mxu0 0
      %271 = vmatpush1.bf16.msra.mxu0 %v253
      %272 = vmatprep.subr.bf16.mxu0 0
      %273 = vmatpush1.bf16.msra.mxu0 %v254
      %274 = vmatprep.subr.bf16.mxu0 0
      %275 = vmatpush1.bf16.msra.mxu0 %v255
      %276 = vmatprep.subr.bf16.mxu0 0
      %277 = vmatpush1.bf16.msra.mxu0 %v256
      %278 = vmatprep.subr.bf16.mxu0 0
      %279 = vmatpush1.bf16.msra.mxu0 %v257
      %280 = vmatprep.subr.bf16.mxu0 0
      %281 = vmatpush1.bf16.msra.mxu0 %v258
      %282 = vmatprep.subr.bf16.mxu0 0
      %283 = vmatpush1.bf16.msra.mxu0 %v259
      %284 = vmatprep.subr.bf16.mxu0 0
      %285 = vmatpush1.bf16.msra.mxu0 0
      %286 = vmatprep.subr.bf16.mxu0 0
      %287 = vmatpush1.bf16.msra.mxu0 0
      %288 = vmatprep.subr.bf16.mxu0 0
      %289 = vmatpush1.bf16.msra.mxu0 0
      %290 = vmatprep.subr.bf16.mxu0 0
      %291 = vmatpush1.bf16.msra.mxu0 0
      %292 = vmatprep.subr.bf16.mxu0 0
      %293 = vmatpush1.bf16.msra.mxu0 0
      %294 = vmatprep.subr.bf16.mxu0 0
      %295 = vmatpush1.bf16.msra.mxu0 0
      %296 = vmatprep.subr.bf16.mxu0 0
      %297 = vmatpush1.bf16.msra.mxu0 0
      %298 = vmatprep.subr.bf16.mxu0 0
      %299 = vmatpush1.bf16.msra.mxu0 0
      %300 = vmatprep.mubr.bf16.mxu0 0
      %301 = vmatmul.mubr.bf16.gmra.mrb[0].mxu0 %v212
      %v302 = vpop.f32.mrb[0].mxu0
      %v303 = vadd.f32 0.0, %v302
      %v304 = vpop.f32.mrb[0].mxu0
      %v305 = vpop.f32.mrb[0].mxu0
      %v306 = vadd.f32 0.0, %v305
      %v307 = vpop.f32.mrb[0].mxu0
      %308 = vmatprep.mubr.bf16.mxu0 0
      %309 = vmatmul.mubr.bf16.gmra.mrb[0].mxu0 %v213
      %v310 = vpop.f32.mrb[0].mxu0
      %v311 = vadd.f32 0.0, %v310
      %v312 = vpop.f32.mrb[0].mxu0
      %v313 = vpop.f32.mrb[0].mxu0
      %v314 = vadd.f32 0.0, %v313
      %v315 = vpop.f32.mrb[0].mxu0
      %316 = vmatprep.mubr.bf16.mxu0 0
      %317 = vmatmul.mubr.bf16.gmra.mrb[0].mxu0 %v214
      %v318 = vpop.f32.mrb[0].mxu0
      %v319 = vadd.f32 0.0, %v318
      %v320 = vpop.f32.mrb[0].mxu0
      %v321 = vpop.f32.mrb[0].mxu0
      %v322 = vadd.f32 0.0, %v321
      %v323 = vpop.f32.mrb[0].mxu0
      %324 = vmatprep.mubr.bf16.mxu0 0
      %325 = vmatmul.mubr.bf16.gmra.mrb[0].mxu0 %v215
      %v326 = vpop.f32.mrb[0].mxu0
      %v327 = vadd.f32 0.0, %v326
      %v328 = vpop.f32.mrb[0].mxu0
      %v329 = vpop.f32.mrb[0].mxu0
      %v330 = vadd.f32 0.0, %v329
      %v331 = vpop.f32.mrb[0].mxu0
      %332 = vdwg.mxu0
      %s333 = scalar_lea.vmem %s165, 32
      %v334 = vld [vmem:[%s333] sm:$0xf]
      %v335 = vld [vmem:[%s333 + $0x4] sm:$0xf]
      %v336 = vld [vmem:[%s333 + $0x8] sm:$0xf]
      %v337 = vld [vmem:[%s333 + $0xc] sm:$0xf]
      %v338 = vld [vmem:[%s333 + $0x10] sm:$0xf]
      %v339 = vld [vmem:[%s333 + $0x14] sm:$0xf]
      %v340 = vld [vmem:[%s333 + $0x18] sm:$0xf]
      %v341 = vld [vmem:[%s333 + $0x1c] sm:$0xf]
      %v350 = vunpack.c.l.b16 %v334
      %v351 = vunpack.c.l.b16 %v335
      %v352 = vunpack.c.l.b16 %v336
      %v353 = vunpack.c.l.b16 %v337
      %v354 = vunpack.c.l.b16 %v338
      %v355 = vunpack.c.l.b16 %v339
      %v356 = vunpack.c.l.b16 %v340
      %v357 = vunpack.c.l.b16 %v341
      %v358 = vpack.c.b16 %v351, %v350
      %v359 = vpack.c.b16 %v353, %v352
      %v360 = vpack.c.b16 %v355, %v354
      %v361 = vpack.c.b16 %v357, %v356
      %366 = vmatprep.subr.bf16.mxu0 0
      %367 = vmatpush1.bf16.msra.mxu0 %v252
      %368 = vmatprep.subr.bf16.mxu0 0
      %369 = vmatpush1.bf16.msra.mxu0 %v253
      %370 = vmatprep.subr.bf16.mxu0 0
      %371 = vmatpush1.bf16.msra.mxu0 %v254
      %372 = vmatprep.subr.bf16.mxu0 0
      %373 = vmatpush1.bf16.msra.mxu0 %v255
      %374 = vmatprep.subr.bf16.mxu0 0
      %375 = vmatpush1.bf16.msra.mxu0 %v256
      %376 = vmatprep.subr.bf16.mxu0 0
      %377 = vmatpush1.bf16.msra.mxu0 %v257
      %378 = vmatprep.subr.bf16.mxu0 0
      %379 = vmatpush1.bf16.msra.mxu0 %v258
      %380 = vmatprep.subr.bf16.mxu0 0
      %381 = vmatpush1.bf16.msra.mxu0 %v259
      %382 = vmatprep.subr.bf16.mxu0 0
      %383 = vmatpush1.bf16.msra.mxu0 0
      %384 = vmatprep.subr.bf16.mxu0 0
      %385 = vmatpush1.bf16.msra.mxu0 0
      %386 = vmatprep.subr.bf16.mxu0 0
      %387 = vmatpush1.bf16.msra.mxu0 0
      %388 = vmatprep.subr.bf16.mxu0 0
      %389 = vmatpush1.bf16.msra.mxu0 0
      %390 = vmatprep.subr.bf16.mxu0 0
      %391 = vmatpush1.bf16.msra.mxu0 0
      %392 = vmatprep.subr.bf16.mxu0 0
      %393 = vmatpush1.bf16.msra.mxu0 0
      %394 = vmatprep.subr.bf16.mxu0 0
      %395 = vmatpush1.bf16.msra.mxu0 0
      %396 = vmatprep.subr.bf16.mxu0 0
      %397 = vmatpush1.bf16.msra.mxu0 0
      %398 = vmatprep.mubr.bf16.mxu0 0
      %399 = vmatmul.mubr.bf16.gmra.mrb[0].mxu0 %v358
      %v400 = vpop.f32.mrb[0].mxu0
      %v401 = vadd.f32 0.0, %v400
      %v402 = vpop.f32.mrb[0].mxu0
      %v403 = vpop.f32.mrb[0].mxu0
      %v404 = vadd.f32 0.0, %v403
      %v405 = vpop.f32.mrb[0].mxu0
      %406 = vmatprep.mubr.bf16.mxu0 0
      %407 = vmatmul.mubr.bf16.gmra.mrb[0].mxu0 %v359
      %v408 = vpop.f32.mrb[0].mxu0
      %v409 = vadd.f32 0.0, %v408
      %v410 = vpop.f32.mrb[0].mxu0
      %v411 = vpop.f32.mrb[0].mxu0
      %v412 = vadd.f32 0.0, %v411
      %v413 = vpop.f32.mrb[0].mxu0
      %414 = vmatprep.mubr.bf16.mxu0 0
      %415 = vmatmul.mubr.bf16.gmra.mrb[0].mxu0 %v360
      %v416 = vpop.f32.mrb[0].mxu0
      %v417 = vadd.f32 0.0, %v416
      %v418 = vpop.f32.mrb[0].mxu0
      %v419 = vpop.f32.mrb[0].mxu0
      %v420 = vadd.f32 0.0, %v419
      %v421 = vpop.f32.mrb[0].mxu0
      %422 = vmatprep.mubr.bf16.mxu0 0
      %423 = vmatmul.mubr.bf16.gmra.mrb[0].mxu0 %v361
      %v424 = vpop.f32.mrb[0].mxu0
      %v425 = vadd.f32 0.0, %v424
      %v426 = vpop.f32.mrb[0].mxu0
      %v427 = vpop.f32.mrb[0].mxu0
      %v428 = vadd.f32 0.0, %v427
      %v429 = vpop.f32.mrb[0].mxu0
      %430 = vdwg.mxu0
      %v431 = vmax.f32 %v303, %v401
      %v432 = vmax.f32 %v306, %v404
      %v433 = vmax.f32 %v311, %v409
      %v434 = vmax.f32 %v314, %v412
      %v435 = vmax.f32 %v319, %v417
      %v436 = vmax.f32 %v322, %v420
      %v437 = vmax.f32 %v327, %v425
      %v438 = vmax.f32 %v330, %v428
      %s439 = scalar_lea.vmem %s165, 64
      %v440 = vld [vmem:[%s439] sm:$0xf]
      %v441 = vld [vmem:[%s439 + $0x4] sm:$0xf]
      %v442 = vld [vmem:[%s439 + $0x8] sm:$0xf]
      %v443 = vld [vmem:[%s439 + $0xc] sm:$0xf]
      %v444 = vld [vmem:[%s439 + $0x10] sm:$0xf]
      %v445 = vld [vmem:[%s439 + $0x14] sm:$0xf]
      %v446 = vld [vmem:[%s439 + $0x18] sm:$0xf]
      %v447 = vld [vmem:[%s439 + $0x1c] sm:$0xf]
      %v456 = vunpack.c.l.b16 %v440
      %v457 = vunpack.c.l.b16 %v441
      %v458 = vunpack.c.l.b16 %v442
      %v459 = vunpack.c.l.b16 %v443
      %v460 = vunpack.c.l.b16 %v444
      %v461 = vunpack.c.l.b16 %v445
      %v462 = vunpack.c.l.b16 %v446
      %v463 = vunpack.c.l.b16 %v447
      %v464 = vpack.c.b16 %v457, %v456
      %v465 = vpack.c.b16 %v459, %v458
      %v466 = vpack.c.b16 %v461, %v460
      %v467 = vpack.c.b16 %v463, %v462
      %472 = vmatprep.subr.bf16.mxu0 0
      %473 = vmatpush1.bf16.msra.mxu0 %v252
      %474 = vmatprep.subr.bf16.mxu0 0
      %475 = vmatpush1.bf16.msra.mxu0 %v253
      %476 = vmatprep.subr.bf16.mxu0 0
      %477 = vmatpush1.bf16.msra.mxu0 %v254
      %478 = vmatprep.subr.bf16.mxu0 0
      %479 = vmatpush1.bf16.msra.mxu0 %v255
      %480 = vmatprep.subr.bf16.mxu0 0
      %481 = vmatpush1.bf16.msra.mxu0 %v256
      %482 = vmatprep.subr.bf16.mxu0 0
      %483 = vmatpush1.bf16.msra.mxu0 %v257
      %484 = vmatprep.subr.bf16.mxu0 0
      %485 = vmatpush1.bf16.msra.mxu0 %v258
      %486 = vmatprep.subr.bf16.mxu0 0
      %487 = vmatpush1.bf16.msra.mxu0 %v259
      %488 = vmatprep.subr.bf16.mxu0 0
      %489 = vmatpush1.bf16.msra.mxu0 0
      %490 = vmatprep.subr.bf16.mxu0 0
      %491 = vmatpush1.bf16.msra.mxu0 0
      %492 = vmatprep.subr.bf16.mxu0 0
      %493 = vmatpush1.bf16.msra.mxu0 0
      %494 = vmatprep.subr.bf16.mxu0 0
      %495 = vmatpush1.bf16.msra.mxu0 0
      %496 = vmatprep.subr.bf16.mxu0 0
      %497 = vmatpush1.bf16.msra.mxu0 0
      %498 = vmatprep.subr.bf16.mxu0 0
      %499 = vmatpush1.bf16.msra.mxu0 0
      %500 = vmatprep.subr.bf16.mxu0 0
      %501 = vmatpush1.bf16.msra.mxu0 0
      %502 = vmatprep.subr.bf16.mxu0 0
      %503 = vmatpush1.bf16.msra.mxu0 0
      %504 = vmatprep.mubr.bf16.mxu0 0
      %505 = vmatmul.mubr.bf16.gmra.mrb[0].mxu0 %v464
      %v506 = vpop.f32.mrb[0].mxu0
      %v507 = vadd.f32 0.0, %v506
      %v508 = vpop.f32.mrb[0].mxu0
      %v509 = vpop.f32.mrb[0].mxu0
      %v510 = vadd.f32 0.0, %v509
      %v511 = vpop.f32.mrb[0].mxu0
      %512 = vmatprep.mubr.bf16.mxu0 0
      %513 = vmatmul.mubr.bf16.gmra.mrb[0].mxu0 %v465
      %v514 = vpop.f32.mrb[0].mxu0
      %v515 = vadd.f32 0.0, %v514
      %v516 = vpop.f32.mrb[0].mxu0
      %v517 = vpop.f32.mrb[0].mxu0
      %v518 = vadd.f32 0.0, %v517
      %v519 = vpop.f32.mrb[0].mxu0
      %520 = vmatprep.mubr.bf16.mxu0 0
      %521 = vmatmul.mubr.bf16.gmra.mrb[0].mxu0 %v466
      %v522 = vpop.f32.mrb[0].mxu0
      %v523 = vadd.f32 0.0, %v522
      %v524 = vpop.f32.mrb[0].mxu0
      %v525 = vpop.f32.mrb[0].mxu0
      %v526 = vadd.f32 0.0, %v525
      %v527 = vpop.f32.mrb[0].mxu0
      %528 = vmatprep.mubr.bf16.mxu0 0
      %529 = vmatmul.mubr.bf16.gmra.mrb[0].mxu0 %v467
      %v530 = vpop.f32.mrb[0].mxu0
      %v531 = vadd.f32 0.0, %v530
      %v532 = vpop.f32.mrb[0].mxu0
      %v533 = vpop.f32.mrb[0].mxu0
      %v534 = vadd.f32 0.0, %v533
      %v535 = vpop.f32.mrb[0].mxu0
      %536 = vdwg.mxu0
      %v537 = vmax.f32 %v431, %v507
      %v538 = vmax.f32 %v432, %v510
      %v539 = vmax.f32 %v433, %v515
      %v540 = vmax.f32 %v434, %v518
      %v541 = vmax.f32 %v435, %v523
      %v542 = vmax.f32 %v436, %v526
      %v543 = vmax.f32 %v437, %v531
      %v544 = vmax.f32 %v438, %v534
      %s545 = scalar_lea.vmem %s165, 96
      %v546 = vld [vmem:[%s545] sm:$0xf]
      %v547 = vld [vmem:[%s545 + $0x4] sm:$0xf]
      %v548 = vld [vmem:[%s545 + $0x8] sm:$0xf]
      %v549 = vld [vmem:[%s545 + $0xc] sm:$0xf]
      %v550 = vld [vmem:[%s545 + $0x10] sm:$0xf]
      %v551 = vld [vmem:[%s545 + $0x14] sm:$0xf]
      %v552 = vld [vmem:[%s545 + $0x18] sm:$0xf]
      %v553 = vld [vmem:[%s545 + $0x1c] sm:$0xf]
      %v562 = vunpack.c.l.b16 %v546
      %v563 = vunpack.c.l.b16 %v547
      %v564 = vunpack.c.l.b16 %v548
      %v565 = vunpack.c.l.b16 %v549
      %v566 = vunpack.c.l.b16 %v550
      %v567 = vunpack.c.l.b16 %v551
      %v568 = vunpack.c.l.b16 %v552
      %v569 = vunpack.c.l.b16 %v553
      %v570 = vpack.c.b16 %v563, %v562
      %v571 = vpack.c.b16 %v565, %v564
      %v572 = vpack.c.b16 %v567, %v566
      %v573 = vpack.c.b16 %v569, %v568
      %578 = vmatprep.subr.bf16.mxu0 0
      %579 = vmatpush1.bf16.msra.mxu0 %v252
      %580 = vmatprep.subr.bf16.mxu0 0
      %581 = vmatpush1.bf16.msra.mxu0 %v253
      %582 = vmatprep.subr.bf16.mxu0 0
      %583 = vmatpush1.bf16.msra.mxu0 %v254
      %584 = vmatprep.subr.bf16.mxu0 0
      %585 = vmatpush1.bf16.msra.mxu0 %v255
      %586 = vmatprep.subr.bf16.mxu0 0
      %587 = vmatpush1.bf16.msra.mxu0 %v256
      %588 = vmatprep.subr.bf16.mxu0 0
      %589 = vmatpush1.bf16.msra.mxu0 %v257
      %590 = vmatprep.subr.bf16.mxu0 0
      %591 = vmatpush1.bf16.msra.mxu0 %v258
      %592 = vmatprep.subr.bf16.mxu0 0
      %593 = vmatpush1.bf16.msra.mxu0 %v259
      %594 = vmatprep.subr.bf16.mxu0 0
      %595 = vmatpush1.bf16.msra.mxu0 0
      %596 = vmatprep.subr.bf16.mxu0 0
      %597 = vmatpush1.bf16.msra.mxu0 0
      %598 = vmatprep.subr.bf16.mxu0 0
      %599 = vmatpush1.bf16.msra.mxu0 0
      %600 = vmatprep.subr.bf16.mxu0 0
      %601 = vmatpush1.bf16.msra.mxu0 0
      %602 = vmatprep.subr.bf16.mxu0 0
      %603 = vmatpush1.bf16.msra.mxu0 0
      %604 = vmatprep.subr.bf16.mxu0 0
      %605 = vmatpush1.bf16.msra.mxu0 0
      %606 = vmatprep.subr.bf16.mxu0 0
      %607 = vmatpush1.bf16.msra.mxu0 0
      %608 = vmatprep.subr.bf16.mxu0 0
      %609 = vmatpush1.bf16.msra.mxu0 0
      %610 = vmatprep.mubr.bf16.mxu0 0
      %611 = vmatmul.mubr.bf16.gmra.mrb[0].mxu0 %v570
      %v612 = vpop.f32.mrb[0].mxu0
      %v613 = vadd.f32 0.0, %v612
      %v614 = vpop.f32.mrb[0].mxu0
      %v615 = vpop.f32.mrb[0].mxu0
      %v616 = vadd.f32 0.0, %v615
      %v617 = vpop.f32.mrb[0].mxu0
      %618 = vmatprep.mubr.bf16.mxu0 0
      %619 = vmatmul.mubr.bf16.gmra.mrb[0].mxu0 %v571
      %v620 = vpop.f32.mrb[0].mxu0
      %v621 = vadd.f32 0.0, %v620
      %v622 = vpop.f32.mrb[0].mxu0
      %v623 = vpop.f32.mrb[0].mxu0
      %v624 = vadd.f32 0.0, %v623
      %v625 = vpop.f32.mrb[0].mxu0
      %626 = vmatprep.mubr.bf16.mxu0 0
      %627 = vmatmul.mubr.bf16.gmra.mrb[0].mxu0 %v572
      %v628 = vpop.f32.mrb[0].mxu0
      %v629 = vadd.f32 0.0, %v628
      %v630 = vpop.f32.mrb[0].mxu0
      %v631 = vpop.f32.mrb[0].mxu0
      %v632 = vadd.f32 0.0, %v631
      %v633 = vpop.f32.mrb[0].mxu0
      %634 = vmatprep.mubr.bf16.mxu0 0
      %635 = vmatmul.mubr.bf16.gmra.mrb[0].mxu0 %v573
      %v636 = vpop.f32.mrb[0].mxu0
      %v637 = vadd.f32 0.0, %v636
      %v638 = vpop.f32.mrb[0].mxu0
      %v639 = vpop.f32.mrb[0].mxu0
      %v640 = vadd.f32 0.0, %v639
      %v641 = vpop.f32.mrb[0].mxu0
      %642 = vdwg.mxu0
      %v643 = vmax.f32 %v537, %v613
      %v644 = vmax.f32 %v538, %v616
      %v645 = vmax.f32 %v539, %v621
      %v646 = vmax.f32 %v540, %v624
      %v647 = vmax.f32 %v541, %v629
      %v648 = vmax.f32 %v542, %v632
      %v649 = vmax.f32 %v543, %v637
      %v650 = vmax.f32 %v544, %v640
      %v651 = vld [vmem:[%s2] sm:$0x1]
      %v653 = vlaneseq
      %v654 = vshrl.u32 %v653, 7
      %v655 = vsub.s32 0, %v654
      %v656 = vrot.slane %v651, %v655
      %v658 = vadd.f32 %v643, %v656
      %v659 = vadd.f32 %v644, %v656
      %v660 = vadd.f32 %v645, %v656
      %v661 = vadd.f32 %v646, %v656
      %v662 = vadd.f32 %v647, %v656
      %v663 = vadd.f32 %v648, %v656
      %v664 = vadd.f32 %v649, %v656
      %v665 = vadd.f32 %v650, %v656
      %v666 = vmax.f32 %v658, 0.0
      %v667 = vmax.f32 %v659, 0.0
      %v668 = vmax.f32 %v660, 0.0
      %v669 = vmax.f32 %v661, 0.0
      %v670 = vmax.f32 %v662, 0.0
      %v671 = vmax.f32 %v663, 0.0
      %v672 = vmax.f32 %v664, 0.0
      %v673 = vmax.f32 %v665, 0.0
      %674 = vst [vmem:[%s170] sm:$0xff] %v666
      %675 = vst [vmem:[%s170 + $0x8] sm:$0xff] %v667
      %676 = vst [vmem:[%s170 + $0x10] sm:$0xff] %v668
      %677 = vst [vmem:[%s170 + $0x18] sm:$0xff] %v669
      %678 = vst [vmem:[%s170 + $0x20] sm:$0xff] %v670
      %679 = vst [vmem:[%s170 + $0x28] sm:$0xff] %v671
      %680 = vst [vmem:[%s170 + $0x30] sm:$0xff] %v672
      %681 = vst [vmem:[%s170 + $0x38] sm:$0xff] %v673
      %p682 = scmp.lt.s32.totalorder %s14, 1
      %s683 = scalar_select %p682, %s14, 1
      %s684 = smul.addr %s683, 8
      %s685 = smul.addr %s684, 8
      %s686 = scalar_lea.vmem %s3, %s685
      // Predicated region
      $region33: #{net_forward.5} parent=31 // pred_check
        %p687 = pneg %p100
      $region34: #{net_forward.5} parent=31 // pred_check_branch
        %689 = sbr.rel (%p687) target = $region36
      $region35: #{net_forward.5} parent=31 // pred_region
        _
      $region36: #{net_forward.5} parent=31 // pred_fallthru
        _
    $region32: #{net_forward.5} parent=5 // pred_fallthru
      _
    %p690 = scmp.le.s32.totalorder 2, %s9
    // Predicated region
    $region37: #{net_forward.5} parent=5 // pred_check
      %p691 = pneg %p690
    $region38: #{net_forward.5} parent=5 // pred_check_branch
      %693 = sbr.rel (%p691) target = $region40
    $region39: #{net_forward.5} parent=5 // pred_region
      %s694 = ssub.s32 %s9, 2
      // Predicated region
      $region41: #{net_forward.5} parent=39 // pred_check
        %p695 = pneg %p106
      $region42: #{net_forward.5} parent=39 // pred_check_branch
        %697 = sbr.rel (%p695) target = $region44
      $region43: #{net_forward.5} parent=39 // pred_region
        %p698 = scmp.lt.s32.totalorder %s15, 1
        %s699 = scalar_select %p698, %s15, 1
        %s700 = smul.addr %s699, 8
        %s701 = smul.addr %s700, 8
        %s702 = scalar_lea.vmem %s3, %s701
      $region44: #{net_forward.5} parent=39 // pred_fallthru
        _
    $region40: #{net_forward.5} parent=5 // pred_fallthru
      _
  $region6: #{net_forward.5} parent=0 // loop_footer
    %s13 = sadd.s32 1, %s9
  $region7: #{net_forward.5} parent=0 // loop_footer_branch
    %8 = sbr.rel target = $region3
  $region8: #{net_forward.5} parent=0 // loop_exit
    _

// kernel: net_forward.6
$region0: #{net_forward.6}
  #allocation0 [shape = 'u32[]', space=smem, size = 0x4, offset = 0x4, fixed_abs, tag = 'smem constant byte address 0x4 - core index']
  #allocation1 [shape = 'u32[144,128]{1,0:T(1,128)}', space=vmem, size = 0x12000, scoped, tag = 'internal scratch']
  %s0 = inlined_call_operand.vmem [shape: bf16[2,4,9,256], index: 0, kind: input, shape index: {}]
  %s1 = inlined_call_operand.vmem [shape: bf16[256,128], index: 1, kind: input, shape index: {}]
  %s2 = inlined_call_operand.vmem [shape: f32[1,128], index: 2, kind: input, shape index: {}]
  %s3 = inlined_call_operand.vmem [shape: f32[2,9,128], index: 3, kind: output, shape index: {}]
  %s4 = sld [smem:[#allocation0]]
  $region45: #{net_forward.6} parent=0
    _
  %s6 = ssub.s32 1, %s4
  %s7 = scalar_select 0, %s6, %s4
  loop: start=0, step=1, limit=4
  $region2: #{net_forward.6} parent=0 // loop_pre_header
    _
  $region3: #{net_forward.6} parent=0 // loop_header
    %s9 = sphi 0, %s13
    %p10 = scmp.ge.s32.totalorder %s9, 4
    %s19 = sphi 0, %s21
    %s22 = sphi 0, %s19
    %s23 = sphi 0, %s22
    %s39 = sphi 0, %s23
    %s43 = sphi 0, %s43
    %s45 = sphi 0, %s43
    %s46 = sphi 0, %s45
    %s60 = sphi 0, %s46
    %s64 = sphi 0, %s64
    %s66 = sphi 0, %s64
    %s67 = sphi 0, %s66
    %s81 = sphi 0, %s67
    %s87 = sphi 0, %s89
    %s90 = sphi 0, %s87
    %s91 = sphi 0, %s90
    %s107 = sphi 0, %s91
  $region4: #{net_forward.6} parent=0 // loop_header_branch
    %12 = sbr.rel (%p10) target = $region8
  $region5: #{net_forward.6} parent=0 // loop_body
    %s14 = ssub.s32 %s9, 1
    %s15 = ssub.s32 %s9, 2
    %s16 = sadd.s32 %s9, 1
    %s17 = ssub.s32 %s9, %s16
    %p18 = scmp.eq.s32.totalorder %s17, 0
    %s20 = sadd.s32 %s19, 1
    %s21 = scalar_select %p18, %s19, %s20
    %p24 = pneg %p18
    %p25 = scmp.eq.s32.totalorder %s9, 1
    %p26 = por %p24, %p25
    %p27 = scmp.ne.s32.totalorder %s19, %s22
    %p28 = scmp.eq.s32.totalorder %s9, 0
    %p29 = por %p27, %p28
    %p30 = scmp.ne.s32.totalorder %s19, %s22
    %p31 = scmp.eq.s32.totalorder %s14, 1
    %p32 = por %p30, %p31
    %p33 = scmp.ne.s32.totalorder %s22, %s23
    %p34 = scmp.eq.s32.totalorder %s14, 0
    %p35 = por %p33, %p34
    %p36 = scmp.ne.s32.totalorder %s22, %s23
    %p37 = scmp.eq.s32.totalorder %s15, 1
    %p38 = por %p36, %p37
    %p40 = scmp.ne.s32.totalorder %s23, %s39
    %p41 = scmp.eq.s32.totalorder %s15, 0
    %p42 = por %p40, %p41
    %s44 = sadd.s32 %s43, 1
    %p47 = scmp.eq.s32.totalorder %s9, 1
    %p48 = scmp.ne.s32.totalorder %s43, %s45
    %p49 = scmp.eq.s32.totalorder %s9, 0
    %p50 = por %p48, %p49
    %p51 = scmp.ne.s32.totalorder %s43, %s45
    %p52 = scmp.eq.s32.totalorder %s14, 1
    %p53 = por %p51, %p52
    %p54 = scmp.ne.s32.totalorder %s45, %s46
    %p55 = scmp.eq.s32.totalorder %s14, 0
    %p56 = por %p54, %p55
    %p57 = scmp.ne.s32.totalorder %s45, %s46
    %p58 = scmp.eq.s32.totalorder %s15, 1
    %p59 = por %p57, %p58
    %p61 = scmp.ne.s32.totalorder %s46, %s60
    %p62 = scmp.eq.s32.totalorder %s15, 0
    %p63 = por %p61, %p62
    %s65 = sadd.s32 %s64, 1
    %p68 = scmp.eq.s32.totalorder %s9, 1
    %p69 = scmp.ne.s32.totalorder %s64, %s66
    %p70 = scmp.eq.s32.totalorder %s9, 0
    %p71 = por %p69, %p70
    %p72 = scmp.ne.s32.totalorder %s64, %s66
    %p73 = scmp.eq.s32.totalorder %s14, 1
    %p74 = por %p72, %p73
    %p75 = scmp.ne.s32.totalorder %s66, %s67
    %p76 = scmp.eq.s32.totalorder %s14, 0
    %p77 = por %p75, %p76
    %p78 = scmp.ne.s32.totalorder %s66, %s67
    %p79 = scmp.eq.s32.totalorder %s15, 1
    %p80 = por %p78, %p79
    %p82 = scmp.ne.s32.totalorder %s67, %s81
    %p83 = scmp.eq.s32.totalorder %s15, 0
    %p84 = por %p82, %p83
    %s85 = ssub.s32 %s9, %s16
    %p86 = scmp.eq.s32.totalorder %s85, 0
    %s88 = sadd.s32 %s87, 1
    %s89 = scalar_select %p86, %s87, %s88
    %p92 = pneg %p86
    %p93 = scmp.eq.s32.totalorder %s9, 1
    %p94 = por %p92, %p93
    %p95 = scmp.ne.s32.totalorder %s87, %s90
    %p96 = scmp.eq.s32.totalorder %s9, 0
    %p97 = por %p95, %p96
    %p98 = scmp.ne.s32.totalorder %s87, %s90
    %p99 = scmp.eq.s32.totalorder %s14, 1
    %p100 = por %p98, %p99
    %p101 = scmp.ne.s32.totalorder %s90, %s91
    %p102 = scmp.eq.s32.totalorder %s14, 0
    %p103 = por %p101, %p102
    %p104 = scmp.ne.s32.totalorder %s90, %s91
    %p105 = scmp.eq.s32.totalorder %s15, 1
    %p106 = por %p104, %p105
    %p108 = scmp.ne.s32.totalorder %s91, %s107
    %p109 = scmp.eq.s32.totalorder %s15, 0
    %p110 = por %p108, %p109
    %p111 = scmp.le.s32.totalorder 1, %s9
    %p112 = scmp.lt.s32.totalorder %s9, 3
    %p113 = pnand %p111, %p112
    %p114 = pneg %p113
    // Predicated region
    $region9: #{net_forward.6} parent=5 // pred_check
      _
    $region10: #{net_forward.6} parent=5 // pred_check_branch
      %116 = sbr.rel (%p113) target = $region12
    $region11: #{net_forward.6} parent=5 // pred_region
      %s117 = ssub.s32 %s9, 1
      // Predicated region
      $region13: #{net_forward.6} parent=11 // pred_check
        %p118 = pneg %p56
      $region14: #{net_forward.6} parent=11 // pred_check_branch
        %120 = sbr.rel (%p118) target = $region16
      $region15: #{net_forward.6} parent=11 // pred_region
        _
      $region16: #{net_forward.6} parent=11 // pred_fallthru
        _
      // Predicated region
      $region17: #{net_forward.6} parent=11 // pred_check
        %p121 = pneg %p77
      $region18: #{net_forward.6} parent=11 // pred_check_branch
        %123 = sbr.rel (%p121) target = $region20
      $region19: #{net_forward.6} parent=11 // pred_region
        _
      $region20: #{net_forward.6} parent=11 // pred_fallthru
        _
    $region12: #{net_forward.6} parent=5 // pred_fallthru
      _
    %p124 = scmp.lt.s32.totalorder %s9, 2
    // Predicated region
    $region21: #{net_forward.6} parent=5 // pred_check
      %p125 = pneg %p124
    $region22: #{net_forward.6} parent=5 // pred_check_branch
      %127 = sbr.rel (%p125) target = $region24
    $region23: #{net_forward.6} parent=5 // pred_region
      // Predicated region
      $region25: #{net_forward.6} parent=23 // pred_check
        %p128 = pneg %p29
      $region26: #{net_forward.6} parent=23 // pred_check_branch
        %130 = sbr.rel (%p128) target = $region28
      $region27: #{net_forward.6} parent=23 // pred_region
        %p131 = scmp.lt.s32.totalorder %s9, 1
        %s132 = scalar_select %p131, %s9, 1
        %s133 = smul.addr %s132, 16
        %s134 = smul.addr %s133, 4
        %s135 = scalar_lea.vmem %s0, %s134
      $region28: #{net_forward.6} parent=23 // pred_fallthru
        _
    $region24: #{net_forward.6} parent=5 // pred_fallthru
      _
    %p136 = scmp.le.s32.totalorder 1, %s9
    %p137 = scmp.lt.s32.totalorder %s9, 3
    %p138 = pnand %p136, %p137
    %p139 = pneg %p138
    // Predicated region
    $region29: #{net_forward.6} parent=5 // pred_check
      _
    $region30: #{net_forward.6} parent=5 // pred_check_branch
      %141 = sbr.rel (%p138) target = $region32
    $region31: #{net_forward.6} parent=5 // pred_region
      %s142 = ssub.s32 %s9, 1
      %p143 = scmp.lt.s32.totalorder %s14, 1
      %s144 = scalar_select %p143, %s14, 1
      %s145 = smul.addr %s144, 16
      %s146 = smul.addr %s145, 4
      %s147 = scalar_lea.vmem %s0, %s146
      %p148 = pneg %p35
      %p149 = pneg %p32
      %p150 = pneg %p56
      %p151 = pneg %p53
      %p152 = pneg %p77
      %p153 = pneg %p74
      %p154 = pneg %p103
      %p155 = pneg %p100
      %p156 = scmp.lt.s32.totalorder %s14, 1
      %s157 = scalar_select %p156, %s14, 1
      %s158 = smul.addr %s157, 2
      %s159 = smul.addr %s158, 8
      %s160 = scalar_lea.vmem %s3, %s159
      %p161 = scmp.lt.s32.totalorder %s14, 1
      %s162 = scalar_select %p161, %s14, 1
      %s163 = smul.addr %s162, 16
      %s164 = smul.addr %s163, 4
      %s165 = scalar_lea.vmem %s0, %s164
      %p166 = scmp.lt.s32.totalorder %s14, 1
      %s167 = scalar_select %p166, %s14, 1
      %s168 = smul.addr %s167, 2
      %s169 = smul.addr %s168, 8
      %s170 = scalar_lea.vmem %s3, %s169
      %v172 = vld [vmem:[%s1] sm:$0xf]
      %v173 = vld [vmem:[%s1 + $0x4] sm:$0xf]
      %v174 = vld [vmem:[%s1 + $0x8] sm:$0xf]
      %v175 = vld [vmem:[%s1 + $0xc] sm:$0xf]
      %v176 = vld [vmem:[%s1 + $0x10] sm:$0xf]
      %v177 = vld [vmem:[%s1 + $0x14] sm:$0xf]
      %v178 = vld [vmem:[%s1 + $0x18] sm:$0xf]
      %v179 = vld [vmem:[%s1 + $0x1c] sm:$0xf]
      %v180 = vld [vmem:[%s1 + $0x20] sm:$0xf]
      %v181 = vld [vmem:[%s1 + $0x24] sm:$0xf]
      %v182 = vld [vmem:[%s1 + $0x28] sm:$0xf]
      %v183 = vld [vmem:[%s1 + $0x2c] sm:$0xf]
      %v184 = vld [vmem:[%s1 + $0x30] sm:$0xf]
      %v185 = vld [vmem:[%s1 + $0x34] sm:$0xf]
      %v186 = vld [vmem:[%s1 + $0x38] sm:$0xf]
      %v187 = vld [vmem:[%s1 + $0x3c] sm:$0xf]
      %v188 = vld [vmem:[%s1 + $0x40] sm:$0xf]
      %v189 = vld [vmem:[%s1 + $0x44] sm:$0xf]
      %v190 = vld [vmem:[%s1 + $0x48] sm:$0xf]
      %v191 = vld [vmem:[%s1 + $0x4c] sm:$0xf]
      %v192 = vld [vmem:[%s1 + $0x50] sm:$0xf]
      %v193 = vld [vmem:[%s1 + $0x54] sm:$0xf]
      %v194 = vld [vmem:[%s1 + $0x58] sm:$0xf]
      %v195 = vld [vmem:[%s1 + $0x5c] sm:$0xf]
      %v196 = vld [vmem:[%s1 + $0x60] sm:$0xf]
      %v197 = vld [vmem:[%s1 + $0x64] sm:$0xf]
      %v198 = vld [vmem:[%s1 + $0x68] sm:$0xf]
      %v199 = vld [vmem:[%s1 + $0x6c] sm:$0xf]
      %v200 = vld [vmem:[%s1 + $0x70] sm:$0xf]
      %v201 = vld [vmem:[%s1 + $0x74] sm:$0xf]
      %v202 = vld [vmem:[%s1 + $0x78] sm:$0xf]
      %v203 = vld [vmem:[%s1 + $0x7c] sm:$0xf]
      %v204 = vld [vmem:[%s165] sm:$0xff]
      %v205 = vld [vmem:[%s165 + $0x8] sm:$0x11]
      %v208 = vunpack.c.l.b16 %v204
      %v209 = vunpack.c.h.b16 %v204
      %v210 = vunpack.c.l.b16 %v205
      %v211 = vunpack.c.h.b16 %v205
      %v212 = vpack.c.b16 %v210, %v208
      %v213 = vpack.c.b16 %v211, %v209
      %v248 = vunpack.c.l.b16 %v172
      %v249 = vunpack.c.l.b16 %v173
      %v250 = vunpack.c.l.b16 %v174
      %v251 = vunpack.c.l.b16 %v175
      %v252 = vunpack.c.l.b16 %v176
      %v253 = vunpack.c.l.b16 %v177
      %v254 = vunpack.c.l.b16 %v178
      %v255 = vunpack.c.l.b16 %v179
      %v256 = vunpack.c.l.b16 %v180
      %v257 = vunpack.c.l.b16 %v181
      %v258 = vunpack.c.l.b16 %v182
      %v259 = vunpack.c.l.b16 %v183
      %v260 = vunpack.c.l.b16 %v184
      %v261 = vunpack.c.l.b16 %v185
      %v262 = vunpack.c.l.b16 %v186
      %v263 = vunpack.c.l.b16 %v187
      %v264 = vunpack.c.l.b16 %v188
      %v265 = vunpack.c.l.b16 %v189
      %v266 = vunpack.c.l.b16 %v190
      %v267 = vunpack.c.l.b16 %v191
      %v268 = vunpack.c.l.b16 %v192
      %v269 = vunpack.c.l.b16 %v193
      %v270 = vunpack.c.l.b16 %v194
      %v271 = vunpack.c.l.b16 %v195
      %v272 = vunpack.c.l.b16 %v196
      %v273 = vunpack.c.l.b16 %v197
      %v274 = vunpack.c.l.b16 %v198
      %v275 = vunpack.c.l.b16 %v199
      %v276 = vunpack.c.l.b16 %v200
      %v277 = vunpack.c.l.b16 %v201
      %v278 = vunpack.c.l.b16 %v202
      %v279 = vunpack.c.l.b16 %v203
      %v280 = vpack.c.b16 %v249, %v248
      %v281 = vpack.c.b16 %v251, %v250
      %v282 = vpack.c.b16 %v253, %v252
      %v283 = vpack.c.b16 %v255, %v254
      %v284 = vpack.c.b16 %v257, %v256
      %v285 = vpack.c.b16 %v259, %v258
      %v286 = vpack.c.b16 %v261, %v260
      %v287 = vpack.c.b16 %v263, %v262
      %v288 = vpack.c.b16 %v265, %v264
      %v289 = vpack.c.b16 %v267, %v266
      %v290 = vpack.c.b16 %v269, %v268
      %v291 = vpack.c.b16 %v271, %v270
      %v292 = vpack.c.b16 %v273, %v272
      %v293 = vpack.c.b16 %v275, %v274
      %v294 = vpack.c.b16 %v277, %v276
      %v295 = vpack.c.b16 %v279, %v278
      %312 = vmatprep.subr.bf16.mxu0 0
      %313 = vmatpush1.bf16.msra.mxu0 %v280
      %314 = vmatprep.subr.bf16.mxu0 0
      %315 = vmatpush1.bf16.msra.mxu0 %v281
      %316 = vmatprep.subr.bf16.mxu0 0
      %317 = vmatpush1.bf16.msra.mxu0 %v282
      %318 = vmatprep.subr.bf16.mxu0 0
      %319 = vmatpush1.bf16.msra.mxu0 %v283
      %320 = vmatprep.subr.bf16.mxu0 0
      %321 = vmatpush1.bf16.msra.mxu0 %v284
      %322 = vmatprep.subr.bf16.mxu0 0
      %323 = vmatpush1.bf16.msra.mxu0 %v285
      %324 = vmatprep.subr.bf16.mxu0 0
      %325 = vmatpush1.bf16.msra.mxu0 %v286
      %326 = vmatprep.subr.bf16.mxu0 0
      %327 = vmatpush1.bf16.msra.mxu0 %v287
      %328 = vmatprep.subr.bf16.mxu0 0
      %329 = vmatpush1.bf16.msra.mxu0 %v288
      %330 = vmatprep.subr.bf16.mxu0 0
      %331 = vmatpush1.bf16.msra.mxu0 %v289
      %332 = vmatprep.subr.bf16.mxu0 0
      %333 = vmatpush1.bf16.msra.mxu0 %v290
      %334 = vmatprep.subr.bf16.mxu0 0
      %335 = vmatpush1.bf16.msra.mxu0 %v291
      %336 = vmatprep.subr.bf16.mxu0 0
      %337 = vmatpush1.bf16.msra.mxu0 %v292
      %338 = vmatprep.subr.bf16.mxu0 0
      %339 = vmatpush1.bf16.msra.mxu0 %v293
      %340 = vmatprep.subr.bf16.mxu0 0
      %341 = vmatpush1.bf16.msra.mxu0 %v294
      %342 = vmatprep.subr.bf16.mxu0 0
      %343 = vmatpush1.bf16.msra.mxu0 %v295
      %344 = vmatprep.mubr.bf16.mxu0 %v213
      %345 = vmatmul.mubr.bf16.gmra.mrb[0].mxu0 %v212
      %v346 = vpop.f32.mrb[0].mxu0
      %v347 = vadd.f32 0.0, %v346
      %v348 = vpop.f32.mrb[0].mxu0
      %v349 = vpop.f32.mrb[0].mxu0
      %v350 = vadd.f32 0.0, %v349
      %v351 = vpop.f32.mrb[0].mxu0
      %352 = vdwg.mxu0
      %s353 = scalar_lea.vmem %s165, 16
      %v354 = vld [vmem:[%s353] sm:$0xff]
      %v355 = vld [vmem:[%s353 + $0x8] sm:$0x11]
      %v358 = vunpack.c.l.b16 %v354
      %v359 = vunpack.c.h.b16 %v354
      %v360 = vunpack.c.l.b16 %v355
      %v361 = vunpack.c.h.b16 %v355
      %v362 = vpack.c.b16 %v360, %v358
      %v363 = vpack.c.b16 %v361, %v359
      %366 = vmatprep.subr.bf16.mxu0 0
      %367 = vmatpush1.bf16.msra.mxu0 %v280
      %368 = vmatprep.subr.bf16.mxu0 0
      %369 = vmatpush1.bf16.msra.mxu0 %v281
      %370 = vmatprep.subr.bf16.mxu0 0
      %371 = vmatpush1.bf16.msra.mxu0 %v282
      %372 = vmatprep.subr.bf16.mxu0 0
      %373 = vmatpush1.bf16.msra.mxu0 %v283
      %374 = vmatprep.subr.bf16.mxu0 0
      %375 = vmatpush1.bf16.msra.mxu0 %v284
      %376 = vmatprep.subr.bf16.mxu0 0
      %377 = vmatpush1.bf16.msra.mxu0 %v285
      %378 = vmatprep.subr.bf16.mxu0 0
      %379 = vmatpush1.bf16.msra.mxu0 %v286
      %380 = vmatprep.subr.bf16.mxu0 0
      %381 = vmatpush1.bf16.msra.mxu0 %v287
      %382 = vmatprep.subr.bf16.mxu0 0
      %383 = vmatpush1.bf16.msra.mxu0 %v288
      %384 = vmatprep.subr.bf16.mxu0 0
      %385 = vmatpush1.bf16.msra.mxu0 %v289
      %386 = vmatprep.subr.bf16.mxu0 0
      %387 = vmatpush1.bf16.msra.mxu0 %v290
      %388 = vmatprep.subr.bf16.mxu0 0
      %389 = vmatpush1.bf16.msra.mxu0 %v291
      %390 = vmatprep.subr.bf16.mxu0 0
      %391 = vmatpush1.bf16.msra.mxu0 %v292
      %392 = vmatprep.subr.bf16.mxu0 0
      %393 = vmatpush1.bf16.msra.mxu0 %v293
      %394 = vmatprep.subr.bf16.mxu0 0
      %395 = vmatpush1.bf16.msra.mxu0 %v294
      %396 = vmatprep.subr.bf16.mxu0 0
      %397 = vmatpush1.bf16.msra.mxu0 %v295
      %398 = vmatprep.mubr.bf16.mxu0 %v363
      %399 = vmatmul.mubr.bf16.gmra.mrb[0].mxu0 %v362
      %v400 = vpop.f32.mrb[0].mxu0
      %v401 = vadd.f32 0.0, %v400
      %v402 = vpop.f32.mrb[0].mxu0
      %v403 = vpop.f32.mrb[0].mxu0
      %v404 = vadd.f32 0.0, %v403
      %v405 = vpop.f32.mrb[0].mxu0
      %406 = vdwg.mxu0
      %v407 = vmax.f32 %v347, %v401
      %v408 = vmax.f32 %v350, %v404
      %s409 = scalar_lea.vmem %s165, 32
      %v410 = vld [vmem:[%s409] sm:$0xff]
      %v411 = vld [vmem:[%s409 + $0x8] sm:$0x11]
      %v414 = vunpack.c.l.b16 %v410
      %v415 = vunpack.c.h.b16 %v410
      %v416 = vunpack.c.l.b16 %v411
      %v417 = vunpack.c.h.b16 %v411
      %v418 = vpack.c.b16 %v416, %v414
      %v419 = vpack.c.b16 %v417, %v415
      %422 = vmatprep.subr.bf16.mxu0 0
      %423 = vmatpush1.bf16.msra.mxu0 %v280
      %424 = vmatprep.subr.bf16.mxu0 0
      %425 = vmatpush1.bf16.msra.mxu0 %v281
      %426 = vmatprep.subr.bf16.mxu0 0
      %427 = vmatpush1.bf16.msra.mxu0 %v282
      %428 = vmatprep.subr.bf16.mxu0 0
      %429 = vmatpush1.bf16.msra.mxu0 %v283
      %430 = vmatprep.subr.bf16.mxu0 0
      %431 = vmatpush1.bf16.msra.mxu0 %v284
      %432 = vmatprep.subr.bf16.mxu0 0
      %433 = vmatpush1.bf16.msra.mxu0 %v285
      %434 = vmatprep.subr.bf16.mxu0 0
      %435 = vmatpush1.bf16.msra.mxu0 %v286
      %436 = vmatprep.subr.bf16.mxu0 0
      %437 = vmatpush1.bf16.msra.mxu0 %v287
      %438 = vmatprep.subr.bf16.mxu0 0
      %439 = vmatpush1.bf16.msra.mxu0 %v288
      %440 = vmatprep.subr.bf16.mxu0 0
      %441 = vmatpush1.bf16.msra.mxu0 %v289
      %442 = vmatprep.subr.bf16.mxu0 0
      %443 = vmatpush1.bf16.msra.mxu0 %v290
      %444 = vmatprep.subr.bf16.mxu0 0
      %445 = vmatpush1.bf16.msra.mxu0 %v291
      %446 = vmatprep.subr.bf16.mxu0 0
      %447 = vmatpush1.bf16.msra.mxu0 %v292
      %448 = vmatprep.subr.bf16.mxu0 0
      %449 = vmatpush1.bf16.msra.mxu0 %v293
      %450 = vmatprep.subr.bf16.mxu0 0
      %451 = vmatpush1.bf16.msra.mxu0 %v294
      %452 = vmatprep.subr.bf16.mxu0 0
      %453 = vmatpush1.bf16.msra.mxu0 %v295
      %454 = vmatprep.mubr.bf16.mxu0 %v419
      %455 = vmatmul.mubr.bf16.gmra.mrb[0].mxu0 %v418
      %v456 = vpop.f32.mrb[0].mxu0
      %v457 = vadd.f32 0.0, %v456
      %v458 = vpop.f32.mrb[0].mxu0
      %v459 = vpop.f32.mrb[0].mxu0
      %v460 = vadd.f32 0.0, %v459
      %v461 = vpop.f32.mrb[0].mxu0
      %462 = vdwg.mxu0
      %v463 = vmax.f32 %v407, %v457
      %v464 = vmax.f32 %v408, %v460
      %s465 = scalar_lea.vmem %s165, 48
      %v466 = vld [vmem:[%s465] sm:$0xff]
      %v467 = vld [vmem:[%s465 + $0x8] sm:$0x11]
      %v470 = vunpack.c.l.b16 %v466
      %v471 = vunpack.c.h.b16 %v466
      %v472 = vunpack.c.l.b16 %v467
      %v473 = vunpack.c.h.b16 %v467
      %v474 = vpack.c.b16 %v472, %v470
      %v475 = vpack.c.b16 %v473, %v471
      %478 = vmatprep.subr.bf16.mxu0 0
      %479 = vmatpush1.bf16.msra.mxu0 %v280
      %480 = vmatprep.subr.bf16.mxu0 0
      %481 = vmatpush1.bf16.msra.mxu0 %v281
      %482 = vmatprep.subr.bf16.mxu0 0
      %483 = vmatpush1.bf16.msra.mxu0 %v282
      %484 = vmatprep.subr.bf16.mxu0 0
      %485 = vmatpush1.bf16.msra.mxu0 %v283
      %486 = vmatprep.subr.bf16.mxu0 0
      %487 = vmatpush1.bf16.msra.mxu0 %v284
      %488 = vmatprep.subr.bf16.mxu0 0
      %489 = vmatpush1.bf16.msra.mxu0 %v285
      %490 = vmatprep.subr.bf16.mxu0 0
      %491 = vmatpush1.bf16.msra.mxu0 %v286
      %492 = vmatprep.subr.bf16.mxu0 0
      %493 = vmatpush1.bf16.msra.mxu0 %v287
      %494 = vmatprep.subr.bf16.mxu0 0
      %495 = vmatpush1.bf16.msra.mxu0 %v288
      %496 = vmatprep.subr.bf16.mxu0 0
      %497 = vmatpush1.bf16.msra.mxu0 %v289
      %498 = vmatprep.subr.bf16.mxu0 0
      %499 = vmatpush1.bf16.msra.mxu0 %v290
      %500 = vmatprep.subr.bf16.mxu0 0
      %501 = vmatpush1.bf16.msra.mxu0 %v291
      %502 = vmatprep.subr.bf16.mxu0 0
      %503 = vmatpush1.bf16.msra.mxu0 %v292
      %504 = vmatprep.subr.bf16.mxu0 0
      %505 = vmatpush1.bf16.msra.mxu0 %v293
      %506 = vmatprep.subr.bf16.mxu0 0
      %507 = vmatpush1.bf16.msra.mxu0 %v294
      %508 = vmatprep.subr.bf16.mxu0 0
      %509 = vmatpush1.bf16.msra.mxu0 %v295
      %510 = vmatprep.mubr.bf16.mxu0 %v475
      %511 = vmatmul.mubr.bf16.gmra.mrb[0].mxu0 %v474
      %v512 = vpop.f32.mrb[0].mxu0
      %v513 = vadd.f32 0.0, %v512
      %v514 = vpop.f32.mrb[0].mxu0
      %v515 = vpop.f32.mrb[0].mxu0
      %v516 = vadd.f32 0.0, %v515
      %v517 = vpop.f32.mrb[0].mxu0
      %518 = vdwg.mxu0
      %v519 = vmax.f32 %v463, %v513
      %v520 = vmax.f32 %v464, %v516
      %v521 = vld [vmem:[%s2] sm:$0x1]
      %v523 = vlaneseq
      %v524 = vshrl.u32 %v523, 7
      %v525 = vsub.s32 0, %v524
      %v526 = vrot.slane %v521, %v525
      %v528 = vadd.f32 %v519, %v526
      %v529 = vadd.f32 %v520, %v526
      %v530 = vmax.f32 %v528, 0.0
      %v531 = vmax.f32 %v529, 0.0
      %532 = vst [vmem:[%s170] sm:$0xff] %v530
      %533 = vst [vmem:[%s170 + $0x8] sm:$0x1] %v531
      %p534 = scmp.lt.s32.totalorder %s14, 1
      %s535 = scalar_select %p534, %s14, 1
      %s536 = smul.addr %s535, 2
      %s537 = smul.addr %s536, 8
      %s538 = scalar_lea.vmem %s3, %s537
      // Predicated region
      $region33: #{net_forward.6} parent=31 // pred_check
        %p539 = pneg %p100
      $region34: #{net_forward.6} parent=31 // pred_check_branch
        %541 = sbr.rel (%p539) target = $region36
      $region35: #{net_forward.6} parent=31 // pred_region
        _
      $region36: #{net_forward.6} parent=31 // pred_fallthru
        _
    $region32: #{net_forward.6} parent=5 // pred_fallthru
      _
    %p542 = scmp.le.s32.totalorder 2, %s9
    // Predicated region
    $region37: #{net_forward.6} parent=5 // pred_check
      %p543 = pneg %p542
    $region38: #{net_forward.6} parent=5 // pred_check_branch
      %545 = sbr.rel (%p543) target = $region40
    $region39: #{net_forward.6} parent=5 // pred_region
      %s546 = ssub.s32 %s9, 2
      // Predicated region
      $region41: #{net_forward.6} parent=39 // pred_check
        %p547 = pneg %p106
      $region42: #{net_forward.6} parent=39 // pred_check_branch
        %549 = sbr.rel (%p547) target = $region44
      $region43: #{net_forward.6} parent=39 // pred_region
        %p550 = scmp.lt.s32.totalorder %s15, 1
        %s551 = scalar_select %p550, %s15, 1
        %s552 = smul.addr %s551, 2
        %s553 = smul.addr %s552, 8
        %s554 = scalar_lea.vmem %s3, %s553
      $region44: #{net_forward.6} parent=39 // pred_fallthru
        _
    $region40: #{net_forward.6} parent=5 // pred_fallthru
      _
  $region6: #{net_forward.6} parent=0 // loop_footer
    %s13 = sadd.s32 1, %s9
  $region7: #{net_forward.6} parent=0 // loop_footer_branch
    %8 = sbr.rel target = $region3
  $region8: #{net_forward.6} parent=0 // loop_exit
    _

// kernel: net_forward.7
$region0: #{net_forward.7}
  #allocation0 [shape = 'u32[]', space=smem, size = 0x4, offset = 0x4, fixed_abs, tag = 'smem constant byte address 0x4 - core index']
  #allocation1 [shape = 'u32[144,128]{1,0:T(1,128)}', space=vmem, size = 0x12000, scoped, tag = 'internal scratch']
  %s0 = inlined_call_operand.vmem [shape: bf16[2,1152], index: 0, kind: input, shape index: {}]
  %s1 = inlined_call_operand.vmem [shape: bf16[1152,128], index: 1, kind: input, shape index: {}]
  %s2 = inlined_call_operand.vmem [shape: f32[1,128], index: 2, kind: input, shape index: {}]
  %s3 = inlined_call_operand.vmem [shape: bf16[128,128], index: 3, kind: input, shape index: {}]
  %s4 = inlined_call_operand.vmem [shape: f32[1,128], index: 4, kind: input, shape index: {}]
  %s5 = inlined_call_operand.vmem [shape: bf16[128,128], index: 5, kind: input, shape index: {}]
  %s6 = inlined_call_operand.vmem [shape: f32[1,128], index: 6, kind: input, shape index: {}]
  %s7 = inlined_call_operand.hbm [shape: f32[2,128], index: 7, kind: output, shape index: {}]
  %s8 = sld [smem:[#allocation0]]
  $region38: #{net_forward.7} parent=0
    _
  %s10 = ssub.s32 1, %s8
  %s11 = scalar_select 0, %s10, %s8
  $region1: #{net_forward.7} parent=0
    #allocation2 [shape = 'u8[1024]{0}', space=vmem, size = 0x400, scoped, tag = 'output window, operand 0, single buffered']
    #allocation3 [shape = 's32[1]{0}', space=sflag, size = 0x4, scoped, tag = 'scoped memory for net_forward.7']
    %12 = vsyncpa [#allocation3], 0
    // Predicated region
    $region2: #{net_forward.7} parent=1 // pred_check
      _
    $region3: #{net_forward.7} parent=1 // pred_check_branch
      %14 = sbr.rel (0) target = $region5
    $region4: #{net_forward.7} parent=1 // pred_region
      _
    $region5: #{net_forward.7} parent=1 // pred_fallthru
      _
    // Predicated region
    $region6: #{net_forward.7} parent=1 // pred_check
      _
    $region7: #{net_forward.7} parent=1 // pred_check_branch
      %16 = sbr.rel (0) target = $region9
    $region8: #{net_forward.7} parent=1 // pred_region
      _
    $region9: #{net_forward.7} parent=1 // pred_fallthru
      _
    // Predicated region
    $region10: #{net_forward.7} parent=1 // pred_check
      _
    $region11: #{net_forward.7} parent=1 // pred_check_branch
      %18 = sbr.rel (0) target = $region13
    $region12: #{net_forward.7} parent=1 // pred_region
      _
    $region13: #{net_forward.7} parent=1 // pred_fallthru
      _
    // Predicated region
    $region14: #{net_forward.7} parent=1 // pred_check
      _
    $region15: #{net_forward.7} parent=1 // pred_check_branch
      %20 = sbr.rel (0) target = $region17
    $region16: #{net_forward.7} parent=1 // pred_region
      _
    $region17: #{net_forward.7} parent=1 // pred_fallthru
      _
    // Predicated region
    $region18: #{net_forward.7} parent=1 // pred_check
      _
    $region19: #{net_forward.7} parent=1 // pred_check_branch
      %22 = sbr.rel (0) target = $region21
    $region20: #{net_forward.7} parent=1 // pred_region
      _
    $region21: #{net_forward.7} parent=1 // pred_fallthru
      _
    // Predicated region
    $region22: #{net_forward.7} parent=1 // pred_check
      _
    $region23: #{net_forward.7} parent=1 // pred_check_branch
      %24 = sbr.rel (0) target = $region25
    $region24: #{net_forward.7} parent=1 // pred_region
      _
    $region25: #{net_forward.7} parent=1 // pred_fallthru
      _
    // Predicated region
    $region26: #{net_forward.7} parent=1 // pred_check
      _
    $region27: #{net_forward.7} parent=1 // pred_check_branch
      %26 = sbr.rel (0) target = $region29
    $region28: #{net_forward.7} parent=1 // pred_region
      _
    $region29: #{net_forward.7} parent=1 // pred_fallthru
      _
    %v28 = vld [vmem:[%s0] sm:$0xff]
    %v29 = vld [vmem:[%s0 + $0x8] sm:$0x1]
    %v30 = vld [vmem:[%s1] sm:$0xf]
    %v31 = vld [vmem:[%s1 + $0x4] sm:$0xf]
    %v32 = vld [vmem:[%s1 + $0x8] sm:$0xf]
    %v33 = vld [vmem:[%s1 + $0xc] sm:$0xf]
    %v34 = vld [vmem:[%s1 + $0x10] sm:$0xf]
    %v35 = vld [vmem:[%s1 + $0x14] sm:$0xf]
    %v36 = vld [vmem:[%s1 + $0x18] sm:$0xf]
    %v37 = vld [vmem:[%s1 + $0x1c] sm:$0xf]
    %v38 = vld [vmem:[%s1 + $0x20] sm:$0xf]
    %v39 = vld [vmem:[%s1 + $0x24] sm:$0xf]
    %v40 = vld [vmem:[%s1 + $0x28] sm:$0xf]
    %v41 = vld [vmem:[%s1 + $0x2c] sm:$0xf]
    %v42 = vld [vmem:[%s1 + $0x30] sm:$0xf]
    %v43 = vld [vmem:[%s1 + $0x34] sm:$0xf]
    %v44 = vld [vmem:[%s1 + $0x38] sm:$0xf]
    %v45 = vld [vmem:[%s1 + $0x3c] sm:$0xf]
    %v46 = vld [vmem:[%s1 + $0x40] sm:$0xf]
    %v47 = vld [vmem:[%s1 + $0x44] sm:$0xf]
    %v48 = vld [vmem:[%s1 + $0x48] sm:$0xf]
    %v49 = vld [vmem:[%s1 + $0x4c] sm:$0xf]
    %v50 = vld [vmem:[%s1 + $0x50] sm:$0xf]
    %v51 = vld [vmem:[%s1 + $0x54] sm:$0xf]
    %v52 = vld [vmem:[%s1 + $0x58] sm:$0xf]
    %v53 = vld [vmem:[%s1 + $0x5c] sm:$0xf]
    %v54 = vld [vmem:[%s1 + $0x60] sm:$0xf]
    %v55 = vld [vmem:[%s1 + $0x64] sm:$0xf]
    %v56 = vld [vmem:[%s1 + $0x68] sm:$0xf]
    %v57 = vld [vmem:[%s1 + $0x6c] sm:$0xf]
    %v58 = vld [vmem:[%s1 + $0x70] sm:$0xf]
    %v59 = vld [vmem:[%s1 + $0x74] sm:$0xf]
    %v60 = vld [vmem:[%s1 + $0x78] sm:$0xf]
    %v61 = vld [vmem:[%s1 + $0x7c] sm:$0xf]
    %v62 = vld [vmem:[%s1 + $0x80] sm:$0xf]
    %v63 = vld [vmem:[%s1 + $0x84] sm:$0xf]
    %v64 = vld [vmem:[%s1 + $0x88] sm:$0xf]
    %v65 = vld [vmem:[%s1 + $0x8c] sm:$0xf]
    %v66 = vld [vmem:[%s1 + $0x90] sm:$0xf]
    %v67 = vld [vmem:[%s1 + $0x94] sm:$0xf]
    %v68 = vld [vmem:[%s1 + $0x98] sm:$0xf]
    %v69 = vld [vmem:[%s1 + $0x9c] sm:$0xf]
    %v70 = vld [vmem:[%s1 + $0xa0] sm:$0xf]
    %v71 = vld [vmem:[%s1 + $0xa4] sm:$0xf]
    %v72 = vld [vmem:[%s1 + $0xa8] sm:$0xf]
    %v73 = vld [vmem:[%s1 + $0xac] sm:$0xf]
    %v74 = vld [vmem:[%s1 + $0xb0] sm:$0xf]
    %v75 = vld [vmem:[%s1 + $0xb4] sm:$0xf]
    %v76 = vld [vmem:[%s1 + $0xb8] sm:$0xf]
    %v77 = vld [vmem:[%s1 + $0xbc] sm:$0xf]
    %v78 = vld [vmem:[%s1 + $0xc0] sm:$0xf]
    %v79 = vld [vmem:[%s1 + $0xc4] sm:$0xf]
    %v80 = vld [vmem:[%s1 + $0xc8] sm:$0xf]
    %v81 = vld [vmem:[%s1 + $0xcc] sm:$0xf]
    %v82 = vld [vmem:[%s1 + $0xd0] sm:$0xf]
    %v83 = vld [vmem:[%s1 + $0xd4] sm:$0xf]
    %v84 = vld [vmem:[%s1 + $0xd8] sm:$0xf]
    %v85 = vld [vmem:[%s1 + $0xdc] sm:$0xf]
    %v86 = vld [vmem:[%s1 + $0xe0] sm:$0xf]
    %v87 = vld [vmem:[%s1 + $0xe4] sm:$0xf]
    %v88 = vld [vmem:[%s1 + $0xe8] sm:$0xf]
    %v89 = vld [vmem:[%s1 + $0xec] sm:$0xf]
    %v90 = vld [vmem:[%s1 + $0xf0] sm:$0xf]
    %v91 = vld [vmem:[%s1 + $0xf4] sm:$0xf]
    %v92 = vld [vmem:[%s1 + $0xf8] sm:$0xf]
    %v93 = vld [vmem:[%s1 + $0xfc] sm:$0xf]
    %v94 = vld [vmem:[%s1 + $0x100] sm:$0xf]
    %v95 = vld [vmem:[%s1 + $0x104] sm:$0xf]
    %v96 = vld [vmem:[%s1 + $0x108] sm:$0xf]
    %v97 = vld [vmem:[%s1 + $0x10c] sm:$0xf]
    %v98 = vld [vmem:[%s1 + $0x110] sm:$0xf]
    %v99 = vld [vmem:[%s1 + $0x114] sm:$0xf]
    %v100 = vld [vmem:[%s1 + $0x118] sm:$0xf]
    %v101 = vld [vmem:[%s1 + $0x11c] sm:$0xf]
    %v102 = vld [vmem:[%s1 + $0x120] sm:$0xf]
    %v103 = vld [vmem:[%s1 + $0x124] sm:$0xf]
    %v104 = vld [vmem:[%s1 + $0x128] sm:$0xf]
    %v105 = vld [vmem:[%s1 + $0x12c] sm:$0xf]
    %v106 = vld [vmem:[%s1 + $0x130] sm:$0xf]
    %v107 = vld [vmem:[%s1 + $0x134] sm:$0xf]
    %v108 = vld [vmem:[%s1 + $0x138] sm:$0xf]
    %v109 = vld [vmem:[%s1 + $0x13c] sm:$0xf]
    %v110 = vld [vmem:[%s1 + $0x140] sm:$0xf]
    %v111 = vld [vmem:[%s1 + $0x144] sm:$0xf]
    %v112 = vld [vmem:[%s1 + $0x148] sm:$0xf]
    %v113 = vld [vmem:[%s1 + $0x14c] sm:$0xf]
    %v114 = vld [vmem:[%s1 + $0x150] sm:$0xf]
    %v115 = vld [vmem:[%s1 + $0x154] sm:$0xf]
    %v116 = vld [vmem:[%s1 + $0x158] sm:$0xf]
    %v117 = vld [vmem:[%s1 + $0x15c] sm:$0xf]
    %v118 = vld [vmem:[%s1 + $0x160] sm:$0xf]
    %v119 = vld [vmem:[%s1 + $0x164] sm:$0xf]
    %v120 = vld [vmem:[%s1 + $0x168] sm:$0xf]
    %v121 = vld [vmem:[%s1 + $0x16c] sm:$0xf]
    %v122 = vld [vmem:[%s1 + $0x170] sm:$0xf]
    %v123 = vld [vmem:[%s1 + $0x174] sm:$0xf]
    %v124 = vld [vmem:[%s1 + $0x178] sm:$0xf]
    %v125 = vld [vmem:[%s1 + $0x17c] sm:$0xf]
    %v126 = vld [vmem:[%s1 + $0x180] sm:$0xf]
    %v127 = vld [vmem:[%s1 + $0x184] sm:$0xf]
    %v128 = vld [vmem:[%s1 + $0x188] sm:$0xf]
    %v129 = vld [vmem:[%s1 + $0x18c] sm:$0xf]
    %v130 = vld [vmem:[%s1 + $0x190] sm:$0xf]
    %v131 = vld [vmem:[%s1 + $0x194] sm:$0xf]
    %v132 = vld [vmem:[%s1 + $0x198] sm:$0xf]
    %v133 = vld [vmem:[%s1 + $0x19c] sm:$0xf]
    %v134 = vld [vmem:[%s1 + $0x1a0] sm:$0xf]
    %v135 = vld [vmem:[%s1 + $0x1a4] sm:$0xf]
    %v136 = vld [vmem:[%s1 + $0x1a8] sm:$0xf]
    %v137 = vld [vmem:[%s1 + $0x1ac] sm:$0xf]
    %v138 = vld [vmem:[%s1 + $0x1b0] sm:$0xf]
    %v139 = vld [vmem:[%s1 + $0x1b4] sm:$0xf]
    %v140 = vld [vmem:[%s1 + $0x1b8] sm:$0xf]
    %v141 = vld [vmem:[%s1 + $0x1bc] sm:$0xf]
    %v142 = vld [vmem:[%s1 + $0x1c0] sm:$0xf]
    %v143 = vld [vmem:[%s1 + $0x1c4] sm:$0xf]
    %v144 = vld [vmem:[%s1 + $0x1c8] sm:$0xf]
    %v145 = vld [vmem:[%s1 + $0x1cc] sm:$0xf]
    %v146 = vld [vmem:[%s1 + $0x1d0] sm:$0xf]
    %v147 = vld [vmem:[%s1 + $0x1d4] sm:$0xf]
    %v148 = vld [vmem:[%s1 + $0x1d8] sm:$0xf]
    %v149 = vld [vmem:[%s1 + $0x1dc] sm:$0xf]
    %v150 = vld [vmem:[%s1 + $0x1e0] sm:$0xf]
    %v151 = vld [vmem:[%s1 + $0x1e4] sm:$0xf]
    %v152 = vld [vmem:[%s1 + $0x1e8] sm:$0xf]
    %v153 = vld [vmem:[%s1 + $0x1ec] sm:$0xf]
    %v154 = vld [vmem:[%s1 + $0x1f0] sm:$0xf]
    %v155 = vld [vmem:[%s1 + $0x1f4] sm:$0xf]
    %v156 = vld [vmem:[%s1 + $0x1f8] sm:$0xf]
    %v157 = vld [vmem:[%s1 + $0x1fc] sm:$0xf]
    %v158 = vld [vmem:[%s1 + $0x200] sm:$0xf]
    %v159 = vld [vmem:[%s1 + $0x204] sm:$0xf]
    %v160 = vld [vmem:[%s1 + $0x208] sm:$0xf]
    %v161 = vld [vmem:[%s1 + $0x20c] sm:$0xf]
    %v162 = vld [vmem:[%s1 + $0x210] sm:$0xf]
    %v163 = vld [vmem:[%s1 + $0x214] sm:$0xf]
    %v164 = vld [vmem:[%s1 + $0x218] sm:$0xf]
    %v165 = vld [vmem:[%s1 + $0x21c] sm:$0xf]
    %v166 = vld [vmem:[%s1 + $0x220] sm:$0xf]
    %v167 = vld [vmem:[%s1 + $0x224] sm:$0xf]
    %v168 = vld [vmem:[%s1 + $0x228] sm:$0xf]
    %v169 = vld [vmem:[%s1 + $0x22c] sm:$0xf]
    %v170 = vld [vmem:[%s1 + $0x230] sm:$0xf]
    %v171 = vld [vmem:[%s1 + $0x234] sm:$0xf]
    %v172 = vld [vmem:[%s1 + $0x238] sm:$0xf]
    %v173 = vld [vmem:[%s1 + $0x23c] sm:$0xf]
    %v174 = vld [vmem:[%s2] sm:$0x1]
    %v176 = vlaneseq
    %v177 = vshrl.u32 %v176, 7
    %v178 = vsub.s32 0, %v177
    %v179 = vrot.slane %v174, %v178
    %v183 = vcombine.high %v28, %v28
    %v185 = vunpack.c.l.s4 1966171168
    %v186 = vunpack.c.0.s8 %v185
    %v187 = vlaneseq
    %v188 = vshrl.u32 %v187, 7
    %v189 = vsub.s32 %v186, %v188
    %v190 = vrot.slane %v28, %v189
    %v192 = vunpack.c.l.s4 1966171168
    %v193 = vunpack.c.0.s8 %v192
    %v194 = vlaneseq
    %v195 = vshrl.u32 %v194, 7
    %v196 = vsub.s32 %v193, %v195
    %v197 = vrot.slane %v183, %v196
    %v198 = vcombine.high %v190, %v190
    %v199 = vcombine.high %v197, %v197
    %v201 = vunpack.c.l.s4 1966171168
    %v202 = vunpack.c.0.s8 %v201
    %v203 = vlaneseq
    %v204 = vshrl.u32 %v203, 7
    %v205 = vsub.s32 %v202, %v204
    %v206 = vrot.slane %v190, %v205
    %v208 = vunpack.c.l.s4 1966171168
    %v209 = vunpack.c.0.s8 %v208
    %v210 = vlaneseq
    %v211 = vshrl.u32 %v210, 7
    %v212 = vsub.s32 %v209, %v211
    %v213 = vrot.slane %v197, %v212
    %v215 = vunpack.c.l.s4 1966171168
    %v216 = vunpack.c.0.s8 %v215
    %v217 = vlaneseq
    %v218 = vshrl.u32 %v217, 7
    %v219 = vsub.s32 %v216, %v218
    %v220 = vrot.slane %v198, %v219
    %v222 = vunpack.c.l.s4 1966171168
    %v223 = vunpack.c.0.s8 %v222
    %v224 = vlaneseq
    %v225 = vshrl.u32 %v224, 7
    %v226 = vsub.s32 %v223, %v225
    %v227 = vrot.slane %v199, %v226
    %v228 = vcombine.high %v206, %v206
    %v229 = vcombine.high %v213, %v213
    %v230 = vcombine.high %v220, %v220
    %v231 = vcombine.high %v227, %v227
    %v233 = vunpack.c.l.s4 1966171168
    %v234 = vunpack.c.0.s8 %v233
    %v235 = vlaneseq
    %v236 = vshrl.u32 %v235, 7
    %v237 = vsub.s32 %v234, %v236
    %v238 = vrot.slane %v29, %v237
    %v240 = vunpack.c.l.s4 1966171168
    %v241 = vunpack.c.0.s8 %v240
    %v242 = vlaneseq
    %v243 = vshrl.u32 %v242, 7
    %v244 = vsub.s32 %v241, %v243
    %v245 = vrot.slane %v238, %v244
    %v399 = vunpack.c.l.b16 %v30
    %v400 = vunpack.c.l.b16 %v31
    %v401 = vunpack.c.l.b16 %v32
    %v402 = vunpack.c.l.b16 %v33
    %v403 = vunpack.c.l.b16 %v34
    %v404 = vunpack.c.l.b16 %v35
    %v405 = vunpack.c.l.b16 %v36
    %v406 = vunpack.c.l.b16 %v37
    %v407 = vunpack.c.l.b16 %v38
    %v408 = vunpack.c.l.b16 %v39
    %v409 = vunpack.c.l.b16 %v40
    %v410 = vunpack.c.l.b16 %v41
    %v411 = vunpack.c.l.b16 %v42
    %v412 = vunpack.c.l.b16 %v43
    %v413 = vunpack.c.l.b16 %v44
    %v414 = vunpack.c.l.b16 %v45
    %v415 = vunpack.c.l.b16 %v46
    %v416 = vunpack.c.l.b16 %v47
    %v417 = vunpack.c.l.b16 %v48
    %v418 = vunpack.c.l.b16 %v49
    %v419 = vunpack.c.l.b16 %v50
    %v420 = vunpack.c.l.b16 %v51
    %v421 = vunpack.c.l.b16 %v52
    %v422 = vunpack.c.l.b16 %v53
    %v423 = vunpack.c.l.b16 %v54
    %v424 = vunpack.c.l.b16 %v55
    %v425 = vunpack.c.l.b16 %v56
    %v426 = vunpack.c.l.b16 %v57
    %v427 = vunpack.c.l.b16 %v58
    %v428 = vunpack.c.l.b16 %v59
    %v429 = vunpack.c.l.b16 %v60
    %v430 = vunpack.c.l.b16 %v61
    %v431 = vunpack.c.l.b16 %v62
    %v432 = vunpack.c.l.b16 %v63
    %v433 = vunpack.c.l.b16 %v64
    %v434 = vunpack.c.l.b16 %v65
    %v435 = vunpack.c.l.b16 %v66
    %v436 = vunpack.c.l.b16 %v67
    %v437 = vunpack.c.l.b16 %v68
    %v438 = vunpack.c.l.b16 %v69
    %v439 = vunpack.c.l.b16 %v70
    %v440 = vunpack.c.l.b16 %v71
    %v441 = vunpack.c.l.b16 %v72
    %v442 = vunpack.c.l.b16 %v73
    %v443 = vunpack.c.l.b16 %v74
    %v444 = vunpack.c.l.b16 %v75
    %v445 = vunpack.c.l.b16 %v76
    %v446 = vunpack.c.l.b16 %v77
    %v447 = vunpack.c.l.b16 %v78
    %v448 = vunpack.c.l.b16 %v79
    %v449 = vunpack.c.l.b16 %v80
    %v450 = vunpack.c.l.b16 %v81
    %v451 = vunpack.c.l.b16 %v82
    %v452 = vunpack.c.l.b16 %v83
    %v453 = vunpack.c.l.b16 %v84
    %v454 = vunpack.c.l.b16 %v85
    %v455 = vunpack.c.l.b16 %v86
    %v456 = vunpack.c.l.b16 %v87
    %v457 = vunpack.c.l.b16 %v88
    %v458 = vunpack.c.l.b16 %v89
    %v459 = vunpack.c.l.b16 %v90
    %v460 = vunpack.c.l.b16 %v91
    %v461 = vunpack.c.l.b16 %v92
    %v462 = vunpack.c.l.b16 %v93
    %v463 = vunpack.c.l.b16 %v94
    %v464 = vunpack.c.l.b16 %v95
    %v465 = vunpack.c.l.b16 %v96
    %v466 = vunpack.c.l.b16 %v97
    %v467 = vunpack.c.l.b16 %v98
    %v468 = vunpack.c.l.b16 %v99
    %v469 = vunpack.c.l.b16 %v100
    %v470 = vunpack.c.l.b16 %v101
    %v471 = vunpack.c.l.b16 %v102
    %v472 = vunpack.c.l.b16 %v103
    %v473 = vunpack.c.l.b16 %v104
    %v474 = vunpack.c.l.b16 %v105
    %v475 = vunpack.c.l.b16 %v106
    %v476 = vunpack.c.l.b16 %v107
    %v477 = vunpack.c.l.b16 %v108
    %v478 = vunpack.c.l.b16 %v109
    %v479 = vunpack.c.l.b16 %v110
    %v480 = vunpack.c.l.b16 %v111
    %v481 = vunpack.c.l.b16 %v112
    %v482 = vunpack.c.l.b16 %v113
    %v483 = vunpack.c.l.b16 %v114
    %v484 = vunpack.c.l.b16 %v115
    %v485 = vunpack.c.l.b16 %v116
    %v486 = vunpack.c.l.b16 %v117
    %v487 = vunpack.c.l.b16 %v118
    %v488 = vunpack.c.l.b16 %v119
    %v489 = vunpack.c.l.b16 %v120
    %v490 = vunpack.c.l.b16 %v121
    %v491 = vunpack.c.l.b16 %v122
    %v492 = vunpack.c.l.b16 %v123
    %v493 = vunpack.c.l.b16 %v124
    %v494 = vunpack.c.l.b16 %v125
    %v495 = vunpack.c.l.b16 %v126
    %v496 = vunpack.c.l.b16 %v127
    %v497 = vunpack.c.l.b16 %v128
    %v498 = vunpack.c.l.b16 %v129
    %v499 = vunpack.c.l.b16 %v130
    %v500 = vunpack.c.l.b16 %v131
    %v501 = vunpack.c.l.b16 %v132
    %v502 = vunpack.c.l.b16 %v133
    %v503 = vunpack.c.l.b16 %v134
    %v504 = vunpack.c.l.b16 %v135
    %v505 = vunpack.c.l.b16 %v136
    %v506 = vunpack.c.l.b16 %v137
    %v507 = vunpack.c.l.b16 %v138
    %v508 = vunpack.c.l.b16 %v139
    %v509 = vunpack.c.l.b16 %v140
    %v510 = vunpack.c.l.b16 %v141
    %v511 = vunpack.c.l.b16 %v142
    %v512 = vunpack.c.l.b16 %v143
    %v513 = vunpack.c.l.b16 %v144
    %v514 = vunpack.c.l.b16 %v145
    %v515 = vunpack.c.l.b16 %v146
    %v516 = vunpack.c.l.b16 %v147
    %v517 = vunpack.c.l.b16 %v148
    %v518 = vunpack.c.l.b16 %v149
    %v519 = vunpack.c.l.b16 %v150
    %v520 = vunpack.c.l.b16 %v151
    %v521 = vunpack.c.l.b16 %v152
    %v522 = vunpack.c.l.b16 %v153
    %v523 = vunpack.c.l.b16 %v154
    %v524 = vunpack.c.l.b16 %v155
    %v525 = vunpack.c.l.b16 %v156
    %v526 = vunpack.c.l.b16 %v157
    %v527 = vunpack.c.l.b16 %v158
    %v528 = vunpack.c.l.b16 %v159
    %v529 = vunpack.c.l.b16 %v160
    %v530 = vunpack.c.l.b16 %v161
    %v531 = vunpack.c.l.b16 %v162
    %v532 = vunpack.c.l.b16 %v163
    %v533 = vunpack.c.l.b16 %v164
    %v534 = vunpack.c.l.b16 %v165
    %v535 = vunpack.c.l.b16 %v166
    %v536 = vunpack.c.l.b16 %v167
    %v537 = vunpack.c.l.b16 %v168
    %v538 = vunpack.c.l.b16 %v169
    %v539 = vunpack.c.l.b16 %v170
    %v540 = vunpack.c.l.b16 %v171
    %v541 = vunpack.c.l.b16 %v172
    %v542 = vunpack.c.l.b16 %v173
    %v543 = vpack.c.b16 %v400, %v399
    %v544 = vpack.c.b16 %v402, %v401
    %v545 = vpack.c.b16 %v404, %v403
    %v546 = vpack.c.b16 %v406, %v405
    %v547 = vpack.c.b16 %v408, %v407
    %v548 = vpack.c.b16 %v410, %v409
    %v549 = vpack.c.b16 %v412, %v411
    %v550 = vpack.c.b16 %v414, %v413
    %v551 = vpack.c.b16 %v416, %v415
    %v552 = vpack.c.b16 %v418, %v417
    %v553 = vpack.c.b16 %v420, %v419
    %v554 = vpack.c.b16 %v422, %v421
    %v555 = vpack.c.b16 %v424, %v423
    %v556 = vpack.c.b16 %v426, %v425
    %v557 = vpack.c.b16 %v428, %v427
    %v558 = vpack.c.b16 %v430, %v429
    %v559 = vpack.c.b16 %v432, %v431
    %v560 = vpack.c.b16 %v434, %v433
    %v561 = vpack.c.b16 %v436, %v435
    %v562 = vpack.c.b16 %v438, %v437
    %v563 = vpack.c.b16 %v440, %v439
    %v564 = vpack.c.b16 %v442, %v441
    %v565 = vpack.c.b16 %v444, %v443
    %v566 = vpack.c.b16 %v446, %v445
    %v567 = vpack.c.b16 %v448, %v447
    %v568 = vpack.c.b16 %v450, %v449
    %v569 = vpack.c.b16 %v452, %v451
    %v570 = vpack.c.b16 %v454, %v453
    %v571 = vpack.c.b16 %v456, %v455
    %v572 = vpack.c.b16 %v458, %v457
    %v573 = vpack.c.b16 %v460, %v459
    %v574 = vpack.c.b16 %v462, %v461
    %v575 = vpack.c.b16 %v464, %v463
    %v576 = vpack.c.b16 %v466, %v465
    %v577 = vpack.c.b16 %v468, %v467
    %v578 = vpack.c.b16 %v470, %v469
    %v579 = vpack.c.b16 %v472, %v471
    %v580 = vpack.c.b16 %v474, %v473
    %v581 = vpack.c.b16 %v476, %v475
    %v582 = vpack.c.b16 %v478, %v477
    %v583 = vpack.c.b16 %v480, %v479
    %v584 = vpack.c.b16 %v482, %v481
    %v585 = vpack.c.b16 %v484, %v483
    %v586 = vpack.c.b16 %v486, %v485
    %v587 = vpack.c.b16 %v488, %v487
    %v588 = vpack.c.b16 %v490, %v489
    %v589 = vpack.c.b16 %v492, %v491
    %v590 = vpack.c.b16 %v494, %v493
    %v591 = vpack.c.b16 %v496, %v495
    %v592 = vpack.c.b16 %v498, %v497
    %v593 = vpack.c.b16 %v500, %v499
    %v594 = vpack.c.b16 %v502, %v501
    %v595 = vpack.c.b16 %v504, %v503
    %v596 = vpack.c.b16 %v506, %v505
    %v597 = vpack.c.b16 %v508, %v507
    %v598 = vpack.c.b16 %v510, %v509
    %v599 = vpack.c.b16 %v512, %v511
    %v600 = vpack.c.b16 %v514, %v513
    %v601 = vpack.c.b16 %v516, %v515
    %v602 = vpack.c.b16 %v518, %v517
    %v603 = vpack.c.b16 %v520, %v519
    %v604 = vpack.c.b16 %v522, %v521
    %v605 = vpack.c.b16 %v524, %v523
    %v606 = vpack.c.b16 %v526, %v525
    %v607 = vpack.c.b16 %v528, %v527
    %v608 = vpack.c.b16 %v530, %v529
    %v609 = vpack.c.b16 %v532, %v531
    %v610 = vpack.c.b16 %v534, %v533
    %v611 = vpack.c.b16 %v536, %v535
    %v612 = vpack.c.b16 %v538, %v537
    %v613 = vpack.c.b16 %v540, %v539
    %v614 = vpack.c.b16 %v542, %v541
    %687 = vmatprep.subr.bf16.mxu0 0
    %688 = vmatpush1.bf16.msra.mxu0 %v543
    %689 = vmatprep.subr.bf16.mxu0 0
    %690 = vmatpush1.bf16.msra.mxu0 %v544
    %691 = vmatprep.subr.bf16.mxu0 0
    %692 = vmatpush1.bf16.msra.mxu0 %v545
    %693 = vmatprep.subr.bf16.mxu0 0
    %694 = vmatpush1.bf16.msra.mxu0 %v546
    %695 = vmatprep.subr.bf16.mxu0 0
    %696 = vmatpush1.bf16.msra.mxu0 %v547
    %697 = vmatprep.subr.bf16.mxu0 0
    %698 = vmatpush1.bf16.msra.mxu0 %v548
    %699 = vmatprep.subr.bf16.mxu0 0
    %700 = vmatpush1.bf16.msra.mxu0 %v549
    %701 = vmatprep.subr.bf16.mxu0 0
    %702 = vmatpush1.bf16.msra.mxu0 %v550
    %703 = vmatprep.subr.bf16.mxu0 0
    %704 = vmatpush1.bf16.msra.mxu0 %v551
    %705 = vmatprep.subr.bf16.mxu0 0
    %706 = vmatpush1.bf16.msra.mxu0 %v552
    %707 = vmatprep.subr.bf16.mxu0 0
    %708 = vmatpush1.bf16.msra.mxu0 %v553
    %709 = vmatprep.subr.bf16.mxu0 0
    %710 = vmatpush1.bf16.msra.mxu0 %v554
    %711 = vmatprep.subr.bf16.mxu0 0
    %712 = vmatpush1.bf16.msra.mxu0 %v555
    %713 = vmatprep.subr.bf16.mxu0 0
    %714 = vmatpush1.bf16.msra.mxu0 %v556
    %715 = vmatprep.subr.bf16.mxu0 0
    %716 = vmatpush1.bf16.msra.mxu0 %v557
    %717 = vmatprep.subr.bf16.mxu0 0
    %718 = vmatpush1.bf16.msra.mxu0 %v558
    %719 = vmatprep.mubr.bf16.mxu0 %v220
    %720 = vmatmul.mubr.bf16.gmra.mrb[0].mxu0 %v206
    %v721 = vpop.f32.mrb[0].mxu0
    %v722 = vadd.f32 %v179, %v721
    %v723 = vpop.f32.mrb[0].mxu0
    %v724 = vpop.f32.mrb[0].mxu0
    %v725 = vpop.f32.mrb[0].mxu0
    %726 = vdwg.mxu0
    %727 = vmatprep.subr.bf16.mxu0 0
    %728 = vmatpush1.bf16.msra.mxu0 %v559
    %729 = vmatprep.subr.bf16.mxu0 0
    %730 = vmatpush1.bf16.msra.mxu0 %v560
    %731 = vmatprep.subr.bf16.mxu0 0
    %732 = vmatpush1.bf16.msra.mxu0 %v561
    %733 = vmatprep.subr.bf16.mxu0 0
    %734 = vmatpush1.bf16.msra.mxu0 %v562
    %735 = vmatprep.subr.bf16.mxu0 0
    %736 = vmatpush1.bf16.msra.mxu0 %v563
    %737 = vmatprep.subr.bf16.mxu0 0
    %738 = vmatpush1.bf16.msra.mxu0 %v564
    %739 = vmatprep.subr.bf16.mxu0 0
    %740 = vmatpush1.bf16.msra.mxu0 %v565
    %741 = vmatprep.subr.bf16.mxu0 0
    %742 = vmatpush1.bf16.msra.mxu0 %v566
    %743 = vmatprep.subr.bf16.mxu0 0
    %744 = vmatpush1.bf16.msra.mxu0 %v567
    %745 = vmatprep.subr.bf16.mxu0 0
    %746 = vmatpush1.bf16.msra.mxu0 %v568
    %747 = vmatprep.subr.bf16.mxu0 0
    %748 = vmatpush1.bf16.msra.mxu0 %v569
    %749 = vmatprep.subr.bf16.mxu0 0
    %750 = vmatpush1.bf16.msra.mxu0 %v570
    %751 = vmatprep.subr.bf16.mxu0 0
    %752 = vmatpush1.bf16.msra.mxu0 %v571
    %753 = vmatprep.subr.bf16.mxu0 0
    %754 = vmatpush1.bf16.msra.mxu0 %v572
    %755 = vmatprep.subr.bf16.mxu0 0
    %756 = vmatpush1.bf16.msra.mxu0 %v573
    %757 = vmatprep.subr.bf16.mxu0 0
    %758 = vmatpush1.bf16.msra.mxu0 %v574
    %759 = vmatprep.mubr.bf16.mxu0 %v230
    %760 = vmatmul.mubr.bf16.gmra.mrb[0].mxu0 %v228
    %v761 = vpop.f32.mrb[0].mxu0
    %v762 = vadd.f32 %v722, %v761
    %v763 = vpop.f32.mrb[0].mxu0
    %v764 = vpop.f32.mrb[0].mxu0
    %v765 = vpop.f32.mrb[0].mxu0
    %766 = vdwg.mxu0
    %767 = vmatprep.subr.bf16.mxu0 0
    %768 = vmatpush1.bf16.msra.mxu0 %v575
    %769 = vmatprep.subr.bf16.mxu0 0
    %770 = vmatpush1.bf16.msra.mxu0 %v576
    %771 = vmatprep.subr.bf16.mxu0 0
    %772 = vmatpush1.bf16.msra.mxu0 %v577
    %773 = vmatprep.subr.bf16.mxu0 0
    %774 = vmatpush1.bf16.msra.mxu0 %v578
    %775 = vmatprep.subr.bf16.mxu0 0
    %776 = vmatpush1.bf16.msra.mxu0 %v579
    %777 = vmatprep.subr.bf16.mxu0 0
    %778 = vmatpush1.bf16.msra.mxu0 %v580
    %779 = vmatprep.subr.bf16.mxu0 0
    %780 = vmatpush1.bf16.msra.mxu0 %v581
    %781 = vmatprep.subr.bf16.mxu0 0
    %782 = vmatpush1.bf16.msra.mxu0 %v582
    %783 = vmatprep.subr.bf16.mxu0 0
    %784 = vmatpush1.bf16.msra.mxu0 %v583
    %785 = vmatprep.subr.bf16.mxu0 0
    %786 = vmatpush1.bf16.msra.mxu0 %v584
    %787 = vmatprep.subr.bf16.mxu0 0
    %788 = vmatpush1.bf16.msra.mxu0 %v585
    %789 = vmatprep.subr.bf16.mxu0 0
    %790 = vmatpush1.bf16.msra.mxu0 %v586
    %791 = vmatprep.subr.bf16.mxu0 0
    %792 = vmatpush1.bf16.msra.mxu0 %v587
    %793 = vmatprep.subr.bf16.mxu0 0
    %794 = vmatpush1.bf16.msra.mxu0 %v588
    %795 = vmatprep.subr.bf16.mxu0 0
    %796 = vmatpush1.bf16.msra.mxu0 %v589
    %797 = vmatprep.subr.bf16.mxu0 0
    %798 = vmatpush1.bf16.msra.mxu0 %v590
    %799 = vmatprep.mubr.bf16.mxu0 %v227
    %800 = vmatmul.mubr.bf16.gmra.mrb[0].mxu0 %v213
    %v801 = vpop.f32.mrb[0].mxu0
    %v802 = vadd.f32 %v762, %v801
    %v803 = vpop.f32.mrb[0].mxu0
    %v804 = vpop.f32.mrb[0].mxu0
    %v805 = vpop.f32.mrb[0].mxu0
    %806 = vdwg.mxu0
    %807 = vmatprep.subr.bf16.mxu0 0
    %808 = vmatpush1.bf16.msra.mxu0 %v591
    %809 = vmatprep.subr.bf16.mxu0 0
    %810 = vmatpush1.bf16.msra.mxu0 %v592
    %811 = vmatprep.subr.bf16.mxu0 0
    %812 = vmatpush1.bf16.msra.mxu0 %v593
    %813 = vmatprep.subr.bf16.mxu0 0
    %814 = vmatpush1.bf16.msra.mxu0 %v594
    %815 = vmatprep.subr.bf16.mxu0 0
    %816 = vmatpush1.bf16.msra.mxu0 %v595
    %817 = vmatprep.subr.bf16.mxu0 0
    %818 = vmatpush1.bf16.msra.mxu0 %v596
    %819 = vmatprep.subr.bf16.mxu0 0
    %820 = vmatpush1.bf16.msra.mxu0 %v597
    %821 = vmatprep.subr.bf16.mxu0 0
    %822 = vmatpush1.bf16.msra.mxu0 %v598
    %823 = vmatprep.subr.bf16.mxu0 0
    %824 = vmatpush1.bf16.msra.mxu0 %v599
    %825 = vmatprep.subr.bf16.mxu0 0
    %826 = vmatpush1.bf16.msra.mxu0 %v600
    %827 = vmatprep.subr.bf16.mxu0 0
    %828 = vmatpush1.bf16.msra.mxu0 %v601
    %829 = vmatprep.subr.bf16.mxu0 0
    %830 = vmatpush1.bf16.msra.mxu0 %v602
    %831 = vmatprep.subr.bf16.mxu0 0
    %832 = vmatpush1.bf16.msra.mxu0 %v603
    %833 = vmatprep.subr.bf16.mxu0 0
    %834 = vmatpush1.bf16.msra.mxu0 %v604
    %835 = vmatprep.subr.bf16.mxu0 0
    %836 = vmatpush1.bf16.msra.mxu0 %v605
    %837 = vmatprep.subr.bf16.mxu0 0
    %838 = vmatpush1.bf16.msra.mxu0 %v606
    %839 = vmatprep.mubr.bf16.mxu0 %v231
    %840 = vmatmul.mubr.bf16.gmra.mrb[0].mxu0 %v229
    %v841 = vpop.f32.mrb[0].mxu0
    %v842 = vadd.f32 %v802, %v841
    %v843 = vpop.f32.mrb[0].mxu0
    %v844 = vpop.f32.mrb[0].mxu0
    %v845 = vpop.f32.mrb[0].mxu0
    %846 = vdwg.mxu0
    %847 = vmatprep.subr.bf16.mxu0 0
    %848 = vmatpush1.bf16.msra.mxu0 %v607
    %849 = vmatprep.subr.bf16.mxu0 0
    %850 = vmatpush1.bf16.msra.mxu0 %v608
    %851 = vmatprep.subr.bf16.mxu0 0
    %852 = vmatpush1.bf16.msra.mxu0 %v609
    %853 = vmatprep.subr.bf16.mxu0 0
    %854 = vmatpush1.bf16.msra.mxu0 %v610
    %855 = vmatprep.subr.bf16.mxu0 0
    %856 = vmatpush1.bf16.msra.mxu0 %v611
    %857 = vmatprep.subr.bf16.mxu0 0
    %858 = vmatpush1.bf16.msra.mxu0 %v612
    %859 = vmatprep.subr.bf16.mxu0 0
    %860 = vmatpush1.bf16.msra.mxu0 %v613
    %861 = vmatprep.subr.bf16.mxu0 0
    %862 = vmatpush1.bf16.msra.mxu0 %v614
    %863 = vmatprep.subr.bf16.mxu0 0
    %864 = vmatpush1.bf16.msra.mxu0 0
    %865 = vmatprep.subr.bf16.mxu0 0
    %866 = vmatpush1.bf16.msra.mxu0 0
    %867 = vmatprep.subr.bf16.mxu0 0
    %868 = vmatpush1.bf16.msra.mxu0 0
    %869 = vmatprep.subr.bf16.mxu0 0
    %870 = vmatpush1.bf16.msra.mxu0 0
    %871 = vmatprep.subr.bf16.mxu0 0
    %872 = vmatpush1.bf16.msra.mxu0 0
    %873 = vmatprep.subr.bf16.mxu0 0
    %874 = vmatpush1.bf16.msra.mxu0 0
    %875 = vmatprep.subr.bf16.mxu0 0
    %876 = vmatpush1.bf16.msra.mxu0 0
    %877 = vmatprep.subr.bf16.mxu0 0
    %878 = vmatpush1.bf16.msra.mxu0 0
    %879 = vmatprep.mubr.bf16.mxu0 0
    %880 = vmatmul.mubr.bf16.gmra.mrb[0].mxu0 %v245
    %v881 = vpop.f32.mrb[0].mxu0
    %v882 = vadd.f32 %v842, %v881
    %v883 = vpop.f32.mrb[0].mxu0
    %v884 = vpop.f32.mrb[0].mxu0
    %v885 = vpop.f32.mrb[0].mxu0
    %886 = vdwg.mxu0
    %v887 = vmax.f32 %v882, 0.0
    %v888 = vpack.c.bf16 %v887, %v887
    %v889 = vld [vmem:[%s3] sm:$0xf]
    %v890 = vld [vmem:[%s3 + $0x4] sm:$0xf]
    %v891 = vld [vmem:[%s3 + $0x8] sm:$0xf]
    %v892 = vld [vmem:[%s3 + $0xc] sm:$0xf]
    %v893 = vld [vmem:[%s3 + $0x10] sm:$0xf]
    %v894 = vld [vmem:[%s3 + $0x14] sm:$0xf]
    %v895 = vld [vmem:[%s3 + $0x18] sm:$0xf]
    %v896 = vld [vmem:[%s3 + $0x1c] sm:$0xf]
    %v897 = vld [vmem:[%s3 + $0x20] sm:$0xf]
    %v898 = vld [vmem:[%s3 + $0x24] sm:$0xf]
    %v899 = vld [vmem:[%s3 + $0x28] sm:$0xf]
    %v900 = vld [vmem:[%s3 + $0x2c] sm:$0xf]
    %v901 = vld [vmem:[%s3 + $0x30] sm:$0xf]
    %v902 = vld [vmem:[%s3 + $0x34] sm:$0xf]
    %v903 = vld [vmem:[%s3 + $0x38] sm:$0xf]
    %v904 = vld [vmem:[%s3 + $0x3c] sm:$0xf]
    %v905 = vld [vmem:[%s4] sm:$0x1]
    %v907 = vlaneseq
    %v908 = vshrl.u32 %v907, 7
    %v909 = vsub.s32 0, %v908
    %v910 = vrot.slane %v905, %v909
    %v928 = vunpack.c.l.b16 %v889
    %v929 = vunpack.c.l.b16 %v890
    %v930 = vunpack.c.l.b16 %v891
    %v931 = vunpack.c.l.b16 %v892
    %v932 = vunpack.c.l.b16 %v893
    %v933 = vunpack.c.l.b16 %v894
    %v934 = vunpack.c.l.b16 %v895
    %v935 = vunpack.c.l.b16 %v896
    %v936 = vunpack.c.l.b16 %v897
    %v937 = vunpack.c.l.b16 %v898
    %v938 = vunpack.c.l.b16 %v899
    %v939 = vunpack.c.l.b16 %v900
    %v940 = vunpack.c.l.b16 %v901
    %v941 = vunpack.c.l.b16 %v902
    %v942 = vunpack.c.l.b16 %v903
    %v943 = vunpack.c.l.b16 %v904
    %v944 = vpack.c.b16 %v929, %v928
    %v945 = vpack.c.b16 %v931, %v930
    %v946 = vpack.c.b16 %v933, %v932
    %v947 = vpack.c.b16 %v935, %v934
    %v948 = vpack.c.b16 %v937, %v936
    %v949 = vpack.c.b16 %v939, %v938
    %v950 = vpack.c.b16 %v941, %v940
    %v951 = vpack.c.b16 %v943, %v942
    %960 = vmatprep.subr.bf16.mxu0 0
    %961 = vmatpush1.bf16.msra.mxu0 %v944
    %962 = vmatprep.subr.bf16.mxu0 0
    %963 = vmatpush1.bf16.msra.mxu0 %v945
    %964 = vmatprep.subr.bf16.mxu0 0
    %965 = vmatpush1.bf16.msra.mxu0 %v946
    %966 = vmatprep.subr.bf16.mxu0 0
    %967 = vmatpush1.bf16.msra.mxu0 %v947
    %968 = vmatprep.subr.bf16.mxu0 0
    %969 = vmatpush1.bf16.msra.mxu0 %v948
    %970 = vmatprep.subr.bf16.mxu0 0
    %971 = vmatpush1.bf16.msra.mxu0 %v949
    %972 = vmatprep.subr.bf16.mxu0 0
    %973 = vmatpush1.bf16.msra.mxu0 %v950
    %974 = vmatprep.subr.bf16.mxu0 0
    %975 = vmatpush1.bf16.msra.mxu0 %v951
    %976 = vmatprep.subr.bf16.mxu0 0
    %977 = vmatpush1.bf16.msra.mxu0 0
    %978 = vmatprep.subr.bf16.mxu0 0
    %979 = vmatpush1.bf16.msra.mxu0 0
    %980 = vmatprep.subr.bf16.mxu0 0
    %981 = vmatpush1.bf16.msra.mxu0 0
    %982 = vmatprep.subr.bf16.mxu0 0
    %983 = vmatpush1.bf16.msra.mxu0 0
    %984 = vmatprep.subr.bf16.mxu0 0
    %985 = vmatpush1.bf16.msra.mxu0 0
    %986 = vmatprep.subr.bf16.mxu0 0
    %987 = vmatpush1.bf16.msra.mxu0 0
    %988 = vmatprep.subr.bf16.mxu0 0
    %989 = vmatpush1.bf16.msra.mxu0 0
    %990 = vmatprep.subr.bf16.mxu0 0
    %991 = vmatpush1.bf16.msra.mxu0 0
    %992 = vmatprep.mubr.bf16.mxu0 0
    %993 = vmatmul.mubr.bf16.gmra.mrb[0].mxu0 %v888
    %v994 = vpop.f32.mrb[0].mxu0
    %v995 = vadd.f32 %v910, %v994
    %v996 = vpop.f32.mrb[0].mxu0
    %v997 = vpop.f32.mrb[0].mxu0
    %v998 = vpop.f32.mrb[0].mxu0
    %999 = vdwg.mxu0
    %v1000 = vmax.f32 %v995, 0.0
    %v1001 = vpack.c.bf16 %v1000, %v1000
    %v1002 = vld [vmem:[%s5] sm:$0xf]
    %v1003 = vld [vmem:[%s5 + $0x4] sm:$0xf]
    %v1004 = vld [vmem:[%s5 + $0x8] sm:$0xf]
    %v1005 = vld [vmem:[%s5 + $0xc] sm:$0xf]
    %v1006 = vld [vmem:[%s5 + $0x10] sm:$0xf]
    %v1007 = vld [vmem:[%s5 + $0x14] sm:$0xf]
    %v1008 = vld [vmem:[%s5 + $0x18] sm:$0xf]
    %v1009 = vld [vmem:[%s5 + $0x1c] sm:$0xf]
    %v1010 = vld [vmem:[%s5 + $0x20] sm:$0xf]
    %v1011 = vld [vmem:[%s5 + $0x24] sm:$0xf]
    %v1012 = vld [vmem:[%s5 + $0x28] sm:$0xf]
    %v1013 = vld [vmem:[%s5 + $0x2c] sm:$0xf]
    %v1014 = vld [vmem:[%s5 + $0x30] sm:$0xf]
    %v1015 = vld [vmem:[%s5 + $0x34] sm:$0xf]
    %v1016 = vld [vmem:[%s5 + $0x38] sm:$0xf]
    %v1017 = vld [vmem:[%s5 + $0x3c] sm:$0xf]
    %v1018 = vld [vmem:[%s6] sm:$0x1]
    %v1020 = vlaneseq
    %v1021 = vshrl.u32 %v1020, 7
    %v1022 = vsub.s32 0, %v1021
    %v1023 = vrot.slane %v1018, %v1022
    %v1041 = vunpack.c.l.b16 %v1002
    %v1042 = vunpack.c.l.b16 %v1003
    %v1043 = vunpack.c.l.b16 %v1004
    %v1044 = vunpack.c.l.b16 %v1005
    %v1045 = vunpack.c.l.b16 %v1006
    %v1046 = vunpack.c.l.b16 %v1007
    %v1047 = vunpack.c.l.b16 %v1008
    %v1048 = vunpack.c.l.b16 %v1009
    %v1049 = vunpack.c.l.b16 %v1010
    %v1050 = vunpack.c.l.b16 %v1011
    %v1051 = vunpack.c.l.b16 %v1012
    %v1052 = vunpack.c.l.b16 %v1013
    %v1053 = vunpack.c.l.b16 %v1014
    %v1054 = vunpack.c.l.b16 %v1015
    %v1055 = vunpack.c.l.b16 %v1016
    %v1056 = vunpack.c.l.b16 %v1017
    %v1057 = vpack.c.b16 %v1042, %v1041
    %v1058 = vpack.c.b16 %v1044, %v1043
    %v1059 = vpack.c.b16 %v1046, %v1045
    %v1060 = vpack.c.b16 %v1048, %v1047
    %v1061 = vpack.c.b16 %v1050, %v1049
    %v1062 = vpack.c.b16 %v1052, %v1051
    %v1063 = vpack.c.b16 %v1054, %v1053
    %v1064 = vpack.c.b16 %v1056, %v1055
    %1073 = vmatprep.subr.bf16.mxu0 0
    %1074 = vmatpush1.bf16.msra.mxu0 %v1057
    %1075 = vmatprep.subr.bf16.mxu0 0
    %1076 = vmatpush1.bf16.msra.mxu0 %v1058
    %1077 = vmatprep.subr.bf16.mxu0 0
    %1078 = vmatpush1.bf16.msra.mxu0 %v1059
    %1079 = vmatprep.subr.bf16.mxu0 0
    %1080 = vmatpush1.bf16.msra.mxu0 %v1060
    %1081 = vmatprep.subr.bf16.mxu0 0
    %1082 = vmatpush1.bf16.msra.mxu0 %v1061
    %1083 = vmatprep.subr.bf16.mxu0 0
    %1084 = vmatpush1.bf16.msra.mxu0 %v1062
    %1085 = vmatprep.subr.bf16.mxu0 0
    %1086 = vmatpush1.bf16.msra.mxu0 %v1063
    %1087 = vmatprep.subr.bf16.mxu0 0
    %1088 = vmatpush1.bf16.msra.mxu0 %v1064
    %1089 = vmatprep.subr.bf16.mxu0 0
    %1090 = vmatpush1.bf16.msra.mxu0 0
    %1091 = vmatprep.subr.bf16.mxu0 0
    %1092 = vmatpush1.bf16.msra.mxu0 0
    %1093 = vmatprep.subr.bf16.mxu0 0
    %1094 = vmatpush1.bf16.msra.mxu0 0
    %1095 = vmatprep.subr.bf16.mxu0 0
    %1096 = vmatpush1.bf16.msra.mxu0 0
    %1097 = vmatprep.subr.bf16.mxu0 0
    %1098 = vmatpush1.bf16.msra.mxu0 0
    %1099 = vmatprep.subr.bf16.mxu0 0
    %1100 = vmatpush1.bf16.msra.mxu0 0
    %1101 = vmatprep.subr.bf16.mxu0 0
    %1102 = vmatpush1.bf16.msra.mxu0 0
    %1103 = vmatprep.subr.bf16.mxu0 0
    %1104 = vmatpush1.bf16.msra.mxu0 0
    %1105 = vmatprep.mubr.bf16.mxu0 0
    %1106 = vmatmul.mubr.bf16.gmra.mrb[0].mxu0 %v1001
    %v1107 = vpop.f32.mrb[0].mxu0
    %v1108 = vadd.f32 %v1023, %v1107
    %v1109 = vpop.f32.mrb[0].mxu0
    %v1110 = vpop.f32.mrb[0].mxu0
    %v1111 = vpop.f32.mrb[0].mxu0
    %1112 = vdwg.mxu0
    %1113 = vst [vmem:[#allocation2] sm:$0x3] %v1108
    // Predicated region
    $region30: #{net_forward.7} parent=1 // pred_check
      _
    $region31: #{net_forward.7} parent=1 // pred_check_branch
      %1115 = sbr.rel (0) target = $region33
    $region32: #{net_forward.7} parent=1 // pred_region
      %s1117 = ssub.s32 32, 32
      %1118 = vsyncadd [#allocation3], %s1117
      %s1120 = sshll.u32 [#allocation2], 4
      %s1121 = int_to_ptr.vmem [resolvable:$true] %s1120
      %1123 = dma.vmem_to_hbm [thread:$0]  %s1121, 32, %s7, [#allocation3]
    $region33: #{net_forward.7} parent=1 // pred_fallthru
      _
    // Predicated region
    $region34: #{net_forward.7} parent=1 // pred_check
      _
    $region35: #{net_forward.7} parent=1 // pred_check_branch
      %1125 = sbr.rel (0) target = $region37
    $region36: #{net_forward.7} parent=1 // pred_region
      %1126 = dma.done [#allocation3], 32
    $region37: #{net_forward.7} parent=1 // pred_fallthru
      _
    %1127 = vsyncpa [#allocation3], 1

</llo_original>
